<compile_context>
chip_gen: v5e
topology: v5e:2x2
jax: 0.10.0
libtpu: 0.0.40
codegen_flags: <defaults>
</compile_context>

<pallas_src>
import functools

import jax
import jax.numpy as jnp
from jax.experimental import pallas as pl
from jax.experimental.pallas import tpu as pltpu


def _round_up(x, m):
    return ((x + m - 1) // m) * m


def _tensorcores_per_chip():
    """2 for chips whose TensorCores are both visible to one program
    (v4/v5p megacore, v7x); 1 for v5e/v6e.  Heuristic only affects tiling."""
    try:
        kind = jax.devices()[0].device_kind.lower()
    except Exception:
        return 1
    return 2 if any(t in kind for t in ("v7", "7x", "v4", "v5p")) else 1


# ----------------------------------------------------------------------------
# Pallas kernel: shared MLP (1x1 conv, BN folded) + optional max-pool
# ----------------------------------------------------------------------------
def _mlp_maxpool_kernel(x_ref, w0_ref, b0_ref, *refs, nsample, sub_g, n_rest):
    """x_ref : (tile_g * nsample, C_in) bf16 -- group-major rows.
    w0_ref : (C_in, C_pad) bf16, b0_ref : (1, C_pad) f32.
    refs   : [wr_ref (L-1, C_pad, C_pad) bf16, br_ref (L-1, 1, C_pad) f32,] o_ref.
    o_ref  : (tile_g, C_pad) bf16 (lane-dense, C_pad multiple of 128).

    Rows are processed in sub_g*nsample (~256 row) chunks so the f32
    intermediate stays in-register; each chunk does the full MLP, max-pools
    over the nsample axis and issues a single aligned bf16 store.
    """
    o_ref = refs[-1]
    wr_ref = refs[0] if n_rest else None
    br_ref = refs[1] if n_rest else None
    sub_rows = sub_g * nsample
    n_chunks = x_ref.shape[0] // sub_rows
    cpad = o_ref.shape[-1]

    for c in range(n_chunks):                      # static unroll
        h = x_ref[pl.ds(c * sub_rows, sub_rows), :]
        h = jnp.maximum(
            jnp.dot(h, w0_ref[...], preferred_element_type=jnp.float32)
            + b0_ref[...], 0.0)
        for li in range(n_rest):
            h = jnp.maximum(
                jnp.dot(h.astype(jnp.bfloat16), wr_ref[li],
                        preferred_element_type=jnp.float32)
                + br_ref[li], 0.0)
        if nsample > 1:
            h = jnp.max(h.reshape(sub_g, nsample, cpad), axis=1)
        o_ref[pl.ds(c * sub_g, sub_g), :] = h.astype(o_ref.dtype)


def _pick_tiles(G, S, n_tc):
    """Return (tile_g, sub_g, Gp): groups per grid step, groups per in-kernel
    chunk, padded group count.  Targets ~1024 matmul rows per grid step
    (amortizes per-step overhead) processed as ~256-row chunks (keeps the
    v6e/v7x 256-wide MXU M full and bounds the live f32 activation)."""
    sub_g = _round_up(max(1, 256 // S), 16)          # sublane/bf16 friendly
    sub_g = min(sub_g, _round_up(G, 16))             # don't over-pad tiny G
    Gp_min = _round_up(G, sub_g)
    n_chunks = max(1, 1024 // (sub_g * S))
    tile_g = min(sub_g * n_chunks, Gp_min)
    if n_tc >= 2 and Gp_min >= 2 * sub_g:
        # Only split into >=2 grid steps when a 2nd TensorCore can run them.
        tile_g = min(tile_g, _round_up((Gp_min + 1) // 2, sub_g))
    tile_g = max(sub_g, (tile_g // sub_g) * sub_g)   # multiple of sub_g
    Gp = _round_up(G, tile_g)
    return tile_g, sub_g, Gp


def mlp_maxpool(grouped, pack, n_tc):
    """grouped: (G, S, C_in) bf16, G = B*npoint (group-major, no transpose).
    Returns (G, cout) bf16 (max-pooled over S)."""
    w0, b0, wr, br, cout, cpad = pack
    G, S, Cin = grouped.shape
    tile_g, sub_g, Gp = _pick_tiles(G, S, n_tc)
    if Gp != G:
        grouped = jnp.pad(grouped, ((0, Gp - G), (0, 0), (0, 0)))
    x = grouped.reshape(Gp * S, Cin)
    if x.dtype != jnp.bfloat16:
        x = x.astype(jnp.bfloat16)

    n_rest = 0 if wr is None else wr.shape[0]
    in_specs = [pl.BlockSpec((tile_g * S, Cin), lambda g: (g, 0)),
                pl.BlockSpec(w0.shape, lambda g: (0, 0)),
                pl.BlockSpec(b0.shape, lambda g: (0, 0))]
    args = [x, w0, b0]
    if n_rest:
        in_specs += [pl.BlockSpec(wr.shape, lambda g: (0, 0, 0)),
                     pl.BlockSpec(br.shape, lambda g: (0, 0, 0))]
        args += [wr, br]

    # Explicit VMEM budget: double-buffered activation + output tiles + weights
    # (v7x has only 64 MiB physical VMEM / 32 MiB scoped default).
    w_bytes = sum(int(a.size) * a.dtype.itemsize
                  for a in (w0, b0) + ((wr, br) if n_rest else ()))
    need = 2 * (tile_g * S * Cin * 2 + tile_g * cpad * 2 + w_bytes)
    vmem_limit = int(min(max(4 * need, 16 << 20), 64 << 20))

    out = pl.pallas_call(
        functools.partial(_mlp_maxpool_kernel, nsample=S, sub_g=sub_g,
                          n_rest=n_rest),
        out_shape=jax.ShapeDtypeStruct((Gp, cpad), jnp.bfloat16),
        grid=(Gp // tile_g,),
        in_specs=in_specs,
        out_specs=pl.BlockSpec((tile_g, cpad), lambda g: (g, 0)),
        compiler_params=pltpu.CompilerParams(
            dimension_semantics=("parallel",),
            vmem_limit_bytes=vmem_limit),
    )(*args)
    # Padded groups (Gp > G) hold relu(bias) garbage -- this slice must stay.
    return out[:G, :cout]


def fp_mlp(x_rc, pack, n_tc):
    """x_rc: (R, C_in) bf16 with R = B*N.  Pointwise shared MLP -> (R, cout)."""
    return mlp_maxpool(x_rc[:, None, :], pack, n_tc)


# ----------------------------------------------------------------------------
# Plain-JAX glue: FPS, ball query, grouping, 3-NN interpolation
# ----------------------------------------------------------------------------
def furthest_point_sample(xyz, npoint):
    """xyz: (N, 3) -> (npoint,) int32.  Matches the CUDA FPS (starts at idx 0)."""
    N = xyz.shape[0]

    def body(i, state):
        mindist, idxs, last = state
        d = jnp.sum((xyz - xyz[last]) ** 2, axis=-1)
        mindist = jnp.minimum(mindist, d)
        nxt = jnp.argmax(mindist).astype(jnp.int32)
        return mindist, idxs.at[i].set(nxt), nxt

    init = (jnp.full((N,), 1e10, jnp.float32),
            jnp.zeros((npoint,), jnp.int32),
            jnp.int32(0))
    _, idxs, _ = jax.lax.fori_loop(1, npoint, body, init)
    return idxs


def ball_query(xyz, new_xyz, radius, nsample):
    """xyz: (N,3), new_xyz: (M,3) -> (M, nsample) int32 (first-hit padding).
    Falls back to index 0 when no point is inside the radius (mmcv-style)."""
    N = xyz.shape[0]
    M = new_xyz.shape[0]
    d2 = jnp.sum((new_xyz[:, None, :] - xyz[None, :, :]) ** 2, axis=-1)  # (M, N)
    mask = d2 < (radius * radius)
    rank = jnp.cumsum(mask.astype(jnp.int32), axis=1) - 1
    first_idx = jnp.argmax(mask, axis=1).astype(jnp.int32)
    out = jnp.broadcast_to(first_idx[:, None], (M, nsample + 1))
    rows = jnp.broadcast_to(jnp.arange(M)[:, None], (M, N))
    cols = jnp.where(mask & (rank < nsample), rank, nsample)
    vals = jnp.broadcast_to(jnp.arange(N, dtype=jnp.int32)[None, :], (M, N))
    out = out.at[rows, cols].set(vals)
    return out[:, :nsample]


def _bn_fold(gamma, beta, eps=1e-5):
    # eval-mode BN with running_mean=0, running_var=1 folded into scale/bias.
    # TODO(synk): fold real running statistics when loading a trained checkpoint.
    return gamma / jnp.sqrt(1.0 + eps), beta


def _make_layer(key, cin, cout):
    kw, kg, kb = jax.random.split(key, 3)
    w = jax.random.normal(kw, (cin, cout), jnp.float32) * 0.1
    gamma = 1.0 + 0.01 * jax.random.normal(kg, (cout,), jnp.float32)
    beta = 0.01 * jax.random.normal(kb, (cout,), jnp.float32)
    scale, bias = _bn_fold(gamma, beta)
    w_folded = w * scale[None, :]          # fold BN scale into weight columns
    return w_folded, bias


def _pack_mlp(layers):
    """Pad every layer's out channels to a common multiple of 128 and stack
    layers 1..L-1 into one weight / one bias tensor so the kernel has at most
    5 input streams.  Zero padding is exact through the ReLU chain: padded
    input columns hit zero weight rows, padded output columns get zero bias."""
    cout = layers[-1][0].shape[1]
    cpad = _round_up(max(w.shape[1] for w, _ in layers), 128)

    def pad_w_cols(w):
        return jnp.pad(w, ((0, 0), (0, cpad - w.shape[1])))

    def pad_b(b):
        return jnp.pad(b, ((0, cpad - b.shape[0]),)).reshape(1, cpad)

    w0 = pad_w_cols(layers[0][0]).astype(jnp.bfloat16)
    b0 = pad_b(layers[0][1]).astype(jnp.float32)
    wr = br = None
    if len(layers) > 1:
        ws, bs = [], []
        for w, b in layers[1:]:
            wp = jnp.pad(w, ((0, cpad - w.shape[0]), (0, cpad - w.shape[1])))
            ws.append(wp.astype(jnp.bfloat16))
            bs.append(pad_b(b).astype(jnp.float32))
        wr = jnp.stack(ws, axis=0)
        br = jnp.stack(bs, axis=0)
    return (w0, b0, wr, br, cout, cpad)


# ----------------------------------------------------------------------------
# PointNet2SASSG
# ----------------------------------------------------------------------------
class PointNet2SASSGPallas:
    def __init__(self, in_channels, num_points, radii, num_samples,
                 sa_channels, fp_channels, key, use_xyz=True,
                 normalize_xyz=True):
        assert len(num_points) == len(radii) == len(num_samples) == len(sa_channels)
        assert len(sa_channels) >= len(fp_channels)
        self.num_points = num_points
        self.radii = radii
        self.num_samples = num_samples
        self.use_xyz = use_xyz
        self.normalize_xyz = normalize_xyz
        self.num_sa = len(sa_channels)
        self.num_fp = len(fp_channels)
        self._n_tc = _tensorcores_per_chip()

        sa_in = in_channels - 3
        skip = [sa_in]
        keys = jax.random.split(key, 64)
        ki = 0

        self.sa_params = []          # packed (w0, b0, wr, br, cout, cpad)
        for idx in range(self.num_sa):
            chans = [sa_in + (3 if use_xyz else 0)] + list(sa_channels[idx])
            layers = []
            for i in range(len(chans) - 1):
                layers.append(_make_layer(keys[ki], chans[i], chans[i + 1]))
                ki += 1
            self.sa_params.append(_pack_mlp(layers))
            sa_in = chans[-1]
            skip.append(sa_in)

        self.fp_params = []          # packed (w0, b0, wr, br, cout, cpad)
        src = skip.pop()
        tgt = skip.pop()
        for fi in range(self.num_fp):
            chans = [src + tgt] + list(fp_channels[fi])
            layers = []
            for i in range(len(chans) - 1):
                layers.append(_make_layer(keys[ki], chans[i], chans[i + 1]))
                ki += 1
            self.fp_params.append(_pack_mlp(layers))
            if fi != self.num_fp - 1:
                src = chans[-1]
                tgt = skip.pop()

    # --- SA module: FPS + ball query grouping + (Pallas) MLP + max pool ---
    def _sa_forward(self, xyz, features, i):
        npoint = self.num_points[i]
        radius = self.radii[i]
        nsample = self.num_samples[i]
        B, N, _ = xyz.shape

        fps_idx = jax.vmap(lambda p: furthest_point_sample(p, npoint))(xyz)
        new_xyz = jnp.take_along_axis(xyz, fps_idx[..., None], axis=1)   # (B, np, 3)
        group_idx = jax.vmap(
            lambda p, q: ball_query(p, q, radius, nsample))(xyz, new_xyz)  # (B, np, ns)

        # geometry in f32, grouped tensor materialized directly in bf16
        grouped_xyz = jax.vmap(lambda p, gi: p[gi])(xyz, group_idx)       # (B, np, ns, 3)
        grouped_xyz = grouped_xyz - new_xyz[:, :, None, :]
        if self.normalize_xyz:
            grouped_xyz = grouped_xyz / radius
        grouped_xyz = grouped_xyz.astype(jnp.bfloat16)

        if features is not None:
            feats_nl = jnp.transpose(features, (0, 2, 1))                 # (B, N, C) bf16
            grouped_feats = jax.vmap(lambda f, gi: f[gi])(feats_nl, group_idx)
            if self.use_xyz:
                grouped = jnp.concatenate([grouped_xyz, grouped_feats], axis=-1)
            else:
                grouped = grouped_feats
        else:
            grouped = grouped_xyz

        pack = self.sa_params[i]
        cout = pack[4]
        # kernel layout: (G, S, C_in) -- contiguous flatten, no transpose
        out = mlp_maxpool(grouped.reshape(B * npoint, nsample, grouped.shape[-1]),
                          pack, self._n_tc)                               # (B*np, Cout) bf16
        new_feats = jnp.transpose(out.reshape(B, npoint, cout), (0, 2, 1))  # (B, Cout, np)
        return new_xyz, new_feats, fps_idx

    # --- FP module: 3-NN interpolation + concat + (Pallas) pointwise MLP ---
    def _fp_forward(self, target_xyz, source_xyz, target_feats, source_feats, i):
        B, N, _ = target_xyz.shape
        d2 = jnp.sum(
            (target_xyz[:, :, None, :] - source_xyz[:, None, :, :]) ** 2, axis=-1)
        neg_d2, idx3 = jax.lax.top_k(-d2, 3)                              # (B, N, 3)
        dist = jnp.sqrt(jnp.maximum(-neg_d2, 0.0))
        w = 1.0 / (dist + 1e-8)
        w = (w / jnp.sum(w, axis=-1, keepdims=True)).astype(jnp.bfloat16)

        src_nl = jnp.transpose(source_feats, (0, 2, 1)).astype(jnp.bfloat16)  # (B, M, C2)
        gathered = jax.vmap(lambda f, gi: f[gi])(src_nl, idx3)            # (B, N, 3, C2)
        interp = jnp.sum(gathered * w[..., None], axis=2)                 # (B, N, C2) bf16

        if target_feats is not None:
            tgt_nl = jnp.transpose(target_feats, (0, 2, 1)).astype(jnp.bfloat16)
            x = jnp.concatenate([interp, tgt_nl], axis=-1)
        else:
            x = interp

        pack = self.fp_params[i]
        cout = pack[4]
        out = fp_mlp(x.reshape(B * N, x.shape[-1]), pack, self._n_tc)     # (B*N, Cout) bf16
        return jnp.transpose(out.reshape(B, N, cout), (0, 2, 1))          # (B, Cout, N)

    def __call__(self, points):
        xyz = points[..., 0:3]
        if points.shape[-1] > 3:
            # feature path stays bf16 end-to-end (matmul inputs); gathers then
            # produce the grouped tensor directly in bf16.
            features = jnp.transpose(points[..., 3:], (0, 2, 1)).astype(jnp.bfloat16)
        else:
            features = None
        B, N = xyz.shape[:2]
        indices = jnp.broadcast_to(jnp.arange(N, dtype=jnp.int32)[None, :], (B, N))

        sa_xyz, sa_features, sa_indices = [xyz], [features], [indices]
        for i in range(self.num_sa):
            cur_xyz, cur_feat, cur_idx = self._sa_forward(sa_xyz[i], sa_features[i], i)
            sa_xyz.append(cur_xyz)
            sa_features.append(cur_feat)
            sa_indices.append(jnp.take_along_axis(sa_indices[-1], cur_idx, axis=1))

        fp_xyz = [sa_xyz[-1]]
        fp_features = [sa_features[-1]]
        fp_indices = [sa_indices[-1]]
        for i in range(self.num_fp):
            fp_features.append(
                self._fp_forward(sa_xyz[self.num_sa - i - 1],
                                 sa_xyz[self.num_sa - i],
                                 sa_features[self.num_sa - i - 1],
                                 fp_features[-1], i))
            fp_xyz.append(sa_xyz[self.num_sa - i - 1])
            fp_indices.append(sa_indices[self.num_sa - i - 1])

        # module boundary: match the torch reference's f32 feature outputs
        fp_features = [None if f is None else f.astype(jnp.float32)
                       for f in fp_features]
        return dict(fp_xyz=fp_xyz, fp_features=fp_features, fp_indices=fp_indices)


if __name__ == "__main__":
    key = jax.random.PRNGKey(0)
    kpts, kparam = jax.random.split(key)

    B, N, C = 2, 64, 6   # points: (B, N, 3 xyz + 3 feature channels)
    points = jax.random.uniform(kpts, (B, N, C), jnp.float32)

    model = PointNet2SASSGPallas(
        in_channels=C,
        num_points=(32, 16, 8, 4),
        radii=(0.2, 0.4, 0.8, 1.2),
        num_samples=(16, 8, 8, 8),
        sa_channels=((16, 16, 32), (32, 32, 64), (32, 32, 64), (32, 32, 64)),
        fp_channels=((64, 64), (64, 64)),
        key=kparam,
        use_xyz=True,
        normalize_xyz=True,
    )

    out = jax.jit(model.__call__)(points)
    jax.block_until_ready(out)

    # Light shape sanity (num_fp + 1 entries each).
    assert len(out["fp_xyz"]) == 3 and len(out["fp_features"]) == 3
    assert out["fp_features"][-1].shape == (B, 64, 16)
    assert out["fp_xyz"][-1].shape == (B, 16, 3)
    assert out["fp_indices"][-1].shape == (B, 16)

    print("KERNEL_OK")
</pallas_src>

<mosaic_0001>
module attributes {stable_mosaic.version = 11 : i64} {
  func.func @_mlp_maxpool_kernel(%arg0: i32, %arg1: memref<1024x6xbf16, #tpu.memory_space<vmem>>, %arg2: memref<6x128xbf16, #tpu.memory_space<vmem>>, %arg3: memref<1x128xf32, #tpu.memory_space<vmem>>, %arg4: memref<2x128x128xbf16, #tpu.memory_space<vmem>>, %arg5: memref<2x1x128xf32, #tpu.memory_space<vmem>>, %arg6: memref<64x128xbf16, #tpu.memory_space<vmem>>) attributes {dimension_semantics = [#tpu.dimension_semantics<parallel>], iteration_bounds = array<i64: 1>, scalar_prefetch = 0 : i64, scratch_operands = 0 : i64, tpu.core_type = #tpu.core_type<tc>, window_params = [{transform_indices = @transform_0, window_bounds = array<i64: 1024, 6>}, {pipeline_mode = #tpu.pipeline_mode<synchronous>, transform_indices = @transform_1, window_bounds = array<i64: 6, 128>}, {pipeline_mode = #tpu.pipeline_mode<synchronous>, transform_indices = @transform_2, window_bounds = array<i64: 1, 128>}, {pipeline_mode = #tpu.pipeline_mode<synchronous>, transform_indices = @transform_3, window_bounds = array<i64: 2, 128, 128>}, {pipeline_mode = #tpu.pipeline_mode<synchronous>, transform_indices = @transform_4, window_bounds = array<i64: 2, 1, 128>}, {transform_indices = @transform_5, window_bounds = array<i64: 64, 128>}]} {
    %c0 = arith.constant 0 : index
    %c0_0 = arith.constant 0 : index
    %0 = vector.load %arg1[%c0, %c0_0] : memref<1024x6xbf16, #tpu.memory_space<vmem>>, vector<256x6xbf16>
    %c0_1 = arith.constant 0 : index
    %c0_2 = arith.constant 0 : index
    %1 = vector.load %arg2[%c0_1, %c0_2] : memref<6x128xbf16, #tpu.memory_space<vmem>>, vector<6x128xbf16>
    %cst = arith.constant dense<0.000000e+00> : vector<256x128xf32>
    %2 = tpu.matmul %0, %1, %cst {dimension_numbers = #tpu.dot_dimension_numbers<[1], [0], [0], [1], [0, 0, 1, 1], [], []>} : vector<256x6xbf16>, vector<6x128xbf16>, vector<256x128xf32> -> vector<256x128xf32>
    %c0_3 = arith.constant 0 : index
    %c0_4 = arith.constant 0 : index
    %3 = vector.load %arg3[%c0_3, %c0_4] : memref<1x128xf32, #tpu.memory_space<vmem>>, vector<1x128xf32>
    %4 = vector.broadcast %3 : vector<1x128xf32> to vector<256x128xf32>
    %5 = arith.addf %2, %4 : vector<256x128xf32>
    %cst_5 = arith.constant 0.000000e+00 : f32
    %6 = vector.broadcast %cst_5 : f32 to vector<256x128xf32>
    %7 = arith.maximumf %5, %6 : vector<256x128xf32>
    %8 = arith.truncf %7 : vector<256x128xf32> to vector<256x128xbf16>
    %c0_6 = arith.constant 0 : index
    %c0_7 = arith.constant 0 : index
    %c0_8 = arith.constant 0 : index
    %9 = vector.load %arg4[%c0_6, %c0_7, %c0_8] : memref<2x128x128xbf16, #tpu.memory_space<vmem>>, vector<1x128x128xbf16>
    %10 = vector.shape_cast %9 : vector<1x128x128xbf16> to vector<128x128xbf16>
    %cst_9 = arith.constant dense<0.000000e+00> : vector<256x128xf32>
    %11 = tpu.matmul %8, %10, %cst_9 {dimension_numbers = #tpu.dot_dimension_numbers<[1], [0], [0], [1], [0, 0, 1, 1], [], []>} : vector<256x128xbf16>, vector<128x128xbf16>, vector<256x128xf32> -> vector<256x128xf32>
    %c0_10 = arith.constant 0 : index
    %c0_11 = arith.constant 0 : index
    %c0_12 = arith.constant 0 : index
    %12 = vector.load %arg5[%c0_10, %c0_11, %c0_12] : memref<2x1x128xf32, #tpu.memory_space<vmem>>, vector<1x1x128xf32>
    %13 = vector.shape_cast %12 : vector<1x1x128xf32> to vector<1x128xf32>
    %14 = vector.broadcast %13 : vector<1x128xf32> to vector<256x128xf32>
    %15 = arith.addf %11, %14 : vector<256x128xf32>
    %cst_13 = arith.constant 0.000000e+00 : f32
    %16 = vector.broadcast %cst_13 : f32 to vector<256x128xf32>
    %17 = arith.maximumf %15, %16 : vector<256x128xf32>
    %18 = arith.truncf %17 : vector<256x128xf32> to vector<256x128xbf16>
    %c1 = arith.constant 1 : index
    %c0_14 = arith.constant 0 : index
    %c0_15 = arith.constant 0 : index
    %19 = vector.load %arg4[%c1, %c0_14, %c0_15] : memref<2x128x128xbf16, #tpu.memory_space<vmem>>, vector<1x128x128xbf16>
    %20 = vector.shape_cast %19 : vector<1x128x128xbf16> to vector<128x128xbf16>
    %cst_16 = arith.constant dense<0.000000e+00> : vector<256x128xf32>
    %21 = tpu.matmul %18, %20, %cst_16 {dimension_numbers = #tpu.dot_dimension_numbers<[1], [0], [0], [1], [0, 0, 1, 1], [], []>} : vector<256x128xbf16>, vector<128x128xbf16>, vector<256x128xf32> -> vector<256x128xf32>
    %c1_17 = arith.constant 1 : index
    %c0_18 = arith.constant 0 : index
    %c0_19 = arith.constant 0 : index
    %22 = vector.load %arg5[%c1_17, %c0_18, %c0_19] : memref<2x1x128xf32, #tpu.memory_space<vmem>>, vector<1x1x128xf32>
    %23 = vector.shape_cast %22 : vector<1x1x128xf32> to vector<1x128xf32>
    %24 = vector.broadcast %23 : vector<1x128xf32> to vector<256x128xf32>
    %25 = arith.addf %21, %24 : vector<256x128xf32>
    %cst_20 = arith.constant 0.000000e+00 : f32
    %26 = vector.broadcast %cst_20 : f32 to vector<256x128xf32>
    %27 = arith.maximumf %25, %26 : vector<256x128xf32>
    %28 = vector.shape_cast %27 : vector<256x128xf32> to vector<16x16x128xf32>
    %cst_21 = arith.constant dense<0xFF800000> : vector<16x128xf32>
    %29 = vector.multi_reduction <maximumf>, %28, %cst_21 [1] : vector<16x16x128xf32> to vector<16x128xf32>
    %30 = arith.truncf %29 : vector<16x128xf32> to vector<16x128xbf16>
    %c0_22 = arith.constant 0 : index
    %c0_23 = arith.constant 0 : index
    %31 = vector.load %arg6[%c0_22, %c0_23] : memref<64x128xbf16, #tpu.memory_space<vmem>>, vector<16x128xbf16>
    tpu.vector_store %arg6[%c0_22, %c0_23], %30 {strides = array<i32>} : memref<64x128xbf16, #tpu.memory_space<vmem>>, vector<16x128xbf16>,
    %c256 = arith.constant 256 : index
    %c0_24 = arith.constant 0 : index
    %32 = vector.load %arg1[%c256, %c0_24] : memref<1024x6xbf16, #tpu.memory_space<vmem>>, vector<256x6xbf16>
    %c0_25 = arith.constant 0 : index
    %c0_26 = arith.constant 0 : index
    %33 = vector.load %arg2[%c0_25, %c0_26] : memref<6x128xbf16, #tpu.memory_space<vmem>>, vector<6x128xbf16>
    %cst_27 = arith.constant dense<0.000000e+00> : vector<256x128xf32>
    %34 = tpu.matmul %32, %33, %cst_27 {dimension_numbers = #tpu.dot_dimension_numbers<[1], [0], [0], [1], [0, 0, 1, 1], [], []>} : vector<256x6xbf16>, vector<6x128xbf16>, vector<256x128xf32> -> vector<256x128xf32>
    %c0_28 = arith.constant 0 : index
    %c0_29 = arith.constant 0 : index
    %35 = vector.load %arg3[%c0_28, %c0_29] : memref<1x128xf32, #tpu.memory_space<vmem>>, vector<1x128xf32>
    %36 = vector.broadcast %35 : vector<1x128xf32> to vector<256x128xf32>
    %37 = arith.addf %34, %36 : vector<256x128xf32>
    %cst_30 = arith.constant 0.000000e+00 : f32
    %38 = vector.broadcast %cst_30 : f32 to vector<256x128xf32>
    %39 = arith.maximumf %37, %38 : vector<256x128xf32>
    %40 = arith.truncf %39 : vector<256x128xf32> to vector<256x128xbf16>
    %c0_31 = arith.constant 0 : index
    %c0_32 = arith.constant 0 : index
    %c0_33 = arith.constant 0 : index
    %41 = vector.load %arg4[%c0_31, %c0_32, %c0_33] : memref<2x128x128xbf16, #tpu.memory_space<vmem>>, vector<1x128x128xbf16>
    %42 = vector.shape_cast %41 : vector<1x128x128xbf16> to vector<128x128xbf16>
    %cst_34 = arith.constant dense<0.000000e+00> : vector<256x128xf32>
    %43 = tpu.matmul %40, %42, %cst_34 {dimension_numbers = #tpu.dot_dimension_numbers<[1], [0], [0], [1], [0, 0, 1, 1], [], []>} : vector<256x128xbf16>, vector<128x128xbf16>, vector<256x128xf32> -> vector<256x128xf32>
    %c0_35 = arith.constant 0 : index
    %c0_36 = arith.constant 0 : index
    %c0_37 = arith.constant 0 : index
    %44 = vector.load %arg5[%c0_35, %c0_36, %c0_37] : memref<2x1x128xf32, #tpu.memory_space<vmem>>, vector<1x1x128xf32>
    %45 = vector.shape_cast %44 : vector<1x1x128xf32> to vector<1x128xf32>
    %46 = vector.broadcast %45 : vector<1x128xf32> to vector<256x128xf32>
    %47 = arith.addf %43, %46 : vector<256x128xf32>
    %cst_38 = arith.constant 0.000000e+00 : f32
    %48 = vector.broadcast %cst_38 : f32 to vector<256x128xf32>
    %49 = arith.maximumf %47, %48 : vector<256x128xf32>
    %50 = arith.truncf %49 : vector<256x128xf32> to vector<256x128xbf16>
    %c1_39 = arith.constant 1 : index
    %c0_40 = arith.constant 0 : index
    %c0_41 = arith.constant 0 : index
    %51 = vector.load %arg4[%c1_39, %c0_40, %c0_41] : memref<2x128x128xbf16, #tpu.memory_space<vmem>>, vector<1x128x128xbf16>
    %52 = vector.shape_cast %51 : vector<1x128x128xbf16> to vector<128x128xbf16>
    %cst_42 = arith.constant dense<0.000000e+00> : vector<256x128xf32>
    %53 = tpu.matmul %50, %52, %cst_42 {dimension_numbers = #tpu.dot_dimension_numbers<[1], [0], [0], [1], [0, 0, 1, 1], [], []>} : vector<256x128xbf16>, vector<128x128xbf16>, vector<256x128xf32> -> vector<256x128xf32>
    %c1_43 = arith.constant 1 : index
    %c0_44 = arith.constant 0 : index
    %c0_45 = arith.constant 0 : index
    %54 = vector.load %arg5[%c1_43, %c0_44, %c0_45] : memref<2x1x128xf32, #tpu.memory_space<vmem>>, vector<1x1x128xf32>
    %55 = vector.shape_cast %54 : vector<1x1x128xf32> to vector<1x128xf32>
    %56 = vector.broadcast %55 : vector<1x128xf32> to vector<256x128xf32>
    %57 = arith.addf %53, %56 : vector<256x128xf32>
    %cst_46 = arith.constant 0.000000e+00 : f32
    %58 = vector.broadcast %cst_46 : f32 to vector<256x128xf32>
    %59 = arith.maximumf %57, %58 : vector<256x128xf32>
    %60 = vector.shape_cast %59 : vector<256x128xf32> to vector<16x16x128xf32>
    %cst_47 = arith.constant dense<0xFF800000> : vector<16x128xf32>
    %61 = vector.multi_reduction <maximumf>, %60, %cst_47 [1] : vector<16x16x128xf32> to vector<16x128xf32>
    %62 = arith.truncf %61 : vector<16x128xf32> to vector<16x128xbf16>
    %c16 = arith.constant 16 : index
    %c0_48 = arith.constant 0 : index
    %63 = vector.load %arg6[%c16, %c0_48] : memref<64x128xbf16, #tpu.memory_space<vmem>>, vector<16x128xbf16>
    tpu.vector_store %arg6[%c16, %c0_48], %62 {strides = array<i32>} : memref<64x128xbf16, #tpu.memory_space<vmem>>, vector<16x128xbf16>,
    %c512 = arith.constant 512 : index
    %c0_49 = arith.constant 0 : index
    %64 = vector.load %arg1[%c512, %c0_49] : memref<1024x6xbf16, #tpu.memory_space<vmem>>, vector<256x6xbf16>
    %c0_50 = arith.constant 0 : index
    %c0_51 = arith.constant 0 : index
    %65 = vector.load %arg2[%c0_50, %c0_51] : memref<6x128xbf16, #tpu.memory_space<vmem>>, vector<6x128xbf16>
    %cst_52 = arith.constant dense<0.000000e+00> : vector<256x128xf32>
    %66 = tpu.matmul %64, %65, %cst_52 {dimension_numbers = #tpu.dot_dimension_numbers<[1], [0], [0], [1], [0, 0, 1, 1], [], []>} : vector<256x6xbf16>, vector<6x128xbf16>, vector<256x128xf32> -> vector<256x128xf32>
    %c0_53 = arith.constant 0 : index
    %c0_54 = arith.constant 0 : index
    %67 = vector.load %arg3[%c0_53, %c0_54] : memref<1x128xf32, #tpu.memory_space<vmem>>, vector<1x128xf32>
    %68 = vector.broadcast %67 : vector<1x128xf32> to vector<256x128xf32>
    %69 = arith.addf %66, %68 : vector<256x128xf32>
    %cst_55 = arith.constant 0.000000e+00 : f32
    %70 = vector.broadcast %cst_55 : f32 to vector<256x128xf32>
    %71 = arith.maximumf %69, %70 : vector<256x128xf32>
    %72 = arith.truncf %71 : vector<256x128xf32> to vector<256x128xbf16>
    %c0_56 = arith.constant 0 : index
    %c0_57 = arith.constant 0 : index
    %c0_58 = arith.constant 0 : index
    %73 = vector.load %arg4[%c0_56, %c0_57, %c0_58] : memref<2x128x128xbf16, #tpu.memory_space<vmem>>, vector<1x128x128xbf16>
    %74 = vector.shape_cast %73 : vector<1x128x128xbf16> to vector<128x128xbf16>
    %cst_59 = arith.constant dense<0.000000e+00> : vector<256x128xf32>
    %75 = tpu.matmul %72, %74, %cst_59 {dimension_numbers = #tpu.dot_dimension_numbers<[1], [0], [0], [1], [0, 0, 1, 1], [], []>} : vector<256x128xbf16>, vector<128x128xbf16>, vector<256x128xf32> -> vector<256x128xf32>
    %c0_60 = arith.constant 0 : index
    %c0_61 = arith.constant 0 : index
    %c0_62 = arith.constant 0 : index
    %76 = vector.load %arg5[%c0_60, %c0_61, %c0_62] : memref<2x1x128xf32, #tpu.memory_space<vmem>>, vector<1x1x128xf32>
    %77 = vector.shape_cast %76 : vector<1x1x128xf32> to vector<1x128xf32>
    %78 = vector.broadcast %77 : vector<1x128xf32> to vector<256x128xf32>
    %79 = arith.addf %75, %78 : vector<256x128xf32>
    %cst_63 = arith.constant 0.000000e+00 : f32
    %80 = vector.broadcast %cst_63 : f32 to vector<256x128xf32>
    %81 = arith.maximumf %79, %80 : vector<256x128xf32>
    %82 = arith.truncf %81 : vector<256x128xf32> to vector<256x128xbf16>
    %c1_64 = arith.constant 1 : index
    %c0_65 = arith.constant 0 : index
    %c0_66 = arith.constant 0 : index
    %83 = vector.load %arg4[%c1_64, %c0_65, %c0_66] : memref<2x128x128xbf16, #tpu.memory_space<vmem>>, vector<1x128x128xbf16>
    %84 = vector.shape_cast %83 : vector<1x128x128xbf16> to vector<128x128xbf16>
    %cst_67 = arith.constant dense<0.000000e+00> : vector<256x128xf32>
    %85 = tpu.matmul %82, %84, %cst_67 {dimension_numbers = #tpu.dot_dimension_numbers<[1], [0], [0], [1], [0, 0, 1, 1], [], []>} : vector<256x128xbf16>, vector<128x128xbf16>, vector<256x128xf32> -> vector<256x128xf32>
    %c1_68 = arith.constant 1 : index
    %c0_69 = arith.constant 0 : index
    %c0_70 = arith.constant 0 : index
    %86 = vector.load %arg5[%c1_68, %c0_69, %c0_70] : memref<2x1x128xf32, #tpu.memory_space<vmem>>, vector<1x1x128xf32>
    %87 = vector.shape_cast %86 : vector<1x1x128xf32> to vector<1x128xf32>
    %88 = vector.broadcast %87 : vector<1x128xf32> to vector<256x128xf32>
    %89 = arith.addf %85, %88 : vector<256x128xf32>
    %cst_71 = arith.constant 0.000000e+00 : f32
    %90 = vector.broadcast %cst_71 : f32 to vector<256x128xf32>
    %91 = arith.maximumf %89, %90 : vector<256x128xf32>
    %92 = vector.shape_cast %91 : vector<256x128xf32> to vector<16x16x128xf32>
    %cst_72 = arith.constant dense<0xFF800000> : vector<16x128xf32>
    %93 = vector.multi_reduction <maximumf>, %92, %cst_72 [1] : vector<16x16x128xf32> to vector<16x128xf32>
    %94 = arith.truncf %93 : vector<16x128xf32> to vector<16x128xbf16>
    %c32 = arith.constant 32 : index
    %c0_73 = arith.constant 0 : index
    %95 = vector.load %arg6[%c32, %c0_73] : memref<64x128xbf16, #tpu.memory_space<vmem>>, vector<16x128xbf16>
    tpu.vector_store %arg6[%c32, %c0_73], %94 {strides = array<i32>} : memref<64x128xbf16, #tpu.memory_space<vmem>>, vector<16x128xbf16>,
    %c768 = arith.constant 768 : index
    %c0_74 = arith.constant 0 : index
    %96 = vector.load %arg1[%c768, %c0_74] : memref<1024x6xbf16, #tpu.memory_space<vmem>>, vector<256x6xbf16>
    %c0_75 = arith.constant 0 : index
    %c0_76 = arith.constant 0 : index
    %97 = vector.load %arg2[%c0_75, %c0_76] : memref<6x128xbf16, #tpu.memory_space<vmem>>, vector<6x128xbf16>
    %cst_77 = arith.constant dense<0.000000e+00> : vector<256x128xf32>
    %98 = tpu.matmul %96, %97, %cst_77 {dimension_numbers = #tpu.dot_dimension_numbers<[1], [0], [0], [1], [0, 0, 1, 1], [], []>} : vector<256x6xbf16>, vector<6x128xbf16>, vector<256x128xf32> -> vector<256x128xf32>
    %c0_78 = arith.constant 0 : index
    %c0_79 = arith.constant 0 : index
    %99 = vector.load %arg3[%c0_78, %c0_79] : memref<1x128xf32, #tpu.memory_space<vmem>>, vector<1x128xf32>
    %100 = vector.broadcast %99 : vector<1x128xf32> to vector<256x128xf32>
    %101 = arith.addf %98, %100 : vector<256x128xf32>
    %cst_80 = arith.constant 0.000000e+00 : f32
    %102 = vector.broadcast %cst_80 : f32 to vector<256x128xf32>
    %103 = arith.maximumf %101, %102 : vector<256x128xf32>
    %104 = arith.truncf %103 : vector<256x128xf32> to vector<256x128xbf16>
    %c0_81 = arith.constant 0 : index
    %c0_82 = arith.constant 0 : index
    %c0_83 = arith.constant 0 : index
    %105 = vector.load %arg4[%c0_81, %c0_82, %c0_83] : memref<2x128x128xbf16, #tpu.memory_space<vmem>>, vector<1x128x128xbf16>
    %106 = vector.shape_cast %105 : vector<1x128x128xbf16> to vector<128x128xbf16>
    %cst_84 = arith.constant dense<0.000000e+00> : vector<256x128xf32>
    %107 = tpu.matmul %104, %106, %cst_84 {dimension_numbers = #tpu.dot_dimension_numbers<[1], [0], [0], [1], [0, 0, 1, 1], [], []>} : vector<256x128xbf16>, vector<128x128xbf16>, vector<256x128xf32> -> vector<256x128xf32>
    %c0_85 = arith.constant 0 : index
    %c0_86 = arith.constant 0 : index
    %c0_87 = arith.constant 0 : index
    %108 = vector.load %arg5[%c0_85, %c0_86, %c0_87] : memref<2x1x128xf32, #tpu.memory_space<vmem>>, vector<1x1x128xf32>
    %109 = vector.shape_cast %108 : vector<1x1x128xf32> to vector<1x128xf32>
    %110 = vector.broadcast %109 : vector<1x128xf32> to vector<256x128xf32>
    %111 = arith.addf %107, %110 : vector<256x128xf32>
    %cst_88 = arith.constant 0.000000e+00 : f32
    %112 = vector.broadcast %cst_88 : f32 to vector<256x128xf32>
    %113 = arith.maximumf %111, %112 : vector<256x128xf32>
    %114 = arith.truncf %113 : vector<256x128xf32> to vector<256x128xbf16>
    %c1_89 = arith.constant 1 : index
    %c0_90 = arith.constant 0 : index
    %c0_91 = arith.constant 0 : index
    %115 = vector.load %arg4[%c1_89, %c0_90, %c0_91] : memref<2x128x128xbf16, #tpu.memory_space<vmem>>, vector<1x128x128xbf16>
    %116 = vector.shape_cast %115 : vector<1x128x128xbf16> to vector<128x128xbf16>
    %cst_92 = arith.constant dense<0.000000e+00> : vector<256x128xf32>
    %117 = tpu.matmul %114, %116, %cst_92 {dimension_numbers = #tpu.dot_dimension_numbers<[1], [0], [0], [1], [0, 0, 1, 1], [], []>} : vector<256x128xbf16>, vector<128x128xbf16>, vector<256x128xf32> -> vector<256x128xf32>
    %c1_93 = arith.constant 1 : index
    %c0_94 = arith.constant 0 : index
    %c0_95 = arith.constant 0 : index
    %118 = vector.load %arg5[%c1_93, %c0_94, %c0_95] : memref<2x1x128xf32, #tpu.memory_space<vmem>>, vector<1x1x128xf32>
    %119 = vector.shape_cast %118 : vector<1x1x128xf32> to vector<1x128xf32>
    %120 = vector.broadcast %119 : vector<1x128xf32> to vector<256x128xf32>
    %121 = arith.addf %117, %120 : vector<256x128xf32>
    %cst_96 = arith.constant 0.000000e+00 : f32
    %122 = vector.broadcast %cst_96 : f32 to vector<256x128xf32>
    %123 = arith.maximumf %121, %122 : vector<256x128xf32>
    %124 = vector.shape_cast %123 : vector<256x128xf32> to vector<16x16x128xf32>
    %cst_97 = arith.constant dense<0xFF800000> : vector<16x128xf32>
    %125 = vector.multi_reduction <maximumf>, %124, %cst_97 [1] : vector<16x16x128xf32> to vector<16x128xf32>
    %126 = arith.truncf %125 : vector<16x128xf32> to vector<16x128xbf16>
    %c48 = arith.constant 48 : index
    %c0_98 = arith.constant 0 : index
    %127 = vector.load %arg6[%c48, %c0_98] : memref<64x128xbf16, #tpu.memory_space<vmem>>, vector<16x128xbf16>
    tpu.vector_store %arg6[%c48, %c0_98], %126 {strides = array<i32>} : memref<64x128xbf16, #tpu.memory_space<vmem>>, vector<16x128xbf16>,
    return
  }
  func.func @transform_0(%arg0: i32) -> (i32, i32) {
    %c0_i32 = arith.constant 0 : i32
    %c0_i32_0 = arith.constant 0 : i32
    return %arg0, %c0_i32 : i32, i32
  }
  func.func @transform_1(%arg0: i32) -> (i32, i32) {
    %c0_i32 = arith.constant 0 : i32
    %c0_i32_0 = arith.constant 0 : i32
    %c0_i32_1 = arith.constant 0 : i32
    return %c0_i32, %c0_i32_0 : i32, i32
  }
  func.func @transform_2(%arg0: i32) -> (i32, i32) {
    %c0_i32 = arith.constant 0 : i32
    %c0_i32_0 = arith.constant 0 : i32
    %c0_i32_1 = arith.constant 0 : i32
    return %c0_i32, %c0_i32_0 : i32, i32
  }
  func.func @transform_3(%arg0: i32) -> (i32, i32, i32) {
    %c0_i32 = arith.constant 0 : i32
    %c0_i32_0 = arith.constant 0 : i32
    %c0_i32_1 = arith.constant 0 : i32
    %c0_i32_2 = arith.constant 0 : i32
    return %c0_i32, %c0_i32_0, %c0_i32_1 : i32, i32, i32
  }
  func.func @transform_4(%arg0: i32) -> (i32, i32, i32) {
    %c0_i32 = arith.constant 0 : i32
    %c0_i32_0 = arith.constant 0 : i32
    %c0_i32_1 = arith.constant 0 : i32
    %c0_i32_2 = arith.constant 0 : i32
    return %c0_i32, %c0_i32_0, %c0_i32_1 : i32, i32, i32
  }
  func.func @transform_5(%arg0: i32) -> (i32, i32) {
    %c0_i32 = arith.constant 0 : i32
    %c0_i32_0 = arith.constant 0 : i32
    return %arg0, %c0_i32 : i32, i32
  }
}

module attributes {stable_mosaic.version = 11 : i64} {
  func.func @_mlp_maxpool_kernel(%arg0: i32, %arg1: memref<256x35xbf16, #tpu.memory_space<vmem>>, %arg2: memref<35x128xbf16, #tpu.memory_space<vmem>>, %arg3: memref<1x128xf32, #tpu.memory_space<vmem>>, %arg4: memref<2x128x128xbf16, #tpu.memory_space<vmem>>, %arg5: memref<2x1x128xf32, #tpu.memory_space<vmem>>, %arg6: memref<32x128xbf16, #tpu.memory_space<vmem>>) attributes {dimension_semantics = [#tpu.dimension_semantics<parallel>], iteration_bounds = array<i64: 1>, scalar_prefetch = 0 : i64, scratch_operands = 0 : i64, tpu.core_type = #tpu.core_type<tc>, window_params = [{transform_indices = @transform_0, window_bounds = array<i64: 256, 35>}, {pipeline_mode = #tpu.pipeline_mode<synchronous>, transform_indices = @transform_1, window_bounds = array<i64: 35, 128>}, {pipeline_mode = #tpu.pipeline_mode<synchronous>, transform_indices = @transform_2, window_bounds = array<i64: 1, 128>}, {pipeline_mode = #tpu.pipeline_mode<synchronous>, transform_indices = @transform_3, window_bounds = array<i64: 2, 128, 128>}, {pipeline_mode = #tpu.pipeline_mode<synchronous>, transform_indices = @transform_4, window_bounds = array<i64: 2, 1, 128>}, {transform_indices = @transform_5, window_bounds = array<i64: 32, 128>}]} {
    %c0 = arith.constant 0 : index
    %c0_0 = arith.constant 0 : index
    %0 = vector.load %arg1[%c0, %c0_0] : memref<256x35xbf16, #tpu.memory_space<vmem>>, vector<256x35xbf16>
    %c0_1 = arith.constant 0 : index
    %c0_2 = arith.constant 0 : index
    %1 = vector.load %arg2[%c0_1, %c0_2] : memref<35x128xbf16, #tpu.memory_space<vmem>>, vector<35x128xbf16>
    %cst = arith.constant dense<0.000000e+00> : vector<256x128xf32>
    %2 = tpu.matmul %0, %1, %cst {dimension_numbers = #tpu.dot_dimension_numbers<[1], [0], [0], [1], [0, 0, 1, 1], [], []>} : vector<256x35xbf16>, vector<35x128xbf16>, vector<256x128xf32> -> vector<256x128xf32>
    %c0_3 = arith.constant 0 : index
    %c0_4 = arith.constant 0 : index
    %3 = vector.load %arg3[%c0_3, %c0_4] : memref<1x128xf32, #tpu.memory_space<vmem>>, vector<1x128xf32>
    %4 = vector.broadcast %3 : vector<1x128xf32> to vector<256x128xf32>
    %5 = arith.addf %2, %4 : vector<256x128xf32>
    %cst_5 = arith.constant 0.000000e+00 : f32
    %6 = vector.broadcast %cst_5 : f32 to vector<256x128xf32>
    %7 = arith.maximumf %5, %6 : vector<256x128xf32>
    %8 = arith.truncf %7 : vector<256x128xf32> to vector<256x128xbf16>
    %c0_6 = arith.constant 0 : index
    %c0_7 = arith.constant 0 : index
    %c0_8 = arith.constant 0 : index
    %9 = vector.load %arg4[%c0_6, %c0_7, %c0_8] : memref<2x128x128xbf16, #tpu.memory_space<vmem>>, vector<1x128x128xbf16>
    %10 = vector.shape_cast %9 : vector<1x128x128xbf16> to vector<128x128xbf16>
    %cst_9 = arith.constant dense<0.000000e+00> : vector<256x128xf32>
    %11 = tpu.matmul %8, %10, %cst_9 {dimension_numbers = #tpu.dot_dimension_numbers<[1], [0], [0], [1], [0, 0, 1, 1], [], []>} : vector<256x128xbf16>, vector<128x128xbf16>, vector<256x128xf32> -> vector<256x128xf32>
    %c0_10 = arith.constant 0 : index
    %c0_11 = arith.constant 0 : index
    %c0_12 = arith.constant 0 : index
    %12 = vector.load %arg5[%c0_10, %c0_11, %c0_12] : memref<2x1x128xf32, #tpu.memory_space<vmem>>, vector<1x1x128xf32>
    %13 = vector.shape_cast %12 : vector<1x1x128xf32> to vector<1x128xf32>
    %14 = vector.broadcast %13 : vector<1x128xf32> to vector<256x128xf32>
    %15 = arith.addf %11, %14 : vector<256x128xf32>
    %cst_13 = arith.constant 0.000000e+00 : f32
    %16 = vector.broadcast %cst_13 : f32 to vector<256x128xf32>
    %17 = arith.maximumf %15, %16 : vector<256x128xf32>
    %18 = arith.truncf %17 : vector<256x128xf32> to vector<256x128xbf16>
    %c1 = arith.constant 1 : index
    %c0_14 = arith.constant 0 : index
    %c0_15 = arith.constant 0 : index
    %19 = vector.load %arg4[%c1, %c0_14, %c0_15] : memref<2x128x128xbf16, #tpu.memory_space<vmem>>, vector<1x128x128xbf16>
    %20 = vector.shape_cast %19 : vector<1x128x128xbf16> to vector<128x128xbf16>
    %cst_16 = arith.constant dense<0.000000e+00> : vector<256x128xf32>
    %21 = tpu.matmul %18, %20, %cst_16 {dimension_numbers = #tpu.dot_dimension_numbers<[1], [0], [0], [1], [0, 0, 1, 1], [], []>} : vector<256x128xbf16>, vector<128x128xbf16>, vector<256x128xf32> -> vector<256x128xf32>
    %c1_17 = arith.constant 1 : index
    %c0_18 = arith.constant 0 : index
    %c0_19 = arith.constant 0 : index
    %22 = vector.load %arg5[%c1_17, %c0_18, %c0_19] : memref<2x1x128xf32, #tpu.memory_space<vmem>>, vector<1x1x128xf32>
    %23 = vector.shape_cast %22 : vector<1x1x128xf32> to vector<1x128xf32>
    %24 = vector.broadcast %23 : vector<1x128xf32> to vector<256x128xf32>
    %25 = arith.addf %21, %24 : vector<256x128xf32>
    %cst_20 = arith.constant 0.000000e+00 : f32
    %26 = vector.broadcast %cst_20 : f32 to vector<256x128xf32>
    %27 = arith.maximumf %25, %26 : vector<256x128xf32>
    %28 = vector.shape_cast %27 : vector<256x128xf32> to vector<32x8x128xf32>
    %cst_21 = arith.constant dense<0xFF800000> : vector<32x128xf32>
    %29 = vector.multi_reduction <maximumf>, %28, %cst_21 [1] : vector<32x8x128xf32> to vector<32x128xf32>
    %30 = arith.truncf %29 : vector<32x128xf32> to vector<32x128xbf16>
    %c0_22 = arith.constant 0 : index
    %c0_23 = arith.constant 0 : index
    %31 = vector.load %arg6[%c0_22, %c0_23] : memref<32x128xbf16, #tpu.memory_space<vmem>>, vector<32x128xbf16>
    tpu.vector_store %arg6[%c0_22, %c0_23], %30 {strides = array<i32>} : memref<32x128xbf16, #tpu.memory_space<vmem>>, vector<32x128xbf16>,
    return
  }
  func.func @transform_0(%arg0: i32) -> (i32, i32) {
    %c0_i32 = arith.constant 0 : i32
    %c0_i32_0 = arith.constant 0 : i32
    return %arg0, %c0_i32 : i32, i32
  }
  func.func @transform_1(%arg0: i32) -> (i32, i32) {
    %c0_i32 = arith.constant 0 : i32
    %c0_i32_0 = arith.constant 0 : i32
    %c0_i32_1 = arith.constant 0 : i32
    return %c0_i32, %c0_i32_0 : i32, i32
  }
  func.func @transform_2(%arg0: i32) -> (i32, i32) {
    %c0_i32 = arith.constant 0 : i32
    %c0_i32_0 = arith.constant 0 : i32
    %c0_i32_1 = arith.constant 0 : i32
    return %c0_i32, %c0_i32_0 : i32, i32
  }
  func.func @transform_3(%arg0: i32) -> (i32, i32, i32) {
    %c0_i32 = arith.constant 0 : i32
    %c0_i32_0 = arith.constant 0 : i32
    %c0_i32_1 = arith.constant 0 : i32
    %c0_i32_2 = arith.constant 0 : i32
    return %c0_i32, %c0_i32_0, %c0_i32_1 : i32, i32, i32
  }
  func.func @transform_4(%arg0: i32) -> (i32, i32, i32) {
    %c0_i32 = arith.constant 0 : i32
    %c0_i32_0 = arith.constant 0 : i32
    %c0_i32_1 = arith.constant 0 : i32
    %c0_i32_2 = arith.constant 0 : i32
    return %c0_i32, %c0_i32_0, %c0_i32_1 : i32, i32, i32
  }
  func.func @transform_5(%arg0: i32) -> (i32, i32) {
    %c0_i32 = arith.constant 0 : i32
    %c0_i32_0 = arith.constant 0 : i32
    return %arg0, %c0_i32 : i32, i32
  }
}

module attributes {stable_mosaic.version = 11 : i64} {
  func.func @_mlp_maxpool_kernel(%arg0: i32, %arg1: memref<128x67xbf16, #tpu.memory_space<vmem>>, %arg2: memref<67x128xbf16, #tpu.memory_space<vmem>>, %arg3: memref<1x128xf32, #tpu.memory_space<vmem>>, %arg4: memref<2x128x128xbf16, #tpu.memory_space<vmem>>, %arg5: memref<2x1x128xf32, #tpu.memory_space<vmem>>, %arg6: memref<16x128xbf16, #tpu.memory_space<vmem>>) attributes {dimension_semantics = [#tpu.dimension_semantics<parallel>], iteration_bounds = array<i64: 1>, scalar_prefetch = 0 : i64, scratch_operands = 0 : i64, tpu.core_type = #tpu.core_type<tc>, window_params = [{transform_indices = @transform_0, window_bounds = array<i64: 128, 67>}, {pipeline_mode = #tpu.pipeline_mode<synchronous>, transform_indices = @transform_1, window_bounds = array<i64: 67, 128>}, {pipeline_mode = #tpu.pipeline_mode<synchronous>, transform_indices = @transform_2, window_bounds = array<i64: 1, 128>}, {pipeline_mode = #tpu.pipeline_mode<synchronous>, transform_indices = @transform_3, window_bounds = array<i64: 2, 128, 128>}, {pipeline_mode = #tpu.pipeline_mode<synchronous>, transform_indices = @transform_4, window_bounds = array<i64: 2, 1, 128>}, {transform_indices = @transform_5, window_bounds = array<i64: 16, 128>}]} {
    %c0 = arith.constant 0 : index
    %c0_0 = arith.constant 0 : index
    %0 = vector.load %arg1[%c0, %c0_0] : memref<128x67xbf16, #tpu.memory_space<vmem>>, vector<128x67xbf16>
    %c0_1 = arith.constant 0 : index
    %c0_2 = arith.constant 0 : index
    %1 = vector.load %arg2[%c0_1, %c0_2] : memref<67x128xbf16, #tpu.memory_space<vmem>>, vector<67x128xbf16>
    %cst = arith.constant dense<0.000000e+00> : vector<128x128xf32>
    %2 = tpu.matmul %0, %1, %cst {dimension_numbers = #tpu.dot_dimension_numbers<[1], [0], [0], [1], [0, 0, 1, 1], [], []>} : vector<128x67xbf16>, vector<67x128xbf16>, vector<128x128xf32> -> vector<128x128xf32>
    %c0_3 = arith.constant 0 : index
    %c0_4 = arith.constant 0 : index
    %3 = vector.load %arg3[%c0_3, %c0_4] : memref<1x128xf32, #tpu.memory_space<vmem>>, vector<1x128xf32>
    %4 = vector.broadcast %3 : vector<1x128xf32> to vector<128x128xf32>
    %5 = arith.addf %2, %4 : vector<128x128xf32>
    %cst_5 = arith.constant 0.000000e+00 : f32
    %6 = vector.broadcast %cst_5 : f32 to vector<128x128xf32>
    %7 = arith.maximumf %5, %6 : vector<128x128xf32>
    %8 = arith.truncf %7 : vector<128x128xf32> to vector<128x128xbf16>
    %c0_6 = arith.constant 0 : index
    %c0_7 = arith.constant 0 : index
    %c0_8 = arith.constant 0 : index
    %9 = vector.load %arg4[%c0_6, %c0_7, %c0_8] : memref<2x128x128xbf16, #tpu.memory_space<vmem>>, vector<1x128x128xbf16>
    %10 = vector.shape_cast %9 : vector<1x128x128xbf16> to vector<128x128xbf16>
    %cst_9 = arith.constant dense<0.000000e+00> : vector<128x128xf32>
    %11 = tpu.matmul %8, %10, %cst_9 {dimension_numbers = #tpu.dot_dimension_numbers<[1], [0], [0], [1], [0, 0, 1, 1], [], []>} : vector<128x128xbf16>, vector<128x128xbf16>, vector<128x128xf32> -> vector<128x128xf32>
    %c0_10 = arith.constant 0 : index
    %c0_11 = arith.constant 0 : index
    %c0_12 = arith.constant 0 : index
    %12 = vector.load %arg5[%c0_10, %c0_11, %c0_12] : memref<2x1x128xf32, #tpu.memory_space<vmem>>, vector<1x1x128xf32>
    %13 = vector.shape_cast %12 : vector<1x1x128xf32> to vector<1x128xf32>
    %14 = vector.broadcast %13 : vector<1x128xf32> to vector<128x128xf32>
    %15 = arith.addf %11, %14 : vector<128x128xf32>
    %cst_13 = arith.constant 0.000000e+00 : f32
    %16 = vector.broadcast %cst_13 : f32 to vector<128x128xf32>
    %17 = arith.maximumf %15, %16 : vector<128x128xf32>
    %18 = arith.truncf %17 : vector<128x128xf32> to vector<128x128xbf16>
    %c1 = arith.constant 1 : index
    %c0_14 = arith.constant 0 : index
    %c0_15 = arith.constant 0 : index
    %19 = vector.load %arg4[%c1, %c0_14, %c0_15] : memref<2x128x128xbf16, #tpu.memory_space<vmem>>, vector<1x128x128xbf16>
    %20 = vector.shape_cast %19 : vector<1x128x128xbf16> to vector<128x128xbf16>
    %cst_16 = arith.constant dense<0.000000e+00> : vector<128x128xf32>
    %21 = tpu.matmul %18, %20, %cst_16 {dimension_numbers = #tpu.dot_dimension_numbers<[1], [0], [0], [1], [0, 0, 1, 1], [], []>} : vector<128x128xbf16>, vector<128x128xbf16>, vector<128x128xf32> -> vector<128x128xf32>
    %c1_17 = arith.constant 1 : index
    %c0_18 = arith.constant 0 : index
    %c0_19 = arith.constant 0 : index
    %22 = vector.load %arg5[%c1_17, %c0_18, %c0_19] : memref<2x1x128xf32, #tpu.memory_space<vmem>>, vector<1x1x128xf32>
    %23 = vector.shape_cast %22 : vector<1x1x128xf32> to vector<1x128xf32>
    %24 = vector.broadcast %23 : vector<1x128xf32> to vector<128x128xf32>
    %25 = arith.addf %21, %24 : vector<128x128xf32>
    %cst_20 = arith.constant 0.000000e+00 : f32
    %26 = vector.broadcast %cst_20 : f32 to vector<128x128xf32>
    %27 = arith.maximumf %25, %26 : vector<128x128xf32>
    %28 = vector.shape_cast %27 : vector<128x128xf32> to vector<16x8x128xf32>
    %cst_21 = arith.constant dense<0xFF800000> : vector<16x128xf32>
    %29 = vector.multi_reduction <maximumf>, %28, %cst_21 [1] : vector<16x8x128xf32> to vector<16x128xf32>
    %30 = arith.truncf %29 : vector<16x128xf32> to vector<16x128xbf16>
    %c0_22 = arith.constant 0 : index
    %c0_23 = arith.constant 0 : index
    %31 = vector.load %arg6[%c0_22, %c0_23] : memref<16x128xbf16, #tpu.memory_space<vmem>>, vector<16x128xbf16>
    tpu.vector_store %arg6[%c0_22, %c0_23], %30 {strides = array<i32>} : memref<16x128xbf16, #tpu.memory_space<vmem>>, vector<16x128xbf16>,
    return
  }
  func.func @transform_0(%arg0: i32) -> (i32, i32) {
    %c0_i32 = arith.constant 0 : i32
    %c0_i32_0 = arith.constant 0 : i32
    return %arg0, %c0_i32 : i32, i32
  }
  func.func @transform_1(%arg0: i32) -> (i32, i32) {
    %c0_i32 = arith.constant 0 : i32
    %c0_i32_0 = arith.constant 0 : i32
    %c0_i32_1 = arith.constant 0 : i32
    return %c0_i32, %c0_i32_0 : i32, i32
  }
  func.func @transform_2(%arg0: i32) -> (i32, i32) {
    %c0_i32 = arith.constant 0 : i32
    %c0_i32_0 = arith.constant 0 : i32
    %c0_i32_1 = arith.constant 0 : i32
    return %c0_i32, %c0_i32_0 : i32, i32
  }
  func.func @transform_3(%arg0: i32) -> (i32, i32, i32) {
    %c0_i32 = arith.constant 0 : i32
    %c0_i32_0 = arith.constant 0 : i32
    %c0_i32_1 = arith.constant 0 : i32
    %c0_i32_2 = arith.constant 0 : i32
    return %c0_i32, %c0_i32_0, %c0_i32_1 : i32, i32, i32
  }
  func.func @transform_4(%arg0: i32) -> (i32, i32, i32) {
    %c0_i32 = arith.constant 0 : i32
    %c0_i32_0 = arith.constant 0 : i32
    %c0_i32_1 = arith.constant 0 : i32
    %c0_i32_2 = arith.constant 0 : i32
    return %c0_i32, %c0_i32_0, %c0_i32_1 : i32, i32, i32
  }
  func.func @transform_5(%arg0: i32) -> (i32, i32) {
    %c0_i32 = arith.constant 0 : i32
    %c0_i32_0 = arith.constant 0 : i32
    return %arg0, %c0_i32 : i32, i32
  }
}

module attributes {stable_mosaic.version = 11 : i64} {
  func.func @_mlp_maxpool_kernel(%arg0: i32, %arg1: memref<16x128xbf16, #tpu.memory_space<vmem>>, %arg2: memref<128x128xbf16, #tpu.memory_space<vmem>>, %arg3: memref<1x128xf32, #tpu.memory_space<vmem>>, %arg4: memref<1x128x128xbf16, #tpu.memory_space<vmem>>, %arg5: memref<1x1x128xf32, #tpu.memory_space<vmem>>, %arg6: memref<16x128xbf16, #tpu.memory_space<vmem>>) attributes {dimension_semantics = [#tpu.dimension_semantics<parallel>], iteration_bounds = array<i64: 1>, scalar_prefetch = 0 : i64, scratch_operands = 0 : i64, tpu.core_type = #tpu.core_type<tc>, window_params = [{transform_indices = @transform_0, window_bounds = array<i64: 16, 128>}, {pipeline_mode = #tpu.pipeline_mode<synchronous>, transform_indices = @transform_1, window_bounds = array<i64: 128, 128>}, {pipeline_mode = #tpu.pipeline_mode<synchronous>, transform_indices = @transform_2, window_bounds = array<i64: 1, 128>}, {pipeline_mode = #tpu.pipeline_mode<synchronous>, transform_indices = @transform_3, window_bounds = array<i64: 1, 128, 128>}, {pipeline_mode = #tpu.pipeline_mode<synchronous>, transform_indices = @transform_4, window_bounds = array<i64: 1, 1, 128>}, {transform_indices = @transform_5, window_bounds = array<i64: 16, 128>}]} {
    %c0 = arith.constant 0 : index
    %c0_0 = arith.constant 0 : index
    %0 = vector.load %arg1[%c0, %c0_0] : memref<16x128xbf16, #tpu.memory_space<vmem>>, vector<16x128xbf16>
    %c0_1 = arith.constant 0 : index
    %c0_2 = arith.constant 0 : index
    %1 = vector.load %arg2[%c0_1, %c0_2] : memref<128x128xbf16, #tpu.memory_space<vmem>>, vector<128x128xbf16>
    %cst = arith.constant dense<0.000000e+00> : vector<16x128xf32>
    %2 = tpu.matmul %0, %1, %cst {dimension_numbers = #tpu.dot_dimension_numbers<[1], [0], [0], [1], [0, 0, 1, 1], [], []>} : vector<16x128xbf16>, vector<128x128xbf16>, vector<16x128xf32> -> vector<16x128xf32>
    %c0_3 = arith.constant 0 : index
    %c0_4 = arith.constant 0 : index
    %3 = vector.load %arg3[%c0_3, %c0_4] : memref<1x128xf32, #tpu.memory_space<vmem>>, vector<1x128xf32>
    %4 = vector.broadcast %3 : vector<1x128xf32> to vector<16x128xf32>
    %5 = arith.addf %2, %4 : vector<16x128xf32>
    %cst_5 = arith.constant 0.000000e+00 : f32
    %6 = vector.broadcast %cst_5 : f32 to vector<16x128xf32>
    %7 = arith.maximumf %5, %6 : vector<16x128xf32>
    %8 = arith.truncf %7 : vector<16x128xf32> to vector<16x128xbf16>
    %c0_6 = arith.constant 0 : index
    %c0_7 = arith.constant 0 : index
    %c0_8 = arith.constant 0 : index
    %9 = vector.load %arg4[%c0_6, %c0_7, %c0_8] : memref<1x128x128xbf16, #tpu.memory_space<vmem>>, vector<1x128x128xbf16>
    %10 = vector.shape_cast %9 : vector<1x128x128xbf16> to vector<128x128xbf16>
    %cst_9 = arith.constant dense<0.000000e+00> : vector<16x128xf32>
    %11 = tpu.matmul %8, %10, %cst_9 {dimension_numbers = #tpu.dot_dimension_numbers<[1], [0], [0], [1], [0, 0, 1, 1], [], []>} : vector<16x128xbf16>, vector<128x128xbf16>, vector<16x128xf32> -> vector<16x128xf32>
    %c0_10 = arith.constant 0 : index
    %c0_11 = arith.constant 0 : index
    %c0_12 = arith.constant 0 : index
    %12 = vector.load %arg5[%c0_10, %c0_11, %c0_12] : memref<1x1x128xf32, #tpu.memory_space<vmem>>, vector<1x1x128xf32>
    %13 = vector.shape_cast %12 : vector<1x1x128xf32> to vector<1x128xf32>
    %14 = vector.broadcast %13 : vector<1x128xf32> to vector<16x128xf32>
    %15 = arith.addf %11, %14 : vector<16x128xf32>
    %cst_13 = arith.constant 0.000000e+00 : f32
    %16 = vector.broadcast %cst_13 : f32 to vector<16x128xf32>
    %17 = arith.maximumf %15, %16 : vector<16x128xf32>
    %18 = arith.truncf %17 : vector<16x128xf32> to vector<16x128xbf16>
    %c0_14 = arith.constant 0 : index
    %c0_15 = arith.constant 0 : index
    %19 = vector.load %arg6[%c0_14, %c0_15] : memref<16x128xbf16, #tpu.memory_space<vmem>>, vector<16x128xbf16>
    tpu.vector_store %arg6[%c0_14, %c0_15], %18 {strides = array<i32>} : memref<16x128xbf16, #tpu.memory_space<vmem>>, vector<16x128xbf16>,
    return
  }
  func.func @transform_0(%arg0: i32) -> (i32, i32) {
    %c0_i32 = arith.constant 0 : i32
    %c0_i32_0 = arith.constant 0 : i32
    return %arg0, %c0_i32 : i32, i32
  }
  func.func @transform_1(%arg0: i32) -> (i32, i32) {
    %c0_i32 = arith.constant 0 : i32
    %c0_i32_0 = arith.constant 0 : i32
    %c0_i32_1 = arith.constant 0 : i32
    return %c0_i32, %c0_i32_0 : i32, i32
  }
  func.func @transform_2(%arg0: i32) -> (i32, i32) {
    %c0_i32 = arith.constant 0 : i32
    %c0_i32_0 = arith.constant 0 : i32
    %c0_i32_1 = arith.constant 0 : i32
    return %c0_i32, %c0_i32_0 : i32, i32
  }
  func.func @transform_3(%arg0: i32) -> (i32, i32, i32) {
    %c0_i32 = arith.constant 0 : i32
    %c0_i32_0 = arith.constant 0 : i32
    %c0_i32_1 = arith.constant 0 : i32
    %c0_i32_2 = arith.constant 0 : i32
    return %c0_i32, %c0_i32_0, %c0_i32_1 : i32, i32, i32
  }
  func.func @transform_4(%arg0: i32) -> (i32, i32, i32) {
    %c0_i32 = arith.constant 0 : i32
    %c0_i32_0 = arith.constant 0 : i32
    %c0_i32_1 = arith.constant 0 : i32
    %c0_i32_2 = arith.constant 0 : i32
    return %c0_i32, %c0_i32_0, %c0_i32_1 : i32, i32, i32
  }
  func.func @transform_5(%arg0: i32) -> (i32, i32) {
    %c0_i32 = arith.constant 0 : i32
    %c0_i32_0 = arith.constant 0 : i32
    return %arg0, %c0_i32 : i32, i32
  }
}

module attributes {stable_mosaic.version = 11 : i64} {
  func.func @_mlp_maxpool_kernel(%arg0: i32, %arg1: memref<32x128xbf16, #tpu.memory_space<vmem>>, %arg2: memref<128x128xbf16, #tpu.memory_space<vmem>>, %arg3: memref<1x128xf32, #tpu.memory_space<vmem>>, %arg4: memref<1x128x128xbf16, #tpu.memory_space<vmem>>, %arg5: memref<1x1x128xf32, #tpu.memory_space<vmem>>, %arg6: memref<32x128xbf16, #tpu.memory_space<vmem>>) attributes {dimension_semantics = [#tpu.dimension_semantics<parallel>], iteration_bounds = array<i64: 1>, scalar_prefetch = 0 : i64, scratch_operands = 0 : i64, tpu.core_type = #tpu.core_type<tc>, window_params = [{transform_indices = @transform_0, window_bounds = array<i64: 32, 128>}, {pipeline_mode = #tpu.pipeline_mode<synchronous>, transform_indices = @transform_1, window_bounds = array<i64: 128, 128>}, {pipeline_mode = #tpu.pipeline_mode<synchronous>, transform_indices = @transform_2, window_bounds = array<i64: 1, 128>}, {pipeline_mode = #tpu.pipeline_mode<synchronous>, transform_indices = @transform_3, window_bounds = array<i64: 1, 128, 128>}, {pipeline_mode = #tpu.pipeline_mode<synchronous>, transform_indices = @transform_4, window_bounds = array<i64: 1, 1, 128>}, {transform_indices = @transform_5, window_bounds = array<i64: 32, 128>}]} {
    %c0 = arith.constant 0 : index
    %c0_0 = arith.constant 0 : index
    %0 = vector.load %arg1[%c0, %c0_0] : memref<32x128xbf16, #tpu.memory_space<vmem>>, vector<32x128xbf16>
    %c0_1 = arith.constant 0 : index
    %c0_2 = arith.constant 0 : index
    %1 = vector.load %arg2[%c0_1, %c0_2] : memref<128x128xbf16, #tpu.memory_space<vmem>>, vector<128x128xbf16>
    %cst = arith.constant dense<0.000000e+00> : vector<32x128xf32>
    %2 = tpu.matmul %0, %1, %cst {dimension_numbers = #tpu.dot_dimension_numbers<[1], [0], [0], [1], [0, 0, 1, 1], [], []>} : vector<32x128xbf16>, vector<128x128xbf16>, vector<32x128xf32> -> vector<32x128xf32>
    %c0_3 = arith.constant 0 : index
    %c0_4 = arith.constant 0 : index
    %3 = vector.load %arg3[%c0_3, %c0_4] : memref<1x128xf32, #tpu.memory_space<vmem>>, vector<1x128xf32>
    %4 = vector.broadcast %3 : vector<1x128xf32> to vector<32x128xf32>
    %5 = arith.addf %2, %4 : vector<32x128xf32>
    %cst_5 = arith.constant 0.000000e+00 : f32
    %6 = vector.broadcast %cst_5 : f32 to vector<32x128xf32>
    %7 = arith.maximumf %5, %6 : vector<32x128xf32>
    %8 = arith.truncf %7 : vector<32x128xf32> to vector<32x128xbf16>
    %c0_6 = arith.constant 0 : index
    %c0_7 = arith.constant 0 : index
    %c0_8 = arith.constant 0 : index
    %9 = vector.load %arg4[%c0_6, %c0_7, %c0_8] : memref<1x128x128xbf16, #tpu.memory_space<vmem>>, vector<1x128x128xbf16>
    %10 = vector.shape_cast %9 : vector<1x128x128xbf16> to vector<128x128xbf16>
    %cst_9 = arith.constant dense<0.000000e+00> : vector<32x128xf32>
    %11 = tpu.matmul %8, %10, %cst_9 {dimension_numbers = #tpu.dot_dimension_numbers<[1], [0], [0], [1], [0, 0, 1, 1], [], []>} : vector<32x128xbf16>, vector<128x128xbf16>, vector<32x128xf32> -> vector<32x128xf32>
    %c0_10 = arith.constant 0 : index
    %c0_11 = arith.constant 0 : index
    %c0_12 = arith.constant 0 : index
    %12 = vector.load %arg5[%c0_10, %c0_11, %c0_12] : memref<1x1x128xf32, #tpu.memory_space<vmem>>, vector<1x1x128xf32>
    %13 = vector.shape_cast %12 : vector<1x1x128xf32> to vector<1x128xf32>
    %14 = vector.broadcast %13 : vector<1x128xf32> to vector<32x128xf32>
    %15 = arith.addf %11, %14 : vector<32x128xf32>
    %cst_13 = arith.constant 0.000000e+00 : f32
    %16 = vector.broadcast %cst_13 : f32 to vector<32x128xf32>
    %17 = arith.maximumf %15, %16 : vector<32x128xf32>
    %18 = arith.truncf %17 : vector<32x128xf32> to vector<32x128xbf16>
    %c0_14 = arith.constant 0 : index
    %c0_15 = arith.constant 0 : index
    %19 = vector.load %arg6[%c0_14, %c0_15] : memref<32x128xbf16, #tpu.memory_space<vmem>>, vector<32x128xbf16>
    tpu.vector_store %arg6[%c0_14, %c0_15], %18 {strides = array<i32>} : memref<32x128xbf16, #tpu.memory_space<vmem>>, vector<32x128xbf16>,
    return
  }
  func.func @transform_0(%arg0: i32) -> (i32, i32) {
    %c0_i32 = arith.constant 0 : i32
    %c0_i32_0 = arith.constant 0 : i32
    return %arg0, %c0_i32 : i32, i32
  }
  func.func @transform_1(%arg0: i32) -> (i32, i32) {
    %c0_i32 = arith.constant 0 : i32
    %c0_i32_0 = arith.constant 0 : i32
    %c0_i32_1 = arith.constant 0 : i32
    return %c0_i32, %c0_i32_0 : i32, i32
  }
  func.func @transform_2(%arg0: i32) -> (i32, i32) {
    %c0_i32 = arith.constant 0 : i32
    %c0_i32_0 = arith.constant 0 : i32
    %c0_i32_1 = arith.constant 0 : i32
    return %c0_i32, %c0_i32_0 : i32, i32
  }
  func.func @transform_3(%arg0: i32) -> (i32, i32, i32) {
    %c0_i32 = arith.constant 0 : i32
    %c0_i32_0 = arith.constant 0 : i32
    %c0_i32_1 = arith.constant 0 : i32
    %c0_i32_2 = arith.constant 0 : i32
    return %c0_i32, %c0_i32_0, %c0_i32_1 : i32, i32, i32
  }
  func.func @transform_4(%arg0: i32) -> (i32, i32, i32) {
    %c0_i32 = arith.constant 0 : i32
    %c0_i32_0 = arith.constant 0 : i32
    %c0_i32_1 = arith.constant 0 : i32
    %c0_i32_2 = arith.constant 0 : i32
    return %c0_i32, %c0_i32_0, %c0_i32_1 : i32, i32, i32
  }
  func.func @transform_5(%arg0: i32) -> (i32, i32) {
    %c0_i32 = arith.constant 0 : i32
    %c0_i32_0 = arith.constant 0 : i32
    return %arg0, %c0_i32 : i32, i32
  }
}

</mosaic_0001>

<llo_original>
// kernel: custom-call.48
$region0: #{custom-call.48}
  %s0 = inlined_call_operand.vmem [shape: f32[2,64], index: 0, kind: output, shape index: {}]

// kernel: custom-call.49
$region0: #{custom-call.49}
  %s0 = inlined_call_operand.vmem [shape: f32[2,32], index: 0, kind: output, shape index: {}]

// kernel: a_call__.6
$region0: #{a_call__.6}
  #allocation0 [shape = 'u32[]', space=smem, size = 0x4, offset = 0x4, fixed_abs, tag = 'smem constant byte address 0x4 - core index']
  #allocation1 [shape = 'u32[72,128]{1,0:T(1,128)}', space=vmem, size = 0x9000, scoped, tag = 'internal scratch']
  %s0 = inlined_call_operand.vmem [shape: bf16[1024,6], index: 0, kind: input, shape index: {}]
  %s1 = inlined_call_operand.vmem [shape: bf16[6,128], index: 1, kind: input, shape index: {}]
  %s2 = inlined_call_operand.vmem [shape: f32[1,128], index: 2, kind: input, shape index: {}]
  %s3 = inlined_call_operand.vmem [shape: bf16[2,128,128], index: 3, kind: input, shape index: {}]
  %s4 = inlined_call_operand.vmem [shape: f32[2,1,128], index: 4, kind: input, shape index: {}]
  %s5 = inlined_call_operand.vmem [shape: bf16[64,128], index: 5, kind: output, shape index: {}]
  %s6 = sld [smem:[#allocation0]]
  $region30: #{a_call__.6} parent=0
    _
  %s8 = ssub.s32 1, %s6
  %s9 = scalar_select 0, %s8, %s6
  // Predicated region
  $region2: #{a_call__.6} parent=0 // pred_check
    _
  $region3: #{a_call__.6} parent=0 // pred_check_branch
    %11 = sbr.rel (0) target = $region5
  $region4: #{a_call__.6} parent=0 // pred_region
    _
  $region5: #{a_call__.6} parent=0 // pred_fallthru
    _
  // Predicated region
  $region6: #{a_call__.6} parent=0 // pred_check
    _
  $region7: #{a_call__.6} parent=0 // pred_check_branch
    %13 = sbr.rel (0) target = $region9
  $region8: #{a_call__.6} parent=0 // pred_region
    _
  $region9: #{a_call__.6} parent=0 // pred_fallthru
    _
  // Predicated region
  $region10: #{a_call__.6} parent=0 // pred_check
    _
  $region11: #{a_call__.6} parent=0 // pred_check_branch
    %15 = sbr.rel (0) target = $region13
  $region12: #{a_call__.6} parent=0 // pred_region
    _
  $region13: #{a_call__.6} parent=0 // pred_fallthru
    _
  // Predicated region
  $region14: #{a_call__.6} parent=0 // pred_check
    _
  $region15: #{a_call__.6} parent=0 // pred_check_branch
    %17 = sbr.rel (0) target = $region17
  $region16: #{a_call__.6} parent=0 // pred_region
    _
  $region17: #{a_call__.6} parent=0 // pred_fallthru
    _
  // Predicated region
  $region18: #{a_call__.6} parent=0 // pred_check
    _
  $region19: #{a_call__.6} parent=0 // pred_check_branch
    %19 = sbr.rel (0) target = $region21
  $region20: #{a_call__.6} parent=0 // pred_region
    _
  $region21: #{a_call__.6} parent=0 // pred_fallthru
    _
  %v21 = vld [vmem:[%s0] sm:$0xf]
  %v22 = vld [vmem:[%s0 + $0x4] sm:$0xf]
  %v23 = vld [vmem:[%s0 + $0x8] sm:$0xf]
  %v24 = vld [vmem:[%s0 + $0xc] sm:$0xf]
  %v25 = vld [vmem:[%s0 + $0x10] sm:$0xf]
  %v26 = vld [vmem:[%s0 + $0x14] sm:$0xf]
  %v27 = vld [vmem:[%s0 + $0x18] sm:$0xf]
  %v28 = vld [vmem:[%s0 + $0x1c] sm:$0xf]
  %v29 = vld [vmem:[%s0 + $0x20] sm:$0xf]
  %v30 = vld [vmem:[%s0 + $0x24] sm:$0xf]
  %v31 = vld [vmem:[%s0 + $0x28] sm:$0xf]
  %v32 = vld [vmem:[%s0 + $0x2c] sm:$0xf]
  %v33 = vld [vmem:[%s0 + $0x30] sm:$0xf]
  %v34 = vld [vmem:[%s0 + $0x34] sm:$0xf]
  %v35 = vld [vmem:[%s0 + $0x38] sm:$0xf]
  %v36 = vld [vmem:[%s0 + $0x3c] sm:$0xf]
  %v37 = vld [vmem:[%s0 + $0x40] sm:$0xf]
  %v38 = vld [vmem:[%s0 + $0x44] sm:$0xf]
  %v39 = vld [vmem:[%s0 + $0x48] sm:$0xf]
  %v40 = vld [vmem:[%s0 + $0x4c] sm:$0xf]
  %v41 = vld [vmem:[%s0 + $0x50] sm:$0xf]
  %v42 = vld [vmem:[%s0 + $0x54] sm:$0xf]
  %v43 = vld [vmem:[%s0 + $0x58] sm:$0xf]
  %v44 = vld [vmem:[%s0 + $0x5c] sm:$0xf]
  %v45 = vld [vmem:[%s0 + $0x60] sm:$0xf]
  %v46 = vld [vmem:[%s0 + $0x64] sm:$0xf]
  %v47 = vld [vmem:[%s0 + $0x68] sm:$0xf]
  %v48 = vld [vmem:[%s0 + $0x6c] sm:$0xf]
  %v49 = vld [vmem:[%s0 + $0x70] sm:$0xf]
  %v50 = vld [vmem:[%s0 + $0x74] sm:$0xf]
  %v51 = vld [vmem:[%s0 + $0x78] sm:$0xf]
  %v52 = vld [vmem:[%s0 + $0x7c] sm:$0xf]
  %v53 = vld [vmem:[%s1] sm:$0x7]
  %v54 = vld [vmem:[%s2] sm:$0x1]
  %v56 = vperm.slane %v54, 0
  %v90 = vunpack.c.l.b16 %v21
  %v91 = vunpack.c.l.b16 %v22
  %v92 = vunpack.c.l.b16 %v23
  %v93 = vunpack.c.l.b16 %v24
  %v94 = vunpack.c.l.b16 %v25
  %v95 = vunpack.c.l.b16 %v26
  %v96 = vunpack.c.l.b16 %v27
  %v97 = vunpack.c.l.b16 %v28
  %v98 = vunpack.c.l.b16 %v29
  %v99 = vunpack.c.l.b16 %v30
  %v100 = vunpack.c.l.b16 %v31
  %v101 = vunpack.c.l.b16 %v32
  %v102 = vunpack.c.l.b16 %v33
  %v103 = vunpack.c.l.b16 %v34
  %v104 = vunpack.c.l.b16 %v35
  %v105 = vunpack.c.l.b16 %v36
  %v106 = vunpack.c.l.b16 %v37
  %v107 = vunpack.c.l.b16 %v38
  %v108 = vunpack.c.l.b16 %v39
  %v109 = vunpack.c.l.b16 %v40
  %v110 = vunpack.c.l.b16 %v41
  %v111 = vunpack.c.l.b16 %v42
  %v112 = vunpack.c.l.b16 %v43
  %v113 = vunpack.c.l.b16 %v44
  %v114 = vunpack.c.l.b16 %v45
  %v115 = vunpack.c.l.b16 %v46
  %v116 = vunpack.c.l.b16 %v47
  %v117 = vunpack.c.l.b16 %v48
  %v118 = vunpack.c.l.b16 %v49
  %v119 = vunpack.c.l.b16 %v50
  %v120 = vunpack.c.l.b16 %v51
  %v121 = vunpack.c.l.b16 %v52
  %v122 = vpack.c.b16 %v91, %v90
  %v123 = vpack.c.b16 %v93, %v92
  %v124 = vpack.c.b16 %v95, %v94
  %v125 = vpack.c.b16 %v97, %v96
  %v126 = vpack.c.b16 %v99, %v98
  %v127 = vpack.c.b16 %v101, %v100
  %v128 = vpack.c.b16 %v103, %v102
  %v129 = vpack.c.b16 %v105, %v104
  %v130 = vpack.c.b16 %v107, %v106
  %v131 = vpack.c.b16 %v109, %v108
  %v132 = vpack.c.b16 %v111, %v110
  %v133 = vpack.c.b16 %v113, %v112
  %v134 = vpack.c.b16 %v115, %v114
  %v135 = vpack.c.b16 %v117, %v116
  %v136 = vpack.c.b16 %v119, %v118
  %v137 = vpack.c.b16 %v121, %v120
  %vm138 = vcmask 48128
  %v140 = vsel %vm138, %v122, 0
  %v143 = vsel %vm138, %v123, 0
  %v146 = vsel %vm138, %v124, 0
  %v149 = vsel %vm138, %v125, 0
  %v152 = vsel %vm138, %v126, 0
  %v155 = vsel %vm138, %v127, 0
  %v158 = vsel %vm138, %v128, 0
  %v161 = vsel %vm138, %v129, 0
  %v164 = vsel %vm138, %v130, 0
  %v167 = vsel %vm138, %v131, 0
  %v170 = vsel %vm138, %v132, 0
  %v173 = vsel %vm138, %v133, 0
  %v176 = vsel %vm138, %v134, 0
  %v179 = vsel %vm138, %v135, 0
  %v182 = vsel %vm138, %v136, 0
  %v185 = vsel %vm138, %v137, 0
  %vm187 = vcmask 1042432
  %v189 = vsel %vm187, %v53, 0
  %191 = vmatpush.bf16.msra.mxu0 0
  %192 = vmatpush.bf16.msra.mxu0 0
  %193 = vmatpush.bf16.msra.mxu0 0
  %194 = vmatpush.bf16.msra.mxu0 0
  %195 = vmatpush.bf16.msra.mxu0 0
  %196 = vmatpush.bf16.msra.mxu0 0
  %197 = vmatpush.bf16.msra.mxu0 0
  %198 = vmatpush.bf16.msra.mxu0 %v189
  %199 = vmatmul.bf16.gmra.mxu0 %v140
  %v200 = vpop.f32.mrf.mxu0
  %v201 = vadd.f32 %v56, %v200
  %v202 = vpop.f32.mrf.mxu0
  %v203 = vadd.f32 %v56, %v202
  %204 = vmatmul.bf16.gmra.mxu0 %v143
  %v205 = vpop.f32.mrf.mxu0
  %v206 = vadd.f32 %v56, %v205
  %v207 = vpop.f32.mrf.mxu0
  %v208 = vadd.f32 %v56, %v207
  %209 = vmatmul.bf16.gmra.mxu0 %v146
  %v210 = vpop.f32.mrf.mxu0
  %v211 = vadd.f32 %v56, %v210
  %v212 = vpop.f32.mrf.mxu0
  %v213 = vadd.f32 %v56, %v212
  %214 = vmatmul.bf16.gmra.mxu0 %v149
  %v215 = vpop.f32.mrf.mxu0
  %v216 = vadd.f32 %v56, %v215
  %v217 = vpop.f32.mrf.mxu0
  %v218 = vadd.f32 %v56, %v217
  %219 = vmatmul.bf16.gmra.mxu0 %v152
  %v220 = vpop.f32.mrf.mxu0
  %v221 = vadd.f32 %v56, %v220
  %v222 = vpop.f32.mrf.mxu0
  %v223 = vadd.f32 %v56, %v222
  %224 = vmatmul.bf16.gmra.mxu0 %v155
  %v225 = vpop.f32.mrf.mxu0
  %v226 = vadd.f32 %v56, %v225
  %v227 = vpop.f32.mrf.mxu0
  %v228 = vadd.f32 %v56, %v227
  %229 = vmatmul.bf16.gmra.mxu0 %v158
  %v230 = vpop.f32.mrf.mxu0
  %v231 = vadd.f32 %v56, %v230
  %v232 = vpop.f32.mrf.mxu0
  %v233 = vadd.f32 %v56, %v232
  %234 = vmatmul.bf16.gmra.mxu0 %v161
  %v235 = vpop.f32.mrf.mxu0
  %v236 = vadd.f32 %v56, %v235
  %v237 = vpop.f32.mrf.mxu0
  %v238 = vadd.f32 %v56, %v237
  %239 = vmatmul.bf16.gmra.mxu0 %v164
  %v240 = vpop.f32.mrf.mxu0
  %v241 = vadd.f32 %v56, %v240
  %v242 = vpop.f32.mrf.mxu0
  %v243 = vadd.f32 %v56, %v242
  %244 = vmatmul.bf16.gmra.mxu0 %v167
  %v245 = vpop.f32.mrf.mxu0
  %v246 = vadd.f32 %v56, %v245
  %v247 = vpop.f32.mrf.mxu0
  %v248 = vadd.f32 %v56, %v247
  %249 = vmatmul.bf16.gmra.mxu0 %v170
  %v250 = vpop.f32.mrf.mxu0
  %v251 = vadd.f32 %v56, %v250
  %v252 = vpop.f32.mrf.mxu0
  %v253 = vadd.f32 %v56, %v252
  %254 = vmatmul.bf16.gmra.mxu0 %v173
  %v255 = vpop.f32.mrf.mxu0
  %v256 = vadd.f32 %v56, %v255
  %v257 = vpop.f32.mrf.mxu0
  %v258 = vadd.f32 %v56, %v257
  %259 = vmatmul.bf16.gmra.mxu0 %v176
  %v260 = vpop.f32.mrf.mxu0
  %v261 = vadd.f32 %v56, %v260
  %v262 = vpop.f32.mrf.mxu0
  %v263 = vadd.f32 %v56, %v262
  %264 = vmatmul.bf16.gmra.mxu0 %v179
  %v265 = vpop.f32.mrf.mxu0
  %v266 = vadd.f32 %v56, %v265
  %v267 = vpop.f32.mrf.mxu0
  %v268 = vadd.f32 %v56, %v267
  %269 = vmatmul.bf16.gmra.mxu0 %v182
  %v270 = vpop.f32.mrf.mxu0
  %v271 = vadd.f32 %v56, %v270
  %v272 = vpop.f32.mrf.mxu0
  %v273 = vadd.f32 %v56, %v272
  %274 = vmatmul.bf16.gmra.mxu0 %v185
  %v275 = vpop.f32.mrf.mxu0
  %v276 = vadd.f32 %v56, %v275
  %v277 = vpop.f32.mrf.mxu0
  %v278 = vadd.f32 %v56, %v277
  %279 = vdwg.mxu0
  %v280 = vmax.f32 %v201, 0.0
  %v281 = vmax.f32 %v203, 0.0
  %v282 = vmax.f32 %v206, 0.0
  %v283 = vmax.f32 %v208, 0.0
  %v284 = vmax.f32 %v211, 0.0
  %v285 = vmax.f32 %v213, 0.0
  %v286 = vmax.f32 %v216, 0.0
  %v287 = vmax.f32 %v218, 0.0
  %v288 = vmax.f32 %v221, 0.0
  %v289 = vmax.f32 %v223, 0.0
  %v290 = vmax.f32 %v226, 0.0
  %v291 = vmax.f32 %v228, 0.0
  %v292 = vmax.f32 %v231, 0.0
  %v293 = vmax.f32 %v233, 0.0
  %v294 = vmax.f32 %v236, 0.0
  %v295 = vmax.f32 %v238, 0.0
  %v296 = vmax.f32 %v241, 0.0
  %v297 = vmax.f32 %v243, 0.0
  %v298 = vmax.f32 %v246, 0.0
  %v299 = vmax.f32 %v248, 0.0
  %v300 = vmax.f32 %v251, 0.0
  %v301 = vmax.f32 %v253, 0.0
  %v302 = vmax.f32 %v256, 0.0
  %v303 = vmax.f32 %v258, 0.0
  %v304 = vmax.f32 %v261, 0.0
  %v305 = vmax.f32 %v263, 0.0
  %v306 = vmax.f32 %v266, 0.0
  %v307 = vmax.f32 %v268, 0.0
  %v308 = vmax.f32 %v271, 0.0
  %v309 = vmax.f32 %v273, 0.0
  %v310 = vmax.f32 %v276, 0.0
  %v311 = vmax.f32 %v278, 0.0
  %v312 = vpack.c.bf16 %v281, %v280
  %v313 = vpack.c.bf16 %v283, %v282
  %v314 = vpack.c.bf16 %v285, %v284
  %v315 = vpack.c.bf16 %v287, %v286
  %v316 = vpack.c.bf16 %v289, %v288
  %v317 = vpack.c.bf16 %v291, %v290
  %v318 = vpack.c.bf16 %v293, %v292
  %v319 = vpack.c.bf16 %v295, %v294
  %v320 = vpack.c.bf16 %v297, %v296
  %v321 = vpack.c.bf16 %v299, %v298
  %v322 = vpack.c.bf16 %v301, %v300
  %v323 = vpack.c.bf16 %v303, %v302
  %v324 = vpack.c.bf16 %v305, %v304
  %v325 = vpack.c.bf16 %v307, %v306
  %v326 = vpack.c.bf16 %v309, %v308
  %v327 = vpack.c.bf16 %v311, %v310
  %v328 = vld [vmem:[%s3] sm:$0xf]
  %v329 = vld [vmem:[%s3 + $0x4] sm:$0xf]
  %v330 = vld [vmem:[%s3 + $0x8] sm:$0xf]
  %v331 = vld [vmem:[%s3 + $0xc] sm:$0xf]
  %v332 = vld [vmem:[%s3 + $0x10] sm:$0xf]
  %v333 = vld [vmem:[%s3 + $0x14] sm:$0xf]
  %v334 = vld [vmem:[%s3 + $0x18] sm:$0xf]
  %v335 = vld [vmem:[%s3 + $0x1c] sm:$0xf]
  %v336 = vld [vmem:[%s3 + $0x20] sm:$0xf]
  %v337 = vld [vmem:[%s3 + $0x24] sm:$0xf]
  %v338 = vld [vmem:[%s3 + $0x28] sm:$0xf]
  %v339 = vld [vmem:[%s3 + $0x2c] sm:$0xf]
  %v340 = vld [vmem:[%s3 + $0x30] sm:$0xf]
  %v341 = vld [vmem:[%s3 + $0x34] sm:$0xf]
  %v342 = vld [vmem:[%s3 + $0x38] sm:$0xf]
  %v343 = vld [vmem:[%s3 + $0x3c] sm:$0xf]
  %v344 = vld [vmem:[%s4] sm:$0x1]
  %v346 = vperm.slane %v344, 0
  %v364 = vunpack.c.l.b16 %v328
  %v365 = vunpack.c.l.b16 %v329
  %v366 = vunpack.c.l.b16 %v330
  %v367 = vunpack.c.l.b16 %v331
  %v368 = vunpack.c.l.b16 %v332
  %v369 = vunpack.c.l.b16 %v333
  %v370 = vunpack.c.l.b16 %v334
  %v371 = vunpack.c.l.b16 %v335
  %v372 = vunpack.c.l.b16 %v336
  %v373 = vunpack.c.l.b16 %v337
  %v374 = vunpack.c.l.b16 %v338
  %v375 = vunpack.c.l.b16 %v339
  %v376 = vunpack.c.l.b16 %v340
  %v377 = vunpack.c.l.b16 %v341
  %v378 = vunpack.c.l.b16 %v342
  %v379 = vunpack.c.l.b16 %v343
  %v380 = vpack.c.b16 %v365, %v364
  %v381 = vpack.c.b16 %v367, %v366
  %v382 = vpack.c.b16 %v369, %v368
  %v383 = vpack.c.b16 %v371, %v370
  %v384 = vpack.c.b16 %v373, %v372
  %v385 = vpack.c.b16 %v375, %v374
  %v386 = vpack.c.b16 %v377, %v376
  %v387 = vpack.c.b16 %v379, %v378
  %396 = vmatpush.bf16.msra.mxu0 %v387
  %397 = vmatpush.bf16.msra.mxu0 %v386
  %398 = vmatpush.bf16.msra.mxu0 %v385
  %399 = vmatpush.bf16.msra.mxu0 %v384
  %400 = vmatpush.bf16.msra.mxu0 %v383
  %401 = vmatpush.bf16.msra.mxu0 %v382
  %402 = vmatpush.bf16.msra.mxu0 %v381
  %403 = vmatpush.bf16.msra.mxu0 %v380
  %404 = vmatmul.bf16.gmra.mxu0 %v312
  %v405 = vpop.f32.mrf.mxu0
  %v406 = vadd.f32 %v346, %v405
  %v407 = vpop.f32.mrf.mxu0
  %v408 = vadd.f32 %v346, %v407
  %409 = vmatmul.bf16.gmra.mxu0 %v313
  %v410 = vpop.f32.mrf.mxu0
  %v411 = vadd.f32 %v346, %v410
  %v412 = vpop.f32.mrf.mxu0
  %v413 = vadd.f32 %v346, %v412
  %414 = vmatmul.bf16.gmra.mxu0 %v314
  %v415 = vpop.f32.mrf.mxu0
  %v416 = vadd.f32 %v346, %v415
  %v417 = vpop.f32.mrf.mxu0
  %v418 = vadd.f32 %v346, %v417
  %419 = vmatmul.bf16.gmra.mxu0 %v315
  %v420 = vpop.f32.mrf.mxu0
  %v421 = vadd.f32 %v346, %v420
  %v422 = vpop.f32.mrf.mxu0
  %v423 = vadd.f32 %v346, %v422
  %424 = vmatmul.bf16.gmra.mxu0 %v316
  %v425 = vpop.f32.mrf.mxu0
  %v426 = vadd.f32 %v346, %v425
  %v427 = vpop.f32.mrf.mxu0
  %v428 = vadd.f32 %v346, %v427
  %429 = vmatmul.bf16.gmra.mxu0 %v317
  %v430 = vpop.f32.mrf.mxu0
  %v431 = vadd.f32 %v346, %v430
  %v432 = vpop.f32.mrf.mxu0
  %v433 = vadd.f32 %v346, %v432
  %434 = vmatmul.bf16.gmra.mxu0 %v318
  %v435 = vpop.f32.mrf.mxu0
  %v436 = vadd.f32 %v346, %v435
  %v437 = vpop.f32.mrf.mxu0
  %v438 = vadd.f32 %v346, %v437
  %439 = vmatmul.bf16.gmra.mxu0 %v319
  %v440 = vpop.f32.mrf.mxu0
  %v441 = vadd.f32 %v346, %v440
  %v442 = vpop.f32.mrf.mxu0
  %v443 = vadd.f32 %v346, %v442
  %444 = vmatmul.bf16.gmra.mxu0 %v320
  %v445 = vpop.f32.mrf.mxu0
  %v446 = vadd.f32 %v346, %v445
  %v447 = vpop.f32.mrf.mxu0
  %v448 = vadd.f32 %v346, %v447
  %449 = vmatmul.bf16.gmra.mxu0 %v321
  %v450 = vpop.f32.mrf.mxu0
  %v451 = vadd.f32 %v346, %v450
  %v452 = vpop.f32.mrf.mxu0
  %v453 = vadd.f32 %v346, %v452
  %454 = vmatmul.bf16.gmra.mxu0 %v322
  %v455 = vpop.f32.mrf.mxu0
  %v456 = vadd.f32 %v346, %v455
  %v457 = vpop.f32.mrf.mxu0
  %v458 = vadd.f32 %v346, %v457
  %459 = vmatmul.bf16.gmra.mxu0 %v323
  %v460 = vpop.f32.mrf.mxu0
  %v461 = vadd.f32 %v346, %v460
  %v462 = vpop.f32.mrf.mxu0
  %v463 = vadd.f32 %v346, %v462
  %464 = vmatmul.bf16.gmra.mxu0 %v324
  %v465 = vpop.f32.mrf.mxu0
  %v466 = vadd.f32 %v346, %v465
  %v467 = vpop.f32.mrf.mxu0
  %v468 = vadd.f32 %v346, %v467
  %469 = vmatmul.bf16.gmra.mxu0 %v325
  %v470 = vpop.f32.mrf.mxu0
  %v471 = vadd.f32 %v346, %v470
  %v472 = vpop.f32.mrf.mxu0
  %v473 = vadd.f32 %v346, %v472
  %474 = vmatmul.bf16.gmra.mxu0 %v326
  %v475 = vpop.f32.mrf.mxu0
  %v476 = vadd.f32 %v346, %v475
  %v477 = vpop.f32.mrf.mxu0
  %v478 = vadd.f32 %v346, %v477
  %479 = vmatmul.bf16.gmra.mxu0 %v327
  %v480 = vpop.f32.mrf.mxu0
  %v481 = vadd.f32 %v346, %v480
  %v482 = vpop.f32.mrf.mxu0
  %v483 = vadd.f32 %v346, %v482
  %484 = vdwg.mxu0
  %v485 = vmax.f32 %v406, 0.0
  %v486 = vmax.f32 %v408, 0.0
  %v487 = vmax.f32 %v411, 0.0
  %v488 = vmax.f32 %v413, 0.0
  %v489 = vmax.f32 %v416, 0.0
  %v490 = vmax.f32 %v418, 0.0
  %v491 = vmax.f32 %v421, 0.0
  %v492 = vmax.f32 %v423, 0.0
  %v493 = vmax.f32 %v426, 0.0
  %v494 = vmax.f32 %v428, 0.0
  %v495 = vmax.f32 %v431, 0.0
  %v496 = vmax.f32 %v433, 0.0
  %v497 = vmax.f32 %v436, 0.0
  %v498 = vmax.f32 %v438, 0.0
  %v499 = vmax.f32 %v441, 0.0
  %v500 = vmax.f32 %v443, 0.0
  %v501 = vmax.f32 %v446, 0.0
  %v502 = vmax.f32 %v448, 0.0
  %v503 = vmax.f32 %v451, 0.0
  %v504 = vmax.f32 %v453, 0.0
  %v505 = vmax.f32 %v456, 0.0
  %v506 = vmax.f32 %v458, 0.0
  %v507 = vmax.f32 %v461, 0.0
  %v508 = vmax.f32 %v463, 0.0
  %v509 = vmax.f32 %v466, 0.0
  %v510 = vmax.f32 %v468, 0.0
  %v511 = vmax.f32 %v471, 0.0
  %v512 = vmax.f32 %v473, 0.0
  %v513 = vmax.f32 %v476, 0.0
  %v514 = vmax.f32 %v478, 0.0
  %v515 = vmax.f32 %v481, 0.0
  %v516 = vmax.f32 %v483, 0.0
  %v517 = vpack.c.bf16 %v486, %v485
  %v518 = vpack.c.bf16 %v488, %v487
  %v519 = vpack.c.bf16 %v490, %v489
  %v520 = vpack.c.bf16 %v492, %v491
  %v521 = vpack.c.bf16 %v494, %v493
  %v522 = vpack.c.bf16 %v496, %v495
  %v523 = vpack.c.bf16 %v498, %v497
  %v524 = vpack.c.bf16 %v500, %v499
  %v525 = vpack.c.bf16 %v502, %v501
  %v526 = vpack.c.bf16 %v504, %v503
  %v527 = vpack.c.bf16 %v506, %v505
  %v528 = vpack.c.bf16 %v508, %v507
  %v529 = vpack.c.bf16 %v510, %v509
  %v530 = vpack.c.bf16 %v512, %v511
  %v531 = vpack.c.bf16 %v514, %v513
  %v532 = vpack.c.bf16 %v516, %v515
  %s533 = scalar_lea.vmem %s3, 64
  %v534 = vld [vmem:[%s533] sm:$0xf]
  %v535 = vld [vmem:[%s533 + $0x4] sm:$0xf]
  %v536 = vld [vmem:[%s533 + $0x8] sm:$0xf]
  %v537 = vld [vmem:[%s533 + $0xc] sm:$0xf]
  %v538 = vld [vmem:[%s533 + $0x10] sm:$0xf]
  %v539 = vld [vmem:[%s533 + $0x14] sm:$0xf]
  %v540 = vld [vmem:[%s533 + $0x18] sm:$0xf]
  %v541 = vld [vmem:[%s533 + $0x1c] sm:$0xf]
  %v542 = vld [vmem:[%s533 + $0x20] sm:$0xf]
  %v543 = vld [vmem:[%s533 + $0x24] sm:$0xf]
  %v544 = vld [vmem:[%s533 + $0x28] sm:$0xf]
  %v545 = vld [vmem:[%s533 + $0x2c] sm:$0xf]
  %v546 = vld [vmem:[%s533 + $0x30] sm:$0xf]
  %v547 = vld [vmem:[%s533 + $0x34] sm:$0xf]
  %v548 = vld [vmem:[%s533 + $0x38] sm:$0xf]
  %v549 = vld [vmem:[%s533 + $0x3c] sm:$0xf]
  %s550 = scalar_lea.vmem %s4, 1
  %v551 = vld [vmem:[%s550] sm:$0x1]
  %v553 = vperm.slane %v551, 0
  %v571 = vunpack.c.l.b16 %v534
  %v572 = vunpack.c.l.b16 %v535
  %v573 = vunpack.c.l.b16 %v536
  %v574 = vunpack.c.l.b16 %v537
  %v575 = vunpack.c.l.b16 %v538
  %v576 = vunpack.c.l.b16 %v539
  %v577 = vunpack.c.l.b16 %v540
  %v578 = vunpack.c.l.b16 %v541
  %v579 = vunpack.c.l.b16 %v542
  %v580 = vunpack.c.l.b16 %v543
  %v581 = vunpack.c.l.b16 %v544
  %v582 = vunpack.c.l.b16 %v545
  %v583 = vunpack.c.l.b16 %v546
  %v584 = vunpack.c.l.b16 %v547
  %v585 = vunpack.c.l.b16 %v548
  %v586 = vunpack.c.l.b16 %v549
  %v587 = vpack.c.b16 %v572, %v571
  %v588 = vpack.c.b16 %v574, %v573
  %v589 = vpack.c.b16 %v576, %v575
  %v590 = vpack.c.b16 %v578, %v577
  %v591 = vpack.c.b16 %v580, %v579
  %v592 = vpack.c.b16 %v582, %v581
  %v593 = vpack.c.b16 %v584, %v583
  %v594 = vpack.c.b16 %v586, %v585
  %603 = vmatpush.bf16.msra.mxu0 %v594
  %604 = vmatpush.bf16.msra.mxu0 %v593
  %605 = vmatpush.bf16.msra.mxu0 %v592
  %606 = vmatpush.bf16.msra.mxu0 %v591
  %607 = vmatpush.bf16.msra.mxu0 %v590
  %608 = vmatpush.bf16.msra.mxu0 %v589
  %609 = vmatpush.bf16.msra.mxu0 %v588
  %610 = vmatpush.bf16.msra.mxu0 %v587
  %611 = vmatmul.bf16.gmra.mxu0 %v517
  %v612 = vpop.f32.mrf.mxu0
  %v613 = vadd.f32 %v553, %v612
  %v614 = vpop.f32.mrf.mxu0
  %v615 = vadd.f32 %v553, %v614
  %616 = vmatmul.bf16.gmra.mxu0 %v518
  %v617 = vpop.f32.mrf.mxu0
  %v618 = vadd.f32 %v553, %v617
  %v619 = vpop.f32.mrf.mxu0
  %v620 = vadd.f32 %v553, %v619
  %621 = vmatmul.bf16.gmra.mxu0 %v519
  %v622 = vpop.f32.mrf.mxu0
  %v623 = vadd.f32 %v553, %v622
  %v624 = vpop.f32.mrf.mxu0
  %v625 = vadd.f32 %v553, %v624
  %626 = vmatmul.bf16.gmra.mxu0 %v520
  %v627 = vpop.f32.mrf.mxu0
  %v628 = vadd.f32 %v553, %v627
  %v629 = vpop.f32.mrf.mxu0
  %v630 = vadd.f32 %v553, %v629
  %631 = vmatmul.bf16.gmra.mxu0 %v521
  %v632 = vpop.f32.mrf.mxu0
  %v633 = vadd.f32 %v553, %v632
  %v634 = vpop.f32.mrf.mxu0
  %v635 = vadd.f32 %v553, %v634
  %636 = vmatmul.bf16.gmra.mxu0 %v522
  %v637 = vpop.f32.mrf.mxu0
  %v638 = vadd.f32 %v553, %v637
  %v639 = vpop.f32.mrf.mxu0
  %v640 = vadd.f32 %v553, %v639
  %641 = vmatmul.bf16.gmra.mxu0 %v523
  %v642 = vpop.f32.mrf.mxu0
  %v643 = vadd.f32 %v553, %v642
  %v644 = vpop.f32.mrf.mxu0
  %v645 = vadd.f32 %v553, %v644
  %646 = vmatmul.bf16.gmra.mxu0 %v524
  %v647 = vpop.f32.mrf.mxu0
  %v648 = vadd.f32 %v553, %v647
  %v649 = vpop.f32.mrf.mxu0
  %v650 = vadd.f32 %v553, %v649
  %651 = vmatmul.bf16.gmra.mxu0 %v525
  %v652 = vpop.f32.mrf.mxu0
  %v653 = vadd.f32 %v553, %v652
  %v654 = vpop.f32.mrf.mxu0
  %v655 = vadd.f32 %v553, %v654
  %656 = vmatmul.bf16.gmra.mxu0 %v526
  %v657 = vpop.f32.mrf.mxu0
  %v658 = vadd.f32 %v553, %v657
  %v659 = vpop.f32.mrf.mxu0
  %v660 = vadd.f32 %v553, %v659
  %661 = vmatmul.bf16.gmra.mxu0 %v527
  %v662 = vpop.f32.mrf.mxu0
  %v663 = vadd.f32 %v553, %v662
  %v664 = vpop.f32.mrf.mxu0
  %v665 = vadd.f32 %v553, %v664
  %666 = vmatmul.bf16.gmra.mxu0 %v528
  %v667 = vpop.f32.mrf.mxu0
  %v668 = vadd.f32 %v553, %v667
  %v669 = vpop.f32.mrf.mxu0
  %v670 = vadd.f32 %v553, %v669
  %671 = vmatmul.bf16.gmra.mxu0 %v529
  %v672 = vpop.f32.mrf.mxu0
  %v673 = vadd.f32 %v553, %v672
  %v674 = vpop.f32.mrf.mxu0
  %v675 = vadd.f32 %v553, %v674
  %676 = vmatmul.bf16.gmra.mxu0 %v530
  %v677 = vpop.f32.mrf.mxu0
  %v678 = vadd.f32 %v553, %v677
  %v679 = vpop.f32.mrf.mxu0
  %v680 = vadd.f32 %v553, %v679
  %681 = vmatmul.bf16.gmra.mxu0 %v531
  %v682 = vpop.f32.mrf.mxu0
  %v683 = vadd.f32 %v553, %v682
  %v684 = vpop.f32.mrf.mxu0
  %v685 = vadd.f32 %v553, %v684
  %686 = vmatmul.bf16.gmra.mxu0 %v532
  %v687 = vpop.f32.mrf.mxu0
  %v688 = vadd.f32 %v553, %v687
  %v689 = vpop.f32.mrf.mxu0
  %v690 = vadd.f32 %v553, %v689
  %691 = vdwg.mxu0
  %v692 = vmax.f32 %v613, 0.0
  %v693 = vmax.f32 %v615, 0.0
  %v694 = vmax.f32 %v618, 0.0
  %v695 = vmax.f32 %v620, 0.0
  %v696 = vmax.f32 %v623, 0.0
  %v697 = vmax.f32 %v625, 0.0
  %v698 = vmax.f32 %v628, 0.0
  %v699 = vmax.f32 %v630, 0.0
  %v700 = vmax.f32 %v633, 0.0
  %v701 = vmax.f32 %v635, 0.0
  %v702 = vmax.f32 %v638, 0.0
  %v703 = vmax.f32 %v640, 0.0
  %v704 = vmax.f32 %v643, 0.0
  %v705 = vmax.f32 %v645, 0.0
  %v706 = vmax.f32 %v648, 0.0
  %v707 = vmax.f32 %v650, 0.0
  %v708 = vmax.f32 %v653, 0.0
  %v709 = vmax.f32 %v655, 0.0
  %v710 = vmax.f32 %v658, 0.0
  %v711 = vmax.f32 %v660, 0.0
  %v712 = vmax.f32 %v663, 0.0
  %v713 = vmax.f32 %v665, 0.0
  %v714 = vmax.f32 %v668, 0.0
  %v715 = vmax.f32 %v670, 0.0
  %v716 = vmax.f32 %v673, 0.0
  %v717 = vmax.f32 %v675, 0.0
  %v718 = vmax.f32 %v678, 0.0
  %v719 = vmax.f32 %v680, 0.0
  %v720 = vmax.f32 %v683, 0.0
  %v721 = vmax.f32 %v685, 0.0
  %v722 = vmax.f32 %v688, 0.0
  %v723 = vmax.f32 %v690, 0.0
  %v724 = vmax.f32 %v692, %v693
  %v725 = vrot.slane %v724, 4
  %v726 = vmax.f32 %v724, %v725
  %v727 = vrot.slane %v726, 2
  %v728 = vmax.f32 %v726, %v727
  %v729 = vrot.slane %v728, 1
  %v730 = vmax.f32 %v728, %v729
  %v731 = vmax.f32 %v694, %v695
  %v732 = vrot.slane %v731, 4
  %v733 = vmax.f32 %v731, %v732
  %v734 = vrot.slane %v733, 2
  %v735 = vmax.f32 %v733, %v734
  %v736 = vrot.slane %v735, 1
  %v737 = vmax.f32 %v735, %v736
  %v738 = vmax.f32 %v696, %v697
  %v739 = vrot.slane %v738, 4
  %v740 = vmax.f32 %v738, %v739
  %v741 = vrot.slane %v740, 2
  %v742 = vmax.f32 %v740, %v741
  %v743 = vrot.slane %v742, 1
  %v744 = vmax.f32 %v742, %v743
  %v745 = vmax.f32 %v698, %v699
  %v746 = vrot.slane %v745, 4
  %v747 = vmax.f32 %v745, %v746
  %v748 = vrot.slane %v747, 2
  %v749 = vmax.f32 %v747, %v748
  %v750 = vrot.slane %v749, 1
  %v751 = vmax.f32 %v749, %v750
  %v752 = vmax.f32 %v700, %v701
  %v753 = vrot.slane %v752, 4
  %v754 = vmax.f32 %v752, %v753
  %v755 = vrot.slane %v754, 2
  %v756 = vmax.f32 %v754, %v755
  %v757 = vrot.slane %v756, 1
  %v758 = vmax.f32 %v756, %v757
  %v759 = vmax.f32 %v702, %v703
  %v760 = vrot.slane %v759, 4
  %v761 = vmax.f32 %v759, %v760
  %v762 = vrot.slane %v761, 2
  %v763 = vmax.f32 %v761, %v762
  %v764 = vrot.slane %v763, 1
  %v765 = vmax.f32 %v763, %v764
  %v766 = vmax.f32 %v704, %v705
  %v767 = vrot.slane %v766, 4
  %v768 = vmax.f32 %v766, %v767
  %v769 = vrot.slane %v768, 2
  %v770 = vmax.f32 %v768, %v769
  %v771 = vrot.slane %v770, 1
  %v772 = vmax.f32 %v770, %v771
  %v773 = vmax.f32 %v706, %v707
  %v774 = vrot.slane %v773, 4
  %v775 = vmax.f32 %v773, %v774
  %v776 = vrot.slane %v775, 2
  %v777 = vmax.f32 %v775, %v776
  %v778 = vrot.slane %v777, 1
  %v779 = vmax.f32 %v777, %v778
  %v780 = vmax.f32 %v708, %v709
  %v781 = vrot.slane %v780, 4
  %v782 = vmax.f32 %v780, %v781
  %v783 = vrot.slane %v782, 2
  %v784 = vmax.f32 %v782, %v783
  %v785 = vrot.slane %v784, 1
  %v786 = vmax.f32 %v784, %v785
  %v787 = vmax.f32 %v710, %v711
  %v788 = vrot.slane %v787, 4
  %v789 = vmax.f32 %v787, %v788
  %v790 = vrot.slane %v789, 2
  %v791 = vmax.f32 %v789, %v790
  %v792 = vrot.slane %v791, 1
  %v793 = vmax.f32 %v791, %v792
  %v794 = vmax.f32 %v712, %v713
  %v795 = vrot.slane %v794, 4
  %v796 = vmax.f32 %v794, %v795
  %v797 = vrot.slane %v796, 2
  %v798 = vmax.f32 %v796, %v797
  %v799 = vrot.slane %v798, 1
  %v800 = vmax.f32 %v798, %v799
  %v801 = vmax.f32 %v714, %v715
  %v802 = vrot.slane %v801, 4
  %v803 = vmax.f32 %v801, %v802
  %v804 = vrot.slane %v803, 2
  %v805 = vmax.f32 %v803, %v804
  %v806 = vrot.slane %v805, 1
  %v807 = vmax.f32 %v805, %v806
  %v808 = vmax.f32 %v716, %v717
  %v809 = vrot.slane %v808, 4
  %v810 = vmax.f32 %v808, %v809
  %v811 = vrot.slane %v810, 2
  %v812 = vmax.f32 %v810, %v811
  %v813 = vrot.slane %v812, 1
  %v814 = vmax.f32 %v812, %v813
  %v815 = vmax.f32 %v718, %v719
  %v816 = vrot.slane %v815, 4
  %v817 = vmax.f32 %v815, %v816
  %v818 = vrot.slane %v817, 2
  %v819 = vmax.f32 %v817, %v818
  %v820 = vrot.slane %v819, 1
  %v821 = vmax.f32 %v819, %v820
  %v822 = vmax.f32 %v720, %v721
  %v823 = vrot.slane %v822, 4
  %v824 = vmax.f32 %v822, %v823
  %v825 = vrot.slane %v824, 2
  %v826 = vmax.f32 %v824, %v825
  %v827 = vrot.slane %v826, 1
  %v828 = vmax.f32 %v826, %v827
  %v829 = vmax.f32 %v722, %v723
  %v830 = vrot.slane %v829, 4
  %v831 = vmax.f32 %v829, %v830
  %v832 = vrot.slane %v831, 2
  %v833 = vmax.f32 %v831, %v832
  %v834 = vrot.slane %v833, 1
  %v835 = vmax.f32 %v833, %v834
  %v836 = vpack.c.bf16 %v730, %v730
  %v837 = vpack.c.bf16 %v737, %v737
  %v838 = vpack.c.bf16 %v744, %v744
  %v839 = vpack.c.bf16 %v751, %v751
  %v840 = vpack.c.bf16 %v758, %v758
  %v841 = vpack.c.bf16 %v765, %v765
  %v842 = vpack.c.bf16 %v772, %v772
  %v843 = vpack.c.bf16 %v779, %v779
  %v844 = vpack.c.bf16 %v786, %v786
  %v845 = vpack.c.bf16 %v793, %v793
  %v846 = vpack.c.bf16 %v800, %v800
  %v847 = vpack.c.bf16 %v807, %v807
  %v848 = vpack.c.bf16 %v814, %v814
  %v849 = vpack.c.bf16 %v821, %v821
  %v850 = vpack.c.bf16 %v828, %v828
  %v851 = vpack.c.bf16 %v835, %v835
  %v868 = vunpack.c.l.b16 %v836
  %v869 = vunpack.c.l.b16 %v837
  %v870 = vunpack.c.l.b16 %v838
  %v871 = vunpack.c.l.b16 %v839
  %v872 = vunpack.c.l.b16 %v840
  %v873 = vunpack.c.l.b16 %v841
  %v874 = vunpack.c.l.b16 %v842
  %v875 = vunpack.c.l.b16 %v843
  %v876 = vunpack.c.l.b16 %v844
  %v877 = vunpack.c.l.b16 %v845
  %v878 = vunpack.c.l.b16 %v846
  %v879 = vunpack.c.l.b16 %v847
  %v880 = vunpack.c.l.b16 %v848
  %v881 = vunpack.c.l.b16 %v849
  %v882 = vunpack.c.l.b16 %v850
  %v883 = vunpack.c.l.b16 %v851
  %vm884 = vcmask 1041409
  %v885 = vsel %vm884, %v869, %v868
  %vm886 = vcmask 1042434
  %v887 = vsel %vm886, %v870, %v885
  %vm888 = vcmask 1043459
  %v889 = vsel %vm888, %v871, %v887
  %vm890 = vcmask 1044484
  %v891 = vsel %vm890, %v872, %v889
  %vm892 = vcmask 1045509
  %v893 = vsel %vm892, %v873, %v891
  %vm894 = vcmask 1046534
  %v895 = vsel %vm894, %v874, %v893
  %vm896 = vcmask 1047559
  %v897 = vsel %vm896, %v875, %v895
  %v898 = vsel %vm884, %v877, %v876
  %v899 = vsel %vm886, %v878, %v898
  %v900 = vsel %vm888, %v879, %v899
  %v901 = vsel %vm890, %v880, %v900
  %v902 = vsel %vm892, %v881, %v901
  %v903 = vsel %vm894, %v882, %v902
  %v904 = vsel %vm896, %v883, %v903
  %v905 = vpack.c.b16 %v897, %v897
  %v906 = vpack.c.b16 %v904, %v904
  %909 = vst [vmem:[%s5] sm:$0xf] %v905
  %910 = vst [vmem:[%s5 + $0x4] sm:$0xf] %v906
  %v911 = vld [vmem:[%s0 + $0x80] sm:$0xf]
  %v912 = vld [vmem:[%s0 + $0x84] sm:$0xf]
  %v913 = vld [vmem:[%s0 + $0x88] sm:$0xf]
  %v914 = vld [vmem:[%s0 + $0x8c] sm:$0xf]
  %v915 = vld [vmem:[%s0 + $0x90] sm:$0xf]
  %v916 = vld [vmem:[%s0 + $0x94] sm:$0xf]
  %v917 = vld [vmem:[%s0 + $0x98] sm:$0xf]
  %v918 = vld [vmem:[%s0 + $0x9c] sm:$0xf]
  %v919 = vld [vmem:[%s0 + $0xa0] sm:$0xf]
  %v920 = vld [vmem:[%s0 + $0xa4] sm:$0xf]
  %v921 = vld [vmem:[%s0 + $0xa8] sm:$0xf]
  %v922 = vld [vmem:[%s0 + $0xac] sm:$0xf]
  %v923 = vld [vmem:[%s0 + $0xb0] sm:$0xf]
  %v924 = vld [vmem:[%s0 + $0xb4] sm:$0xf]
  %v925 = vld [vmem:[%s0 + $0xb8] sm:$0xf]
  %v926 = vld [vmem:[%s0 + $0xbc] sm:$0xf]
  %v927 = vld [vmem:[%s0 + $0xc0] sm:$0xf]
  %v928 = vld [vmem:[%s0 + $0xc4] sm:$0xf]
  %v929 = vld [vmem:[%s0 + $0xc8] sm:$0xf]
  %v930 = vld [vmem:[%s0 + $0xcc] sm:$0xf]
  %v931 = vld [vmem:[%s0 + $0xd0] sm:$0xf]
  %v932 = vld [vmem:[%s0 + $0xd4] sm:$0xf]
  %v933 = vld [vmem:[%s0 + $0xd8] sm:$0xf]
  %v934 = vld [vmem:[%s0 + $0xdc] sm:$0xf]
  %v935 = vld [vmem:[%s0 + $0xe0] sm:$0xf]
  %v936 = vld [vmem:[%s0 + $0xe4] sm:$0xf]
  %v937 = vld [vmem:[%s0 + $0xe8] sm:$0xf]
  %v938 = vld [vmem:[%s0 + $0xec] sm:$0xf]
  %v939 = vld [vmem:[%s0 + $0xf0] sm:$0xf]
  %v940 = vld [vmem:[%s0 + $0xf4] sm:$0xf]
  %v941 = vld [vmem:[%s0 + $0xf8] sm:$0xf]
  %v942 = vld [vmem:[%s0 + $0xfc] sm:$0xf]
  %v943 = vld [vmem:[%s1] sm:$0x7]
  %v944 = vld [vmem:[%s2] sm:$0x1]
  %v946 = vperm.slane %v944, 0
  %v980 = vunpack.c.l.b16 %v911
  %v981 = vunpack.c.l.b16 %v912
  %v982 = vunpack.c.l.b16 %v913
  %v983 = vunpack.c.l.b16 %v914
  %v984 = vunpack.c.l.b16 %v915
  %v985 = vunpack.c.l.b16 %v916
  %v986 = vunpack.c.l.b16 %v917
  %v987 = vunpack.c.l.b16 %v918
  %v988 = vunpack.c.l.b16 %v919
  %v989 = vunpack.c.l.b16 %v920
  %v990 = vunpack.c.l.b16 %v921
  %v991 = vunpack.c.l.b16 %v922
  %v992 = vunpack.c.l.b16 %v923
  %v993 = vunpack.c.l.b16 %v924
  %v994 = vunpack.c.l.b16 %v925
  %v995 = vunpack.c.l.b16 %v926
  %v996 = vunpack.c.l.b16 %v927
  %v997 = vunpack.c.l.b16 %v928
  %v998 = vunpack.c.l.b16 %v929
  %v999 = vunpack.c.l.b16 %v930
  %v1000 = vunpack.c.l.b16 %v931
  %v1001 = vunpack.c.l.b16 %v932
  %v1002 = vunpack.c.l.b16 %v933
  %v1003 = vunpack.c.l.b16 %v934
  %v1004 = vunpack.c.l.b16 %v935
  %v1005 = vunpack.c.l.b16 %v936
  %v1006 = vunpack.c.l.b16 %v937
  %v1007 = vunpack.c.l.b16 %v938
  %v1008 = vunpack.c.l.b16 %v939
  %v1009 = vunpack.c.l.b16 %v940
  %v1010 = vunpack.c.l.b16 %v941
  %v1011 = vunpack.c.l.b16 %v942
  %v1012 = vpack.c.b16 %v981, %v980
  %v1013 = vpack.c.b16 %v983, %v982
  %v1014 = vpack.c.b16 %v985, %v984
  %v1015 = vpack.c.b16 %v987, %v986
  %v1016 = vpack.c.b16 %v989, %v988
  %v1017 = vpack.c.b16 %v991, %v990
  %v1018 = vpack.c.b16 %v993, %v992
  %v1019 = vpack.c.b16 %v995, %v994
  %v1020 = vpack.c.b16 %v997, %v996
  %v1021 = vpack.c.b16 %v999, %v998
  %v1022 = vpack.c.b16 %v1001, %v1000
  %v1023 = vpack.c.b16 %v1003, %v1002
  %v1024 = vpack.c.b16 %v1005, %v1004
  %v1025 = vpack.c.b16 %v1007, %v1006
  %v1026 = vpack.c.b16 %v1009, %v1008
  %v1027 = vpack.c.b16 %v1011, %v1010
  %v1029 = vsel %vm138, %v1012, 0
  %v1032 = vsel %vm138, %v1013, 0
  %v1035 = vsel %vm138, %v1014, 0
  %v1038 = vsel %vm138, %v1015, 0
  %v1041 = vsel %vm138, %v1016, 0
  %v1044 = vsel %vm138, %v1017, 0
  %v1047 = vsel %vm138, %v1018, 0
  %v1050 = vsel %vm138, %v1019, 0
  %v1053 = vsel %vm138, %v1020, 0
  %v1056 = vsel %vm138, %v1021, 0
  %v1059 = vsel %vm138, %v1022, 0
  %v1062 = vsel %vm138, %v1023, 0
  %v1065 = vsel %vm138, %v1024, 0
  %v1068 = vsel %vm138, %v1025, 0
  %v1071 = vsel %vm138, %v1026, 0
  %v1074 = vsel %vm138, %v1027, 0
  %v1077 = vsel %vm187, %v943, 0
  %1079 = vmatpush.bf16.msra.mxu0 0
  %1080 = vmatpush.bf16.msra.mxu0 0
  %1081 = vmatpush.bf16.msra.mxu0 0
  %1082 = vmatpush.bf16.msra.mxu0 0
  %1083 = vmatpush.bf16.msra.mxu0 0
  %1084 = vmatpush.bf16.msra.mxu0 0
  %1085 = vmatpush.bf16.msra.mxu0 0
  %1086 = vmatpush.bf16.msra.mxu0 %v1077
  %1087 = vmatmul.bf16.gmra.mxu0 %v1029
  %v1088 = vpop.f32.mrf.mxu0
  %v1089 = vadd.f32 %v946, %v1088
  %v1090 = vpop.f32.mrf.mxu0
  %v1091 = vadd.f32 %v946, %v1090
  %1092 = vmatmul.bf16.gmra.mxu0 %v1032
  %v1093 = vpop.f32.mrf.mxu0
  %v1094 = vadd.f32 %v946, %v1093
  %v1095 = vpop.f32.mrf.mxu0
  %v1096 = vadd.f32 %v946, %v1095
  %1097 = vmatmul.bf16.gmra.mxu0 %v1035
  %v1098 = vpop.f32.mrf.mxu0
  %v1099 = vadd.f32 %v946, %v1098
  %v1100 = vpop.f32.mrf.mxu0
  %v1101 = vadd.f32 %v946, %v1100
  %1102 = vmatmul.bf16.gmra.mxu0 %v1038
  %v1103 = vpop.f32.mrf.mxu0
  %v1104 = vadd.f32 %v946, %v1103
  %v1105 = vpop.f32.mrf.mxu0
  %v1106 = vadd.f32 %v946, %v1105
  %1107 = vmatmul.bf16.gmra.mxu0 %v1041
  %v1108 = vpop.f32.mrf.mxu0
  %v1109 = vadd.f32 %v946, %v1108
  %v1110 = vpop.f32.mrf.mxu0
  %v1111 = vadd.f32 %v946, %v1110
  %1112 = vmatmul.bf16.gmra.mxu0 %v1044
  %v1113 = vpop.f32.mrf.mxu0
  %v1114 = vadd.f32 %v946, %v1113
  %v1115 = vpop.f32.mrf.mxu0
  %v1116 = vadd.f32 %v946, %v1115
  %1117 = vmatmul.bf16.gmra.mxu0 %v1047
  %v1118 = vpop.f32.mrf.mxu0
  %v1119 = vadd.f32 %v946, %v1118
  %v1120 = vpop.f32.mrf.mxu0
  %v1121 = vadd.f32 %v946, %v1120
  %1122 = vmatmul.bf16.gmra.mxu0 %v1050
  %v1123 = vpop.f32.mrf.mxu0
  %v1124 = vadd.f32 %v946, %v1123
  %v1125 = vpop.f32.mrf.mxu0
  %v1126 = vadd.f32 %v946, %v1125
  %1127 = vmatmul.bf16.gmra.mxu0 %v1053
  %v1128 = vpop.f32.mrf.mxu0
  %v1129 = vadd.f32 %v946, %v1128
  %v1130 = vpop.f32.mrf.mxu0
  %v1131 = vadd.f32 %v946, %v1130
  %1132 = vmatmul.bf16.gmra.mxu0 %v1056
  %v1133 = vpop.f32.mrf.mxu0
  %v1134 = vadd.f32 %v946, %v1133
  %v1135 = vpop.f32.mrf.mxu0
  %v1136 = vadd.f32 %v946, %v1135
  %1137 = vmatmul.bf16.gmra.mxu0 %v1059
  %v1138 = vpop.f32.mrf.mxu0
  %v1139 = vadd.f32 %v946, %v1138
  %v1140 = vpop.f32.mrf.mxu0
  %v1141 = vadd.f32 %v946, %v1140
  %1142 = vmatmul.bf16.gmra.mxu0 %v1062
  %v1143 = vpop.f32.mrf.mxu0
  %v1144 = vadd.f32 %v946, %v1143
  %v1145 = vpop.f32.mrf.mxu0
  %v1146 = vadd.f32 %v946, %v1145
  %1147 = vmatmul.bf16.gmra.mxu0 %v1065
  %v1148 = vpop.f32.mrf.mxu0
  %v1149 = vadd.f32 %v946, %v1148
  %v1150 = vpop.f32.mrf.mxu0
  %v1151 = vadd.f32 %v946, %v1150
  %1152 = vmatmul.bf16.gmra.mxu0 %v1068
  %v1153 = vpop.f32.mrf.mxu0
  %v1154 = vadd.f32 %v946, %v1153
  %v1155 = vpop.f32.mrf.mxu0
  %v1156 = vadd.f32 %v946, %v1155
  %1157 = vmatmul.bf16.gmra.mxu0 %v1071
  %v1158 = vpop.f32.mrf.mxu0
  %v1159 = vadd.f32 %v946, %v1158
  %v1160 = vpop.f32.mrf.mxu0
  %v1161 = vadd.f32 %v946, %v1160
  %1162 = vmatmul.bf16.gmra.mxu0 %v1074
  %v1163 = vpop.f32.mrf.mxu0
  %v1164 = vadd.f32 %v946, %v1163
  %v1165 = vpop.f32.mrf.mxu0
  %v1166 = vadd.f32 %v946, %v1165
  %1167 = vdwg.mxu0
  %v1168 = vmax.f32 %v1089, 0.0
  %v1169 = vmax.f32 %v1091, 0.0
  %v1170 = vmax.f32 %v1094, 0.0
  %v1171 = vmax.f32 %v1096, 0.0
  %v1172 = vmax.f32 %v1099, 0.0
  %v1173 = vmax.f32 %v1101, 0.0
  %v1174 = vmax.f32 %v1104, 0.0
  %v1175 = vmax.f32 %v1106, 0.0
  %v1176 = vmax.f32 %v1109, 0.0
  %v1177 = vmax.f32 %v1111, 0.0
  %v1178 = vmax.f32 %v1114, 0.0
  %v1179 = vmax.f32 %v1116, 0.0
  %v1180 = vmax.f32 %v1119, 0.0
  %v1181 = vmax.f32 %v1121, 0.0
  %v1182 = vmax.f32 %v1124, 0.0
  %v1183 = vmax.f32 %v1126, 0.0
  %v1184 = vmax.f32 %v1129, 0.0
  %v1185 = vmax.f32 %v1131, 0.0
  %v1186 = vmax.f32 %v1134, 0.0
  %v1187 = vmax.f32 %v1136, 0.0
  %v1188 = vmax.f32 %v1139, 0.0
  %v1189 = vmax.f32 %v1141, 0.0
  %v1190 = vmax.f32 %v1144, 0.0
  %v1191 = vmax.f32 %v1146, 0.0
  %v1192 = vmax.f32 %v1149, 0.0
  %v1193 = vmax.f32 %v1151, 0.0
  %v1194 = vmax.f32 %v1154, 0.0
  %v1195 = vmax.f32 %v1156, 0.0
  %v1196 = vmax.f32 %v1159, 0.0
  %v1197 = vmax.f32 %v1161, 0.0
  %v1198 = vmax.f32 %v1164, 0.0
  %v1199 = vmax.f32 %v1166, 0.0
  %v1200 = vpack.c.bf16 %v1169, %v1168
  %v1201 = vpack.c.bf16 %v1171, %v1170
  %v1202 = vpack.c.bf16 %v1173, %v1172
  %v1203 = vpack.c.bf16 %v1175, %v1174
  %v1204 = vpack.c.bf16 %v1177, %v1176
  %v1205 = vpack.c.bf16 %v1179, %v1178
  %v1206 = vpack.c.bf16 %v1181, %v1180
  %v1207 = vpack.c.bf16 %v1183, %v1182
  %v1208 = vpack.c.bf16 %v1185, %v1184
  %v1209 = vpack.c.bf16 %v1187, %v1186
  %v1210 = vpack.c.bf16 %v1189, %v1188
  %v1211 = vpack.c.bf16 %v1191, %v1190
  %v1212 = vpack.c.bf16 %v1193, %v1192
  %v1213 = vpack.c.bf16 %v1195, %v1194
  %v1214 = vpack.c.bf16 %v1197, %v1196
  %v1215 = vpack.c.bf16 %v1199, %v1198
  %v1216 = vld [vmem:[%s3] sm:$0xf]
  %v1217 = vld [vmem:[%s3 + $0x4] sm:$0xf]
  %v1218 = vld [vmem:[%s3 + $0x8] sm:$0xf]
  %v1219 = vld [vmem:[%s3 + $0xc] sm:$0xf]
  %v1220 = vld [vmem:[%s3 + $0x10] sm:$0xf]
  %v1221 = vld [vmem:[%s3 + $0x14] sm:$0xf]
  %v1222 = vld [vmem:[%s3 + $0x18] sm:$0xf]
  %v1223 = vld [vmem:[%s3 + $0x1c] sm:$0xf]
  %v1224 = vld [vmem:[%s3 + $0x20] sm:$0xf]
  %v1225 = vld [vmem:[%s3 + $0x24] sm:$0xf]
  %v1226 = vld [vmem:[%s3 + $0x28] sm:$0xf]
  %v1227 = vld [vmem:[%s3 + $0x2c] sm:$0xf]
  %v1228 = vld [vmem:[%s3 + $0x30] sm:$0xf]
  %v1229 = vld [vmem:[%s3 + $0x34] sm:$0xf]
  %v1230 = vld [vmem:[%s3 + $0x38] sm:$0xf]
  %v1231 = vld [vmem:[%s3 + $0x3c] sm:$0xf]
  %v1232 = vld [vmem:[%s4] sm:$0x1]
  %v1234 = vperm.slane %v1232, 0
  %v1252 = vunpack.c.l.b16 %v1216
  %v1253 = vunpack.c.l.b16 %v1217
  %v1254 = vunpack.c.l.b16 %v1218
  %v1255 = vunpack.c.l.b16 %v1219
  %v1256 = vunpack.c.l.b16 %v1220
  %v1257 = vunpack.c.l.b16 %v1221
  %v1258 = vunpack.c.l.b16 %v1222
  %v1259 = vunpack.c.l.b16 %v1223
  %v1260 = vunpack.c.l.b16 %v1224
  %v1261 = vunpack.c.l.b16 %v1225
  %v1262 = vunpack.c.l.b16 %v1226
  %v1263 = vunpack.c.l.b16 %v1227
  %v1264 = vunpack.c.l.b16 %v1228
  %v1265 = vunpack.c.l.b16 %v1229
  %v1266 = vunpack.c.l.b16 %v1230
  %v1267 = vunpack.c.l.b16 %v1231
  %v1268 = vpack.c.b16 %v1253, %v1252
  %v1269 = vpack.c.b16 %v1255, %v1254
  %v1270 = vpack.c.b16 %v1257, %v1256
  %v1271 = vpack.c.b16 %v1259, %v1258
  %v1272 = vpack.c.b16 %v1261, %v1260
  %v1273 = vpack.c.b16 %v1263, %v1262
  %v1274 = vpack.c.b16 %v1265, %v1264
  %v1275 = vpack.c.b16 %v1267, %v1266
  %1284 = vmatpush.bf16.msra.mxu0 %v1275
  %1285 = vmatpush.bf16.msra.mxu0 %v1274
  %1286 = vmatpush.bf16.msra.mxu0 %v1273
  %1287 = vmatpush.bf16.msra.mxu0 %v1272
  %1288 = vmatpush.bf16.msra.mxu0 %v1271
  %1289 = vmatpush.bf16.msra.mxu0 %v1270
  %1290 = vmatpush.bf16.msra.mxu0 %v1269
  %1291 = vmatpush.bf16.msra.mxu0 %v1268
  %1292 = vmatmul.bf16.gmra.mxu0 %v1200
  %v1293 = vpop.f32.mrf.mxu0
  %v1294 = vadd.f32 %v1234, %v1293
  %v1295 = vpop.f32.mrf.mxu0
  %v1296 = vadd.f32 %v1234, %v1295
  %1297 = vmatmul.bf16.gmra.mxu0 %v1201
  %v1298 = vpop.f32.mrf.mxu0
  %v1299 = vadd.f32 %v1234, %v1298
  %v1300 = vpop.f32.mrf.mxu0
  %v1301 = vadd.f32 %v1234, %v1300
  %1302 = vmatmul.bf16.gmra.mxu0 %v1202
  %v1303 = vpop.f32.mrf.mxu0
  %v1304 = vadd.f32 %v1234, %v1303
  %v1305 = vpop.f32.mrf.mxu0
  %v1306 = vadd.f32 %v1234, %v1305
  %1307 = vmatmul.bf16.gmra.mxu0 %v1203
  %v1308 = vpop.f32.mrf.mxu0
  %v1309 = vadd.f32 %v1234, %v1308
  %v1310 = vpop.f32.mrf.mxu0
  %v1311 = vadd.f32 %v1234, %v1310
  %1312 = vmatmul.bf16.gmra.mxu0 %v1204
  %v1313 = vpop.f32.mrf.mxu0
  %v1314 = vadd.f32 %v1234, %v1313
  %v1315 = vpop.f32.mrf.mxu0
  %v1316 = vadd.f32 %v1234, %v1315
  %1317 = vmatmul.bf16.gmra.mxu0 %v1205
  %v1318 = vpop.f32.mrf.mxu0
  %v1319 = vadd.f32 %v1234, %v1318
  %v1320 = vpop.f32.mrf.mxu0
  %v1321 = vadd.f32 %v1234, %v1320
  %1322 = vmatmul.bf16.gmra.mxu0 %v1206
  %v1323 = vpop.f32.mrf.mxu0
  %v1324 = vadd.f32 %v1234, %v1323
  %v1325 = vpop.f32.mrf.mxu0
  %v1326 = vadd.f32 %v1234, %v1325
  %1327 = vmatmul.bf16.gmra.mxu0 %v1207
  %v1328 = vpop.f32.mrf.mxu0
  %v1329 = vadd.f32 %v1234, %v1328
  %v1330 = vpop.f32.mrf.mxu0
  %v1331 = vadd.f32 %v1234, %v1330
  %1332 = vmatmul.bf16.gmra.mxu0 %v1208
  %v1333 = vpop.f32.mrf.mxu0
  %v1334 = vadd.f32 %v1234, %v1333
  %v1335 = vpop.f32.mrf.mxu0
  %v1336 = vadd.f32 %v1234, %v1335
  %1337 = vmatmul.bf16.gmra.mxu0 %v1209
  %v1338 = vpop.f32.mrf.mxu0
  %v1339 = vadd.f32 %v1234, %v1338
  %v1340 = vpop.f32.mrf.mxu0
  %v1341 = vadd.f32 %v1234, %v1340
  %1342 = vmatmul.bf16.gmra.mxu0 %v1210
  %v1343 = vpop.f32.mrf.mxu0
  %v1344 = vadd.f32 %v1234, %v1343
  %v1345 = vpop.f32.mrf.mxu0
  %v1346 = vadd.f32 %v1234, %v1345
  %1347 = vmatmul.bf16.gmra.mxu0 %v1211
  %v1348 = vpop.f32.mrf.mxu0
  %v1349 = vadd.f32 %v1234, %v1348
  %v1350 = vpop.f32.mrf.mxu0
  %v1351 = vadd.f32 %v1234, %v1350
  %1352 = vmatmul.bf16.gmra.mxu0 %v1212
  %v1353 = vpop.f32.mrf.mxu0
  %v1354 = vadd.f32 %v1234, %v1353
  %v1355 = vpop.f32.mrf.mxu0
  %v1356 = vadd.f32 %v1234, %v1355
  %1357 = vmatmul.bf16.gmra.mxu0 %v1213
  %v1358 = vpop.f32.mrf.mxu0
  %v1359 = vadd.f32 %v1234, %v1358
  %v1360 = vpop.f32.mrf.mxu0
  %v1361 = vadd.f32 %v1234, %v1360
  %1362 = vmatmul.bf16.gmra.mxu0 %v1214
  %v1363 = vpop.f32.mrf.mxu0
  %v1364 = vadd.f32 %v1234, %v1363
  %v1365 = vpop.f32.mrf.mxu0
  %v1366 = vadd.f32 %v1234, %v1365
  %1367 = vmatmul.bf16.gmra.mxu0 %v1215
  %v1368 = vpop.f32.mrf.mxu0
  %v1369 = vadd.f32 %v1234, %v1368
  %v1370 = vpop.f32.mrf.mxu0
  %v1371 = vadd.f32 %v1234, %v1370
  %1372 = vdwg.mxu0
  %v1373 = vmax.f32 %v1294, 0.0
  %v1374 = vmax.f32 %v1296, 0.0
  %v1375 = vmax.f32 %v1299, 0.0
  %v1376 = vmax.f32 %v1301, 0.0
  %v1377 = vmax.f32 %v1304, 0.0
  %v1378 = vmax.f32 %v1306, 0.0
  %v1379 = vmax.f32 %v1309, 0.0
  %v1380 = vmax.f32 %v1311, 0.0
  %v1381 = vmax.f32 %v1314, 0.0
  %v1382 = vmax.f32 %v1316, 0.0
  %v1383 = vmax.f32 %v1319, 0.0
  %v1384 = vmax.f32 %v1321, 0.0
  %v1385 = vmax.f32 %v1324, 0.0
  %v1386 = vmax.f32 %v1326, 0.0
  %v1387 = vmax.f32 %v1329, 0.0
  %v1388 = vmax.f32 %v1331, 0.0
  %v1389 = vmax.f32 %v1334, 0.0
  %v1390 = vmax.f32 %v1336, 0.0
  %v1391 = vmax.f32 %v1339, 0.0
  %v1392 = vmax.f32 %v1341, 0.0
  %v1393 = vmax.f32 %v1344, 0.0
  %v1394 = vmax.f32 %v1346, 0.0
  %v1395 = vmax.f32 %v1349, 0.0
  %v1396 = vmax.f32 %v1351, 0.0
  %v1397 = vmax.f32 %v1354, 0.0
  %v1398 = vmax.f32 %v1356, 0.0
  %v1399 = vmax.f32 %v1359, 0.0
  %v1400 = vmax.f32 %v1361, 0.0
  %v1401 = vmax.f32 %v1364, 0.0
  %v1402 = vmax.f32 %v1366, 0.0
  %v1403 = vmax.f32 %v1369, 0.0
  %v1404 = vmax.f32 %v1371, 0.0
  %v1405 = vpack.c.bf16 %v1374, %v1373
  %v1406 = vpack.c.bf16 %v1376, %v1375
  %v1407 = vpack.c.bf16 %v1378, %v1377
  %v1408 = vpack.c.bf16 %v1380, %v1379
  %v1409 = vpack.c.bf16 %v1382, %v1381
  %v1410 = vpack.c.bf16 %v1384, %v1383
  %v1411 = vpack.c.bf16 %v1386, %v1385
  %v1412 = vpack.c.bf16 %v1388, %v1387
  %v1413 = vpack.c.bf16 %v1390, %v1389
  %v1414 = vpack.c.bf16 %v1392, %v1391
  %v1415 = vpack.c.bf16 %v1394, %v1393
  %v1416 = vpack.c.bf16 %v1396, %v1395
  %v1417 = vpack.c.bf16 %v1398, %v1397
  %v1418 = vpack.c.bf16 %v1400, %v1399
  %v1419 = vpack.c.bf16 %v1402, %v1401
  %v1420 = vpack.c.bf16 %v1404, %v1403
  %v1421 = vld [vmem:[%s533] sm:$0xf]
  %v1422 = vld [vmem:[%s533 + $0x4] sm:$0xf]
  %v1423 = vld [vmem:[%s533 + $0x8] sm:$0xf]
  %v1424 = vld [vmem:[%s533 + $0xc] sm:$0xf]
  %v1425 = vld [vmem:[%s533 + $0x10] sm:$0xf]
  %v1426 = vld [vmem:[%s533 + $0x14] sm:$0xf]
  %v1427 = vld [vmem:[%s533 + $0x18] sm:$0xf]
  %v1428 = vld [vmem:[%s533 + $0x1c] sm:$0xf]
  %v1429 = vld [vmem:[%s533 + $0x20] sm:$0xf]
  %v1430 = vld [vmem:[%s533 + $0x24] sm:$0xf]
  %v1431 = vld [vmem:[%s533 + $0x28] sm:$0xf]
  %v1432 = vld [vmem:[%s533 + $0x2c] sm:$0xf]
  %v1433 = vld [vmem:[%s533 + $0x30] sm:$0xf]
  %v1434 = vld [vmem:[%s533 + $0x34] sm:$0xf]
  %v1435 = vld [vmem:[%s533 + $0x38] sm:$0xf]
  %v1436 = vld [vmem:[%s533 + $0x3c] sm:$0xf]
  %v1437 = vld [vmem:[%s550] sm:$0x1]
  %v1439 = vperm.slane %v1437, 0
  %v1457 = vunpack.c.l.b16 %v1421
  %v1458 = vunpack.c.l.b16 %v1422
  %v1459 = vunpack.c.l.b16 %v1423
  %v1460 = vunpack.c.l.b16 %v1424
  %v1461 = vunpack.c.l.b16 %v1425
  %v1462 = vunpack.c.l.b16 %v1426
  %v1463 = vunpack.c.l.b16 %v1427
  %v1464 = vunpack.c.l.b16 %v1428
  %v1465 = vunpack.c.l.b16 %v1429
  %v1466 = vunpack.c.l.b16 %v1430
  %v1467 = vunpack.c.l.b16 %v1431
  %v1468 = vunpack.c.l.b16 %v1432
  %v1469 = vunpack.c.l.b16 %v1433
  %v1470 = vunpack.c.l.b16 %v1434
  %v1471 = vunpack.c.l.b16 %v1435
  %v1472 = vunpack.c.l.b16 %v1436
  %v1473 = vpack.c.b16 %v1458, %v1457
  %v1474 = vpack.c.b16 %v1460, %v1459
  %v1475 = vpack.c.b16 %v1462, %v1461
  %v1476 = vpack.c.b16 %v1464, %v1463
  %v1477 = vpack.c.b16 %v1466, %v1465
  %v1478 = vpack.c.b16 %v1468, %v1467
  %v1479 = vpack.c.b16 %v1470, %v1469
  %v1480 = vpack.c.b16 %v1472, %v1471
  %1489 = vmatpush.bf16.msra.mxu0 %v1480
  %1490 = vmatpush.bf16.msra.mxu0 %v1479
  %1491 = vmatpush.bf16.msra.mxu0 %v1478
  %1492 = vmatpush.bf16.msra.mxu0 %v1477
  %1493 = vmatpush.bf16.msra.mxu0 %v1476
  %1494 = vmatpush.bf16.msra.mxu0 %v1475
  %1495 = vmatpush.bf16.msra.mxu0 %v1474
  %1496 = vmatpush.bf16.msra.mxu0 %v1473
  %1497 = vmatmul.bf16.gmra.mxu0 %v1405
  %v1498 = vpop.f32.mrf.mxu0
  %v1499 = vadd.f32 %v1439, %v1498
  %v1500 = vpop.f32.mrf.mxu0
  %v1501 = vadd.f32 %v1439, %v1500
  %1502 = vmatmul.bf16.gmra.mxu0 %v1406
  %v1503 = vpop.f32.mrf.mxu0
  %v1504 = vadd.f32 %v1439, %v1503
  %v1505 = vpop.f32.mrf.mxu0
  %v1506 = vadd.f32 %v1439, %v1505
  %1507 = vmatmul.bf16.gmra.mxu0 %v1407
  %v1508 = vpop.f32.mrf.mxu0
  %v1509 = vadd.f32 %v1439, %v1508
  %v1510 = vpop.f32.mrf.mxu0
  %v1511 = vadd.f32 %v1439, %v1510
  %1512 = vmatmul.bf16.gmra.mxu0 %v1408
  %v1513 = vpop.f32.mrf.mxu0
  %v1514 = vadd.f32 %v1439, %v1513
  %v1515 = vpop.f32.mrf.mxu0
  %v1516 = vadd.f32 %v1439, %v1515
  %1517 = vmatmul.bf16.gmra.mxu0 %v1409
  %v1518 = vpop.f32.mrf.mxu0
  %v1519 = vadd.f32 %v1439, %v1518
  %v1520 = vpop.f32.mrf.mxu0
  %v1521 = vadd.f32 %v1439, %v1520
  %1522 = vmatmul.bf16.gmra.mxu0 %v1410
  %v1523 = vpop.f32.mrf.mxu0
  %v1524 = vadd.f32 %v1439, %v1523
  %v1525 = vpop.f32.mrf.mxu0
  %v1526 = vadd.f32 %v1439, %v1525
  %1527 = vmatmul.bf16.gmra.mxu0 %v1411
  %v1528 = vpop.f32.mrf.mxu0
  %v1529 = vadd.f32 %v1439, %v1528
  %v1530 = vpop.f32.mrf.mxu0
  %v1531 = vadd.f32 %v1439, %v1530
  %1532 = vmatmul.bf16.gmra.mxu0 %v1412
  %v1533 = vpop.f32.mrf.mxu0
  %v1534 = vadd.f32 %v1439, %v1533
  %v1535 = vpop.f32.mrf.mxu0
  %v1536 = vadd.f32 %v1439, %v1535
  %1537 = vmatmul.bf16.gmra.mxu0 %v1413
  %v1538 = vpop.f32.mrf.mxu0
  %v1539 = vadd.f32 %v1439, %v1538
  %v1540 = vpop.f32.mrf.mxu0
  %v1541 = vadd.f32 %v1439, %v1540
  %1542 = vmatmul.bf16.gmra.mxu0 %v1414
  %v1543 = vpop.f32.mrf.mxu0
  %v1544 = vadd.f32 %v1439, %v1543
  %v1545 = vpop.f32.mrf.mxu0
  %v1546 = vadd.f32 %v1439, %v1545
  %1547 = vmatmul.bf16.gmra.mxu0 %v1415
  %v1548 = vpop.f32.mrf.mxu0
  %v1549 = vadd.f32 %v1439, %v1548
  %v1550 = vpop.f32.mrf.mxu0
  %v1551 = vadd.f32 %v1439, %v1550
  %1552 = vmatmul.bf16.gmra.mxu0 %v1416
  %v1553 = vpop.f32.mrf.mxu0
  %v1554 = vadd.f32 %v1439, %v1553
  %v1555 = vpop.f32.mrf.mxu0
  %v1556 = vadd.f32 %v1439, %v1555
  %1557 = vmatmul.bf16.gmra.mxu0 %v1417
  %v1558 = vpop.f32.mrf.mxu0
  %v1559 = vadd.f32 %v1439, %v1558
  %v1560 = vpop.f32.mrf.mxu0
  %v1561 = vadd.f32 %v1439, %v1560
  %1562 = vmatmul.bf16.gmra.mxu0 %v1418
  %v1563 = vpop.f32.mrf.mxu0
  %v1564 = vadd.f32 %v1439, %v1563
  %v1565 = vpop.f32.mrf.mxu0
  %v1566 = vadd.f32 %v1439, %v1565
  %1567 = vmatmul.bf16.gmra.mxu0 %v1419
  %v1568 = vpop.f32.mrf.mxu0
  %v1569 = vadd.f32 %v1439, %v1568
  %v1570 = vpop.f32.mrf.mxu0
  %v1571 = vadd.f32 %v1439, %v1570
  %1572 = vmatmul.bf16.gmra.mxu0 %v1420
  %v1573 = vpop.f32.mrf.mxu0
  %v1574 = vadd.f32 %v1439, %v1573
  %v1575 = vpop.f32.mrf.mxu0
  %v1576 = vadd.f32 %v1439, %v1575
  %1577 = vdwg.mxu0
  %v1578 = vmax.f32 %v1499, 0.0
  %v1579 = vmax.f32 %v1501, 0.0
  %v1580 = vmax.f32 %v1504, 0.0
  %v1581 = vmax.f32 %v1506, 0.0
  %v1582 = vmax.f32 %v1509, 0.0
  %v1583 = vmax.f32 %v1511, 0.0
  %v1584 = vmax.f32 %v1514, 0.0
  %v1585 = vmax.f32 %v1516, 0.0
  %v1586 = vmax.f32 %v1519, 0.0
  %v1587 = vmax.f32 %v1521, 0.0
  %v1588 = vmax.f32 %v1524, 0.0
  %v1589 = vmax.f32 %v1526, 0.0
  %v1590 = vmax.f32 %v1529, 0.0
  %v1591 = vmax.f32 %v1531, 0.0
  %v1592 = vmax.f32 %v1534, 0.0
  %v1593 = vmax.f32 %v1536, 0.0
  %v1594 = vmax.f32 %v1539, 0.0
  %v1595 = vmax.f32 %v1541, 0.0
  %v1596 = vmax.f32 %v1544, 0.0
  %v1597 = vmax.f32 %v1546, 0.0
  %v1598 = vmax.f32 %v1549, 0.0
  %v1599 = vmax.f32 %v1551, 0.0
  %v1600 = vmax.f32 %v1554, 0.0
  %v1601 = vmax.f32 %v1556, 0.0
  %v1602 = vmax.f32 %v1559, 0.0
  %v1603 = vmax.f32 %v1561, 0.0
  %v1604 = vmax.f32 %v1564, 0.0
  %v1605 = vmax.f32 %v1566, 0.0
  %v1606 = vmax.f32 %v1569, 0.0
  %v1607 = vmax.f32 %v1571, 0.0
  %v1608 = vmax.f32 %v1574, 0.0
  %v1609 = vmax.f32 %v1576, 0.0
  %v1610 = vmax.f32 %v1578, %v1579
  %v1611 = vrot.slane %v1610, 4
  %v1612 = vmax.f32 %v1610, %v1611
  %v1613 = vrot.slane %v1612, 2
  %v1614 = vmax.f32 %v1612, %v1613
  %v1615 = vrot.slane %v1614, 1
  %v1616 = vmax.f32 %v1614, %v1615
  %v1617 = vmax.f32 %v1580, %v1581
  %v1618 = vrot.slane %v1617, 4
  %v1619 = vmax.f32 %v1617, %v1618
  %v1620 = vrot.slane %v1619, 2
  %v1621 = vmax.f32 %v1619, %v1620
  %v1622 = vrot.slane %v1621, 1
  %v1623 = vmax.f32 %v1621, %v1622
  %v1624 = vmax.f32 %v1582, %v1583
  %v1625 = vrot.slane %v1624, 4
  %v1626 = vmax.f32 %v1624, %v1625
  %v1627 = vrot.slane %v1626, 2
  %v1628 = vmax.f32 %v1626, %v1627
  %v1629 = vrot.slane %v1628, 1
  %v1630 = vmax.f32 %v1628, %v1629
  %v1631 = vmax.f32 %v1584, %v1585
  %v1632 = vrot.slane %v1631, 4
  %v1633 = vmax.f32 %v1631, %v1632
  %v1634 = vrot.slane %v1633, 2
  %v1635 = vmax.f32 %v1633, %v1634
  %v1636 = vrot.slane %v1635, 1
  %v1637 = vmax.f32 %v1635, %v1636
  %v1638 = vmax.f32 %v1586, %v1587
  %v1639 = vrot.slane %v1638, 4
  %v1640 = vmax.f32 %v1638, %v1639
  %v1641 = vrot.slane %v1640, 2
  %v1642 = vmax.f32 %v1640, %v1641
  %v1643 = vrot.slane %v1642, 1
  %v1644 = vmax.f32 %v1642, %v1643
  %v1645 = vmax.f32 %v1588, %v1589
  %v1646 = vrot.slane %v1645, 4
  %v1647 = vmax.f32 %v1645, %v1646
  %v1648 = vrot.slane %v1647, 2
  %v1649 = vmax.f32 %v1647, %v1648
  %v1650 = vrot.slane %v1649, 1
  %v1651 = vmax.f32 %v1649, %v1650
  %v1652 = vmax.f32 %v1590, %v1591
  %v1653 = vrot.slane %v1652, 4
  %v1654 = vmax.f32 %v1652, %v1653
  %v1655 = vrot.slane %v1654, 2
  %v1656 = vmax.f32 %v1654, %v1655
  %v1657 = vrot.slane %v1656, 1
  %v1658 = vmax.f32 %v1656, %v1657
  %v1659 = vmax.f32 %v1592, %v1593
  %v1660 = vrot.slane %v1659, 4
  %v1661 = vmax.f32 %v1659, %v1660
  %v1662 = vrot.slane %v1661, 2
  %v1663 = vmax.f32 %v1661, %v1662
  %v1664 = vrot.slane %v1663, 1
  %v1665 = vmax.f32 %v1663, %v1664
  %v1666 = vmax.f32 %v1594, %v1595
  %v1667 = vrot.slane %v1666, 4
  %v1668 = vmax.f32 %v1666, %v1667
  %v1669 = vrot.slane %v1668, 2
  %v1670 = vmax.f32 %v1668, %v1669
  %v1671 = vrot.slane %v1670, 1
  %v1672 = vmax.f32 %v1670, %v1671
  %v1673 = vmax.f32 %v1596, %v1597
  %v1674 = vrot.slane %v1673, 4
  %v1675 = vmax.f32 %v1673, %v1674
  %v1676 = vrot.slane %v1675, 2
  %v1677 = vmax.f32 %v1675, %v1676
  %v1678 = vrot.slane %v1677, 1
  %v1679 = vmax.f32 %v1677, %v1678
  %v1680 = vmax.f32 %v1598, %v1599
  %v1681 = vrot.slane %v1680, 4
  %v1682 = vmax.f32 %v1680, %v1681
  %v1683 = vrot.slane %v1682, 2
  %v1684 = vmax.f32 %v1682, %v1683
  %v1685 = vrot.slane %v1684, 1
  %v1686 = vmax.f32 %v1684, %v1685
  %v1687 = vmax.f32 %v1600, %v1601
  %v1688 = vrot.slane %v1687, 4
  %v1689 = vmax.f32 %v1687, %v1688
  %v1690 = vrot.slane %v1689, 2
  %v1691 = vmax.f32 %v1689, %v1690
  %v1692 = vrot.slane %v1691, 1
  %v1693 = vmax.f32 %v1691, %v1692
  %v1694 = vmax.f32 %v1602, %v1603
  %v1695 = vrot.slane %v1694, 4
  %v1696 = vmax.f32 %v1694, %v1695
  %v1697 = vrot.slane %v1696, 2
  %v1698 = vmax.f32 %v1696, %v1697
  %v1699 = vrot.slane %v1698, 1
  %v1700 = vmax.f32 %v1698, %v1699
  %v1701 = vmax.f32 %v1604, %v1605
  %v1702 = vrot.slane %v1701, 4
  %v1703 = vmax.f32 %v1701, %v1702
  %v1704 = vrot.slane %v1703, 2
  %v1705 = vmax.f32 %v1703, %v1704
  %v1706 = vrot.slane %v1705, 1
  %v1707 = vmax.f32 %v1705, %v1706
  %v1708 = vmax.f32 %v1606, %v1607
  %v1709 = vrot.slane %v1708, 4
  %v1710 = vmax.f32 %v1708, %v1709
  %v1711 = vrot.slane %v1710, 2
  %v1712 = vmax.f32 %v1710, %v1711
  %v1713 = vrot.slane %v1712, 1
  %v1714 = vmax.f32 %v1712, %v1713
  %v1715 = vmax.f32 %v1608, %v1609
  %v1716 = vrot.slane %v1715, 4
  %v1717 = vmax.f32 %v1715, %v1716
  %v1718 = vrot.slane %v1717, 2
  %v1719 = vmax.f32 %v1717, %v1718
  %v1720 = vrot.slane %v1719, 1
  %v1721 = vmax.f32 %v1719, %v1720
  %v1722 = vpack.c.bf16 %v1616, %v1616
  %v1723 = vpack.c.bf16 %v1623, %v1623
  %v1724 = vpack.c.bf16 %v1630, %v1630
  %v1725 = vpack.c.bf16 %v1637, %v1637
  %v1726 = vpack.c.bf16 %v1644, %v1644
  %v1727 = vpack.c.bf16 %v1651, %v1651
  %v1728 = vpack.c.bf16 %v1658, %v1658
  %v1729 = vpack.c.bf16 %v1665, %v1665
  %v1730 = vpack.c.bf16 %v1672, %v1672
  %v1731 = vpack.c.bf16 %v1679, %v1679
  %v1732 = vpack.c.bf16 %v1686, %v1686
  %v1733 = vpack.c.bf16 %v1693, %v1693
  %v1734 = vpack.c.bf16 %v1700, %v1700
  %v1735 = vpack.c.bf16 %v1707, %v1707
  %v1736 = vpack.c.bf16 %v1714, %v1714
  %v1737 = vpack.c.bf16 %v1721, %v1721
  %v1754 = vunpack.c.l.b16 %v1722
  %v1755 = vunpack.c.l.b16 %v1723
  %v1756 = vunpack.c.l.b16 %v1724
  %v1757 = vunpack.c.l.b16 %v1725
  %v1758 = vunpack.c.l.b16 %v1726
  %v1759 = vunpack.c.l.b16 %v1727
  %v1760 = vunpack.c.l.b16 %v1728
  %v1761 = vunpack.c.l.b16 %v1729
  %v1762 = vunpack.c.l.b16 %v1730
  %v1763 = vunpack.c.l.b16 %v1731
  %v1764 = vunpack.c.l.b16 %v1732
  %v1765 = vunpack.c.l.b16 %v1733
  %v1766 = vunpack.c.l.b16 %v1734
  %v1767 = vunpack.c.l.b16 %v1735
  %v1768 = vunpack.c.l.b16 %v1736
  %v1769 = vunpack.c.l.b16 %v1737
  %v1770 = vsel %vm884, %v1755, %v1754
  %v1771 = vsel %vm886, %v1756, %v1770
  %v1772 = vsel %vm888, %v1757, %v1771
  %v1773 = vsel %vm890, %v1758, %v1772
  %v1774 = vsel %vm892, %v1759, %v1773
  %v1775 = vsel %vm894, %v1760, %v1774
  %v1776 = vsel %vm896, %v1761, %v1775
  %v1777 = vsel %vm884, %v1763, %v1762
  %v1778 = vsel %vm886, %v1764, %v1777
  %v1779 = vsel %vm888, %v1765, %v1778
  %v1780 = vsel %vm890, %v1766, %v1779
  %v1781 = vsel %vm892, %v1767, %v1780
  %v1782 = vsel %vm894, %v1768, %v1781
  %v1783 = vsel %vm896, %v1769, %v1782
  %v1784 = vpack.c.b16 %v1776, %v1776
  %v1785 = vpack.c.b16 %v1783, %v1783
  %1788 = vst [vmem:[%s5 + $0x8] sm:$0xf] %v1784
  %1789 = vst [vmem:[%s5 + $0xc] sm:$0xf] %v1785
  %v1790 = vld [vmem:[%s0 + $0x100] sm:$0xf]
  %v1791 = vld [vmem:[%s0 + $0x104] sm:$0xf]
  %v1792 = vld [vmem:[%s0 + $0x108] sm:$0xf]
  %v1793 = vld [vmem:[%s0 + $0x10c] sm:$0xf]
  %v1794 = vld [vmem:[%s0 + $0x110] sm:$0xf]
  %v1795 = vld [vmem:[%s0 + $0x114] sm:$0xf]
  %v1796 = vld [vmem:[%s0 + $0x118] sm:$0xf]
  %v1797 = vld [vmem:[%s0 + $0x11c] sm:$0xf]
  %v1798 = vld [vmem:[%s0 + $0x120] sm:$0xf]
  %v1799 = vld [vmem:[%s0 + $0x124] sm:$0xf]
  %v1800 = vld [vmem:[%s0 + $0x128] sm:$0xf]
  %v1801 = vld [vmem:[%s0 + $0x12c] sm:$0xf]
  %v1802 = vld [vmem:[%s0 + $0x130] sm:$0xf]
  %v1803 = vld [vmem:[%s0 + $0x134] sm:$0xf]
  %v1804 = vld [vmem:[%s0 + $0x138] sm:$0xf]
  %v1805 = vld [vmem:[%s0 + $0x13c] sm:$0xf]
  %v1806 = vld [vmem:[%s0 + $0x140] sm:$0xf]
  %v1807 = vld [vmem:[%s0 + $0x144] sm:$0xf]
  %v1808 = vld [vmem:[%s0 + $0x148] sm:$0xf]
  %v1809 = vld [vmem:[%s0 + $0x14c] sm:$0xf]
  %v1810 = vld [vmem:[%s0 + $0x150] sm:$0xf]
  %v1811 = vld [vmem:[%s0 + $0x154] sm:$0xf]
  %v1812 = vld [vmem:[%s0 + $0x158] sm:$0xf]
  %v1813 = vld [vmem:[%s0 + $0x15c] sm:$0xf]
  %v1814 = vld [vmem:[%s0 + $0x160] sm:$0xf]
  %v1815 = vld [vmem:[%s0 + $0x164] sm:$0xf]
  %v1816 = vld [vmem:[%s0 + $0x168] sm:$0xf]
  %v1817 = vld [vmem:[%s0 + $0x16c] sm:$0xf]
  %v1818 = vld [vmem:[%s0 + $0x170] sm:$0xf]
  %v1819 = vld [vmem:[%s0 + $0x174] sm:$0xf]
  %v1820 = vld [vmem:[%s0 + $0x178] sm:$0xf]
  %v1821 = vld [vmem:[%s0 + $0x17c] sm:$0xf]
  %v1822 = vld [vmem:[%s1] sm:$0x7]
  %v1823 = vld [vmem:[%s2] sm:$0x1]
  %v1825 = vperm.slane %v1823, 0
  %v1859 = vunpack.c.l.b16 %v1790
  %v1860 = vunpack.c.l.b16 %v1791
  %v1861 = vunpack.c.l.b16 %v1792
  %v1862 = vunpack.c.l.b16 %v1793
  %v1863 = vunpack.c.l.b16 %v1794
  %v1864 = vunpack.c.l.b16 %v1795
  %v1865 = vunpack.c.l.b16 %v1796
  %v1866 = vunpack.c.l.b16 %v1797
  %v1867 = vunpack.c.l.b16 %v1798
  %v1868 = vunpack.c.l.b16 %v1799
  %v1869 = vunpack.c.l.b16 %v1800
  %v1870 = vunpack.c.l.b16 %v1801
  %v1871 = vunpack.c.l.b16 %v1802
  %v1872 = vunpack.c.l.b16 %v1803
  %v1873 = vunpack.c.l.b16 %v1804
  %v1874 = vunpack.c.l.b16 %v1805
  %v1875 = vunpack.c.l.b16 %v1806
  %v1876 = vunpack.c.l.b16 %v1807
  %v1877 = vunpack.c.l.b16 %v1808
  %v1878 = vunpack.c.l.b16 %v1809
  %v1879 = vunpack.c.l.b16 %v1810
  %v1880 = vunpack.c.l.b16 %v1811
  %v1881 = vunpack.c.l.b16 %v1812
  %v1882 = vunpack.c.l.b16 %v1813
  %v1883 = vunpack.c.l.b16 %v1814
  %v1884 = vunpack.c.l.b16 %v1815
  %v1885 = vunpack.c.l.b16 %v1816
  %v1886 = vunpack.c.l.b16 %v1817
  %v1887 = vunpack.c.l.b16 %v1818
  %v1888 = vunpack.c.l.b16 %v1819
  %v1889 = vunpack.c.l.b16 %v1820
  %v1890 = vunpack.c.l.b16 %v1821
  %v1891 = vpack.c.b16 %v1860, %v1859
  %v1892 = vpack.c.b16 %v1862, %v1861
  %v1893 = vpack.c.b16 %v1864, %v1863
  %v1894 = vpack.c.b16 %v1866, %v1865
  %v1895 = vpack.c.b16 %v1868, %v1867
  %v1896 = vpack.c.b16 %v1870, %v1869
  %v1897 = vpack.c.b16 %v1872, %v1871
  %v1898 = vpack.c.b16 %v1874, %v1873
  %v1899 = vpack.c.b16 %v1876, %v1875
  %v1900 = vpack.c.b16 %v1878, %v1877
  %v1901 = vpack.c.b16 %v1880, %v1879
  %v1902 = vpack.c.b16 %v1882, %v1881
  %v1903 = vpack.c.b16 %v1884, %v1883
  %v1904 = vpack.c.b16 %v1886, %v1885
  %v1905 = vpack.c.b16 %v1888, %v1887
  %v1906 = vpack.c.b16 %v1890, %v1889
  %v1908 = vsel %vm138, %v1891, 0
  %v1911 = vsel %vm138, %v1892, 0
  %v1914 = vsel %vm138, %v1893, 0
  %v1917 = vsel %vm138, %v1894, 0
  %v1920 = vsel %vm138, %v1895, 0
  %v1923 = vsel %vm138, %v1896, 0
  %v1926 = vsel %vm138, %v1897, 0
  %v1929 = vsel %vm138, %v1898, 0
  %v1932 = vsel %vm138, %v1899, 0
  %v1935 = vsel %vm138, %v1900, 0
  %v1938 = vsel %vm138, %v1901, 0
  %v1941 = vsel %vm138, %v1902, 0
  %v1944 = vsel %vm138, %v1903, 0
  %v1947 = vsel %vm138, %v1904, 0
  %v1950 = vsel %vm138, %v1905, 0
  %v1953 = vsel %vm138, %v1906, 0
  %v1956 = vsel %vm187, %v1822, 0
  %1958 = vmatpush.bf16.msra.mxu0 0
  %1959 = vmatpush.bf16.msra.mxu0 0
  %1960 = vmatpush.bf16.msra.mxu0 0
  %1961 = vmatpush.bf16.msra.mxu0 0
  %1962 = vmatpush.bf16.msra.mxu0 0
  %1963 = vmatpush.bf16.msra.mxu0 0
  %1964 = vmatpush.bf16.msra.mxu0 0
  %1965 = vmatpush.bf16.msra.mxu0 %v1956
  %1966 = vmatmul.bf16.gmra.mxu0 %v1908
  %v1967 = vpop.f32.mrf.mxu0
  %v1968 = vadd.f32 %v1825, %v1967
  %v1969 = vpop.f32.mrf.mxu0
  %v1970 = vadd.f32 %v1825, %v1969
  %1971 = vmatmul.bf16.gmra.mxu0 %v1911
  %v1972 = vpop.f32.mrf.mxu0
  %v1973 = vadd.f32 %v1825, %v1972
  %v1974 = vpop.f32.mrf.mxu0
  %v1975 = vadd.f32 %v1825, %v1974
  %1976 = vmatmul.bf16.gmra.mxu0 %v1914
  %v1977 = vpop.f32.mrf.mxu0
  %v1978 = vadd.f32 %v1825, %v1977
  %v1979 = vpop.f32.mrf.mxu0
  %v1980 = vadd.f32 %v1825, %v1979
  %1981 = vmatmul.bf16.gmra.mxu0 %v1917
  %v1982 = vpop.f32.mrf.mxu0
  %v1983 = vadd.f32 %v1825, %v1982
  %v1984 = vpop.f32.mrf.mxu0
  %v1985 = vadd.f32 %v1825, %v1984
  %1986 = vmatmul.bf16.gmra.mxu0 %v1920
  %v1987 = vpop.f32.mrf.mxu0
  %v1988 = vadd.f32 %v1825, %v1987
  %v1989 = vpop.f32.mrf.mxu0
  %v1990 = vadd.f32 %v1825, %v1989
  %1991 = vmatmul.bf16.gmra.mxu0 %v1923
  %v1992 = vpop.f32.mrf.mxu0
  %v1993 = vadd.f32 %v1825, %v1992
  %v1994 = vpop.f32.mrf.mxu0
  %v1995 = vadd.f32 %v1825, %v1994
  %1996 = vmatmul.bf16.gmra.mxu0 %v1926
  %v1997 = vpop.f32.mrf.mxu0
  %v1998 = vadd.f32 %v1825, %v1997
  %v1999 = vpop.f32.mrf.mxu0
  %v2000 = vadd.f32 %v1825, %v1999
  %2001 = vmatmul.bf16.gmra.mxu0 %v1929
  %v2002 = vpop.f32.mrf.mxu0
  %v2003 = vadd.f32 %v1825, %v2002
  %v2004 = vpop.f32.mrf.mxu0
  %v2005 = vadd.f32 %v1825, %v2004
  %2006 = vmatmul.bf16.gmra.mxu0 %v1932
  %v2007 = vpop.f32.mrf.mxu0
  %v2008 = vadd.f32 %v1825, %v2007
  %v2009 = vpop.f32.mrf.mxu0
  %v2010 = vadd.f32 %v1825, %v2009
  %2011 = vmatmul.bf16.gmra.mxu0 %v1935
  %v2012 = vpop.f32.mrf.mxu0
  %v2013 = vadd.f32 %v1825, %v2012
  %v2014 = vpop.f32.mrf.mxu0
  %v2015 = vadd.f32 %v1825, %v2014
  %2016 = vmatmul.bf16.gmra.mxu0 %v1938
  %v2017 = vpop.f32.mrf.mxu0
  %v2018 = vadd.f32 %v1825, %v2017
  %v2019 = vpop.f32.mrf.mxu0
  %v2020 = vadd.f32 %v1825, %v2019
  %2021 = vmatmul.bf16.gmra.mxu0 %v1941
  %v2022 = vpop.f32.mrf.mxu0
  %v2023 = vadd.f32 %v1825, %v2022
  %v2024 = vpop.f32.mrf.mxu0
  %v2025 = vadd.f32 %v1825, %v2024
  %2026 = vmatmul.bf16.gmra.mxu0 %v1944
  %v2027 = vpop.f32.mrf.mxu0
  %v2028 = vadd.f32 %v1825, %v2027
  %v2029 = vpop.f32.mrf.mxu0
  %v2030 = vadd.f32 %v1825, %v2029
  %2031 = vmatmul.bf16.gmra.mxu0 %v1947
  %v2032 = vpop.f32.mrf.mxu0
  %v2033 = vadd.f32 %v1825, %v2032
  %v2034 = vpop.f32.mrf.mxu0
  %v2035 = vadd.f32 %v1825, %v2034
  %2036 = vmatmul.bf16.gmra.mxu0 %v1950
  %v2037 = vpop.f32.mrf.mxu0
  %v2038 = vadd.f32 %v1825, %v2037
  %v2039 = vpop.f32.mrf.mxu0
  %v2040 = vadd.f32 %v1825, %v2039
  %2041 = vmatmul.bf16.gmra.mxu0 %v1953
  %v2042 = vpop.f32.mrf.mxu0
  %v2043 = vadd.f32 %v1825, %v2042
  %v2044 = vpop.f32.mrf.mxu0
  %v2045 = vadd.f32 %v1825, %v2044
  %2046 = vdwg.mxu0
  %v2047 = vmax.f32 %v1968, 0.0
  %v2048 = vmax.f32 %v1970, 0.0
  %v2049 = vmax.f32 %v1973, 0.0
  %v2050 = vmax.f32 %v1975, 0.0
  %v2051 = vmax.f32 %v1978, 0.0
  %v2052 = vmax.f32 %v1980, 0.0
  %v2053 = vmax.f32 %v1983, 0.0
  %v2054 = vmax.f32 %v1985, 0.0
  %v2055 = vmax.f32 %v1988, 0.0
  %v2056 = vmax.f32 %v1990, 0.0
  %v2057 = vmax.f32 %v1993, 0.0
  %v2058 = vmax.f32 %v1995, 0.0
  %v2059 = vmax.f32 %v1998, 0.0
  %v2060 = vmax.f32 %v2000, 0.0
  %v2061 = vmax.f32 %v2003, 0.0
  %v2062 = vmax.f32 %v2005, 0.0
  %v2063 = vmax.f32 %v2008, 0.0
  %v2064 = vmax.f32 %v2010, 0.0
  %v2065 = vmax.f32 %v2013, 0.0
  %v2066 = vmax.f32 %v2015, 0.0
  %v2067 = vmax.f32 %v2018, 0.0
  %v2068 = vmax.f32 %v2020, 0.0
  %v2069 = vmax.f32 %v2023, 0.0
  %v2070 = vmax.f32 %v2025, 0.0
  %v2071 = vmax.f32 %v2028, 0.0
  %v2072 = vmax.f32 %v2030, 0.0
  %v2073 = vmax.f32 %v2033, 0.0
  %v2074 = vmax.f32 %v2035, 0.0
  %v2075 = vmax.f32 %v2038, 0.0
  %v2076 = vmax.f32 %v2040, 0.0
  %v2077 = vmax.f32 %v2043, 0.0
  %v2078 = vmax.f32 %v2045, 0.0
  %v2079 = vpack.c.bf16 %v2048, %v2047
  %v2080 = vpack.c.bf16 %v2050, %v2049
  %v2081 = vpack.c.bf16 %v2052, %v2051
  %v2082 = vpack.c.bf16 %v2054, %v2053
  %v2083 = vpack.c.bf16 %v2056, %v2055
  %v2084 = vpack.c.bf16 %v2058, %v2057
  %v2085 = vpack.c.bf16 %v2060, %v2059
  %v2086 = vpack.c.bf16 %v2062, %v2061
  %v2087 = vpack.c.bf16 %v2064, %v2063
  %v2088 = vpack.c.bf16 %v2066, %v2065
  %v2089 = vpack.c.bf16 %v2068, %v2067
  %v2090 = vpack.c.bf16 %v2070, %v2069
  %v2091 = vpack.c.bf16 %v2072, %v2071
  %v2092 = vpack.c.bf16 %v2074, %v2073
  %v2093 = vpack.c.bf16 %v2076, %v2075
  %v2094 = vpack.c.bf16 %v2078, %v2077
  %v2095 = vld [vmem:[%s3] sm:$0xf]
  %v2096 = vld [vmem:[%s3 + $0x4] sm:$0xf]
  %v2097 = vld [vmem:[%s3 + $0x8] sm:$0xf]
  %v2098 = vld [vmem:[%s3 + $0xc] sm:$0xf]
  %v2099 = vld [vmem:[%s3 + $0x10] sm:$0xf]
  %v2100 = vld [vmem:[%s3 + $0x14] sm:$0xf]
  %v2101 = vld [vmem:[%s3 + $0x18] sm:$0xf]
  %v2102 = vld [vmem:[%s3 + $0x1c] sm:$0xf]
  %v2103 = vld [vmem:[%s3 + $0x20] sm:$0xf]
  %v2104 = vld [vmem:[%s3 + $0x24] sm:$0xf]
  %v2105 = vld [vmem:[%s3 + $0x28] sm:$0xf]
  %v2106 = vld [vmem:[%s3 + $0x2c] sm:$0xf]
  %v2107 = vld [vmem:[%s3 + $0x30] sm:$0xf]
  %v2108 = vld [vmem:[%s3 + $0x34] sm:$0xf]
  %v2109 = vld [vmem:[%s3 + $0x38] sm:$0xf]
  %v2110 = vld [vmem:[%s3 + $0x3c] sm:$0xf]
  %v2111 = vld [vmem:[%s4] sm:$0x1]
  %v2113 = vperm.slane %v2111, 0
  %v2131 = vunpack.c.l.b16 %v2095
  %v2132 = vunpack.c.l.b16 %v2096
  %v2133 = vunpack.c.l.b16 %v2097
  %v2134 = vunpack.c.l.b16 %v2098
  %v2135 = vunpack.c.l.b16 %v2099
  %v2136 = vunpack.c.l.b16 %v2100
  %v2137 = vunpack.c.l.b16 %v2101
  %v2138 = vunpack.c.l.b16 %v2102
  %v2139 = vunpack.c.l.b16 %v2103
  %v2140 = vunpack.c.l.b16 %v2104
  %v2141 = vunpack.c.l.b16 %v2105
  %v2142 = vunpack.c.l.b16 %v2106
  %v2143 = vunpack.c.l.b16 %v2107
  %v2144 = vunpack.c.l.b16 %v2108
  %v2145 = vunpack.c.l.b16 %v2109
  %v2146 = vunpack.c.l.b16 %v2110
  %v2147 = vpack.c.b16 %v2132, %v2131
  %v2148 = vpack.c.b16 %v2134, %v2133
  %v2149 = vpack.c.b16 %v2136, %v2135
  %v2150 = vpack.c.b16 %v2138, %v2137
  %v2151 = vpack.c.b16 %v2140, %v2139
  %v2152 = vpack.c.b16 %v2142, %v2141
  %v2153 = vpack.c.b16 %v2144, %v2143
  %v2154 = vpack.c.b16 %v2146, %v2145
  %2163 = vmatpush.bf16.msra.mxu0 %v2154
  %2164 = vmatpush.bf16.msra.mxu0 %v2153
  %2165 = vmatpush.bf16.msra.mxu0 %v2152
  %2166 = vmatpush.bf16.msra.mxu0 %v2151
  %2167 = vmatpush.bf16.msra.mxu0 %v2150
  %2168 = vmatpush.bf16.msra.mxu0 %v2149
  %2169 = vmatpush.bf16.msra.mxu0 %v2148
  %2170 = vmatpush.bf16.msra.mxu0 %v2147
  %2171 = vmatmul.bf16.gmra.mxu0 %v2079
  %v2172 = vpop.f32.mrf.mxu0
  %v2173 = vadd.f32 %v2113, %v2172
  %v2174 = vpop.f32.mrf.mxu0
  %v2175 = vadd.f32 %v2113, %v2174
  %2176 = vmatmul.bf16.gmra.mxu0 %v2080
  %v2177 = vpop.f32.mrf.mxu0
  %v2178 = vadd.f32 %v2113, %v2177
  %v2179 = vpop.f32.mrf.mxu0
  %v2180 = vadd.f32 %v2113, %v2179
  %2181 = vmatmul.bf16.gmra.mxu0 %v2081
  %v2182 = vpop.f32.mrf.mxu0
  %v2183 = vadd.f32 %v2113, %v2182
  %v2184 = vpop.f32.mrf.mxu0
  %v2185 = vadd.f32 %v2113, %v2184
  %2186 = vmatmul.bf16.gmra.mxu0 %v2082
  %v2187 = vpop.f32.mrf.mxu0
  %v2188 = vadd.f32 %v2113, %v2187
  %v2189 = vpop.f32.mrf.mxu0
  %v2190 = vadd.f32 %v2113, %v2189
  %2191 = vmatmul.bf16.gmra.mxu0 %v2083
  %v2192 = vpop.f32.mrf.mxu0
  %v2193 = vadd.f32 %v2113, %v2192
  %v2194 = vpop.f32.mrf.mxu0
  %v2195 = vadd.f32 %v2113, %v2194
  %2196 = vmatmul.bf16.gmra.mxu0 %v2084
  %v2197 = vpop.f32.mrf.mxu0
  %v2198 = vadd.f32 %v2113, %v2197
  %v2199 = vpop.f32.mrf.mxu0
  %v2200 = vadd.f32 %v2113, %v2199
  %2201 = vmatmul.bf16.gmra.mxu0 %v2085
  %v2202 = vpop.f32.mrf.mxu0
  %v2203 = vadd.f32 %v2113, %v2202
  %v2204 = vpop.f32.mrf.mxu0
  %v2205 = vadd.f32 %v2113, %v2204
  %2206 = vmatmul.bf16.gmra.mxu0 %v2086
  %v2207 = vpop.f32.mrf.mxu0
  %v2208 = vadd.f32 %v2113, %v2207
  %v2209 = vpop.f32.mrf.mxu0
  %v2210 = vadd.f32 %v2113, %v2209
  %2211 = vmatmul.bf16.gmra.mxu0 %v2087
  %v2212 = vpop.f32.mrf.mxu0
  %v2213 = vadd.f32 %v2113, %v2212
  %v2214 = vpop.f32.mrf.mxu0
  %v2215 = vadd.f32 %v2113, %v2214
  %2216 = vmatmul.bf16.gmra.mxu0 %v2088
  %v2217 = vpop.f32.mrf.mxu0
  %v2218 = vadd.f32 %v2113, %v2217
  %v2219 = vpop.f32.mrf.mxu0
  %v2220 = vadd.f32 %v2113, %v2219
  %2221 = vmatmul.bf16.gmra.mxu0 %v2089
  %v2222 = vpop.f32.mrf.mxu0
  %v2223 = vadd.f32 %v2113, %v2222
  %v2224 = vpop.f32.mrf.mxu0
  %v2225 = vadd.f32 %v2113, %v2224
  %2226 = vmatmul.bf16.gmra.mxu0 %v2090
  %v2227 = vpop.f32.mrf.mxu0
  %v2228 = vadd.f32 %v2113, %v2227
  %v2229 = vpop.f32.mrf.mxu0
  %v2230 = vadd.f32 %v2113, %v2229
  %2231 = vmatmul.bf16.gmra.mxu0 %v2091
  %v2232 = vpop.f32.mrf.mxu0
  %v2233 = vadd.f32 %v2113, %v2232
  %v2234 = vpop.f32.mrf.mxu0
  %v2235 = vadd.f32 %v2113, %v2234
  %2236 = vmatmul.bf16.gmra.mxu0 %v2092
  %v2237 = vpop.f32.mrf.mxu0
  %v2238 = vadd.f32 %v2113, %v2237
  %v2239 = vpop.f32.mrf.mxu0
  %v2240 = vadd.f32 %v2113, %v2239
  %2241 = vmatmul.bf16.gmra.mxu0 %v2093
  %v2242 = vpop.f32.mrf.mxu0
  %v2243 = vadd.f32 %v2113, %v2242
  %v2244 = vpop.f32.mrf.mxu0
  %v2245 = vadd.f32 %v2113, %v2244
  %2246 = vmatmul.bf16.gmra.mxu0 %v2094
  %v2247 = vpop.f32.mrf.mxu0
  %v2248 = vadd.f32 %v2113, %v2247
  %v2249 = vpop.f32.mrf.mxu0
  %v2250 = vadd.f32 %v2113, %v2249
  %2251 = vdwg.mxu0
  %v2252 = vmax.f32 %v2173, 0.0
  %v2253 = vmax.f32 %v2175, 0.0
  %v2254 = vmax.f32 %v2178, 0.0
  %v2255 = vmax.f32 %v2180, 0.0
  %v2256 = vmax.f32 %v2183, 0.0
  %v2257 = vmax.f32 %v2185, 0.0
  %v2258 = vmax.f32 %v2188, 0.0
  %v2259 = vmax.f32 %v2190, 0.0
  %v2260 = vmax.f32 %v2193, 0.0
  %v2261 = vmax.f32 %v2195, 0.0
  %v2262 = vmax.f32 %v2198, 0.0
  %v2263 = vmax.f32 %v2200, 0.0
  %v2264 = vmax.f32 %v2203, 0.0
  %v2265 = vmax.f32 %v2205, 0.0
  %v2266 = vmax.f32 %v2208, 0.0
  %v2267 = vmax.f32 %v2210, 0.0
  %v2268 = vmax.f32 %v2213, 0.0
  %v2269 = vmax.f32 %v2215, 0.0
  %v2270 = vmax.f32 %v2218, 0.0
  %v2271 = vmax.f32 %v2220, 0.0
  %v2272 = vmax.f32 %v2223, 0.0
  %v2273 = vmax.f32 %v2225, 0.0
  %v2274 = vmax.f32 %v2228, 0.0
  %v2275 = vmax.f32 %v2230, 0.0
  %v2276 = vmax.f32 %v2233, 0.0
  %v2277 = vmax.f32 %v2235, 0.0
  %v2278 = vmax.f32 %v2238, 0.0
  %v2279 = vmax.f32 %v2240, 0.0
  %v2280 = vmax.f32 %v2243, 0.0
  %v2281 = vmax.f32 %v2245, 0.0
  %v2282 = vmax.f32 %v2248, 0.0
  %v2283 = vmax.f32 %v2250, 0.0
  %v2284 = vpack.c.bf16 %v2253, %v2252
  %v2285 = vpack.c.bf16 %v2255, %v2254
  %v2286 = vpack.c.bf16 %v2257, %v2256
  %v2287 = vpack.c.bf16 %v2259, %v2258
  %v2288 = vpack.c.bf16 %v2261, %v2260
  %v2289 = vpack.c.bf16 %v2263, %v2262
  %v2290 = vpack.c.bf16 %v2265, %v2264
  %v2291 = vpack.c.bf16 %v2267, %v2266
  %v2292 = vpack.c.bf16 %v2269, %v2268
  %v2293 = vpack.c.bf16 %v2271, %v2270
  %v2294 = vpack.c.bf16 %v2273, %v2272
  %v2295 = vpack.c.bf16 %v2275, %v2274
  %v2296 = vpack.c.bf16 %v2277, %v2276
  %v2297 = vpack.c.bf16 %v2279, %v2278
  %v2298 = vpack.c.bf16 %v2281, %v2280
  %v2299 = vpack.c.bf16 %v2283, %v2282
  %v2300 = vld [vmem:[%s533] sm:$0xf]
  %v2301 = vld [vmem:[%s533 + $0x4] sm:$0xf]
  %v2302 = vld [vmem:[%s533 + $0x8] sm:$0xf]
  %v2303 = vld [vmem:[%s533 + $0xc] sm:$0xf]
  %v2304 = vld [vmem:[%s533 + $0x10] sm:$0xf]
  %v2305 = vld [vmem:[%s533 + $0x14] sm:$0xf]
  %v2306 = vld [vmem:[%s533 + $0x18] sm:$0xf]
  %v2307 = vld [vmem:[%s533 + $0x1c] sm:$0xf]
  %v2308 = vld [vmem:[%s533 + $0x20] sm:$0xf]
  %v2309 = vld [vmem:[%s533 + $0x24] sm:$0xf]
  %v2310 = vld [vmem:[%s533 + $0x28] sm:$0xf]
  %v2311 = vld [vmem:[%s533 + $0x2c] sm:$0xf]
  %v2312 = vld [vmem:[%s533 + $0x30] sm:$0xf]
  %v2313 = vld [vmem:[%s533 + $0x34] sm:$0xf]
  %v2314 = vld [vmem:[%s533 + $0x38] sm:$0xf]
  %v2315 = vld [vmem:[%s533 + $0x3c] sm:$0xf]
  %v2316 = vld [vmem:[%s550] sm:$0x1]
  %v2318 = vperm.slane %v2316, 0
  %v2336 = vunpack.c.l.b16 %v2300
  %v2337 = vunpack.c.l.b16 %v2301
  %v2338 = vunpack.c.l.b16 %v2302
  %v2339 = vunpack.c.l.b16 %v2303
  %v2340 = vunpack.c.l.b16 %v2304
  %v2341 = vunpack.c.l.b16 %v2305
  %v2342 = vunpack.c.l.b16 %v2306
  %v2343 = vunpack.c.l.b16 %v2307
  %v2344 = vunpack.c.l.b16 %v2308
  %v2345 = vunpack.c.l.b16 %v2309
  %v2346 = vunpack.c.l.b16 %v2310
  %v2347 = vunpack.c.l.b16 %v2311
  %v2348 = vunpack.c.l.b16 %v2312
  %v2349 = vunpack.c.l.b16 %v2313
  %v2350 = vunpack.c.l.b16 %v2314
  %v2351 = vunpack.c.l.b16 %v2315
  %v2352 = vpack.c.b16 %v2337, %v2336
  %v2353 = vpack.c.b16 %v2339, %v2338
  %v2354 = vpack.c.b16 %v2341, %v2340
  %v2355 = vpack.c.b16 %v2343, %v2342
  %v2356 = vpack.c.b16 %v2345, %v2344
  %v2357 = vpack.c.b16 %v2347, %v2346
  %v2358 = vpack.c.b16 %v2349, %v2348
  %v2359 = vpack.c.b16 %v2351, %v2350
  %2368 = vmatpush.bf16.msra.mxu0 %v2359
  %2369 = vmatpush.bf16.msra.mxu0 %v2358
  %2370 = vmatpush.bf16.msra.mxu0 %v2357
  %2371 = vmatpush.bf16.msra.mxu0 %v2356
  %2372 = vmatpush.bf16.msra.mxu0 %v2355
  %2373 = vmatpush.bf16.msra.mxu0 %v2354
  %2374 = vmatpush.bf16.msra.mxu0 %v2353
  %2375 = vmatpush.bf16.msra.mxu0 %v2352
  %2376 = vmatmul.bf16.gmra.mxu0 %v2284
  %v2377 = vpop.f32.mrf.mxu0
  %v2378 = vadd.f32 %v2318, %v2377
  %v2379 = vpop.f32.mrf.mxu0
  %v2380 = vadd.f32 %v2318, %v2379
  %2381 = vmatmul.bf16.gmra.mxu0 %v2285
  %v2382 = vpop.f32.mrf.mxu0
  %v2383 = vadd.f32 %v2318, %v2382
  %v2384 = vpop.f32.mrf.mxu0
  %v2385 = vadd.f32 %v2318, %v2384
  %2386 = vmatmul.bf16.gmra.mxu0 %v2286
  %v2387 = vpop.f32.mrf.mxu0
  %v2388 = vadd.f32 %v2318, %v2387
  %v2389 = vpop.f32.mrf.mxu0
  %v2390 = vadd.f32 %v2318, %v2389
  %2391 = vmatmul.bf16.gmra.mxu0 %v2287
  %v2392 = vpop.f32.mrf.mxu0
  %v2393 = vadd.f32 %v2318, %v2392
  %v2394 = vpop.f32.mrf.mxu0
  %v2395 = vadd.f32 %v2318, %v2394
  %2396 = vmatmul.bf16.gmra.mxu0 %v2288
  %v2397 = vpop.f32.mrf.mxu0
  %v2398 = vadd.f32 %v2318, %v2397
  %v2399 = vpop.f32.mrf.mxu0
  %v2400 = vadd.f32 %v2318, %v2399
  %2401 = vmatmul.bf16.gmra.mxu0 %v2289
  %v2402 = vpop.f32.mrf.mxu0
  %v2403 = vadd.f32 %v2318, %v2402
  %v2404 = vpop.f32.mrf.mxu0
  %v2405 = vadd.f32 %v2318, %v2404
  %2406 = vmatmul.bf16.gmra.mxu0 %v2290
  %v2407 = vpop.f32.mrf.mxu0
  %v2408 = vadd.f32 %v2318, %v2407
  %v2409 = vpop.f32.mrf.mxu0
  %v2410 = vadd.f32 %v2318, %v2409
  %2411 = vmatmul.bf16.gmra.mxu0 %v2291
  %v2412 = vpop.f32.mrf.mxu0
  %v2413 = vadd.f32 %v2318, %v2412
  %v2414 = vpop.f32.mrf.mxu0
  %v2415 = vadd.f32 %v2318, %v2414
  %2416 = vmatmul.bf16.gmra.mxu0 %v2292
  %v2417 = vpop.f32.mrf.mxu0
  %v2418 = vadd.f32 %v2318, %v2417
  %v2419 = vpop.f32.mrf.mxu0
  %v2420 = vadd.f32 %v2318, %v2419
  %2421 = vmatmul.bf16.gmra.mxu0 %v2293
  %v2422 = vpop.f32.mrf.mxu0
  %v2423 = vadd.f32 %v2318, %v2422
  %v2424 = vpop.f32.mrf.mxu0
  %v2425 = vadd.f32 %v2318, %v2424
  %2426 = vmatmul.bf16.gmra.mxu0 %v2294
  %v2427 = vpop.f32.mrf.mxu0
  %v2428 = vadd.f32 %v2318, %v2427
  %v2429 = vpop.f32.mrf.mxu0
  %v2430 = vadd.f32 %v2318, %v2429
  %2431 = vmatmul.bf16.gmra.mxu0 %v2295
  %v2432 = vpop.f32.mrf.mxu0
  %v2433 = vadd.f32 %v2318, %v2432
  %v2434 = vpop.f32.mrf.mxu0
  %v2435 = vadd.f32 %v2318, %v2434
  %2436 = vmatmul.bf16.gmra.mxu0 %v2296
  %v2437 = vpop.f32.mrf.mxu0
  %v2438 = vadd.f32 %v2318, %v2437
  %v2439 = vpop.f32.mrf.mxu0
  %v2440 = vadd.f32 %v2318, %v2439
  %2441 = vmatmul.bf16.gmra.mxu0 %v2297
  %v2442 = vpop.f32.mrf.mxu0
  %v2443 = vadd.f32 %v2318, %v2442
  %v2444 = vpop.f32.mrf.mxu0
  %v2445 = vadd.f32 %v2318, %v2444
  %2446 = vmatmul.bf16.gmra.mxu0 %v2298
  %v2447 = vpop.f32.mrf.mxu0
  %v2448 = vadd.f32 %v2318, %v2447
  %v2449 = vpop.f32.mrf.mxu0
  %v2450 = vadd.f32 %v2318, %v2449
  %2451 = vmatmul.bf16.gmra.mxu0 %v2299
  %v2452 = vpop.f32.mrf.mxu0
  %v2453 = vadd.f32 %v2318, %v2452
  %v2454 = vpop.f32.mrf.mxu0
  %v2455 = vadd.f32 %v2318, %v2454
  %2456 = vdwg.mxu0
  %v2457 = vmax.f32 %v2378, 0.0
  %v2458 = vmax.f32 %v2380, 0.0
  %v2459 = vmax.f32 %v2383, 0.0
  %v2460 = vmax.f32 %v2385, 0.0
  %v2461 = vmax.f32 %v2388, 0.0
  %v2462 = vmax.f32 %v2390, 0.0
  %v2463 = vmax.f32 %v2393, 0.0
  %v2464 = vmax.f32 %v2395, 0.0
  %v2465 = vmax.f32 %v2398, 0.0
  %v2466 = vmax.f32 %v2400, 0.0
  %v2467 = vmax.f32 %v2403, 0.0
  %v2468 = vmax.f32 %v2405, 0.0
  %v2469 = vmax.f32 %v2408, 0.0
  %v2470 = vmax.f32 %v2410, 0.0
  %v2471 = vmax.f32 %v2413, 0.0
  %v2472 = vmax.f32 %v2415, 0.0
  %v2473 = vmax.f32 %v2418, 0.0
  %v2474 = vmax.f32 %v2420, 0.0
  %v2475 = vmax.f32 %v2423, 0.0
  %v2476 = vmax.f32 %v2425, 0.0
  %v2477 = vmax.f32 %v2428, 0.0
  %v2478 = vmax.f32 %v2430, 0.0
  %v2479 = vmax.f32 %v2433, 0.0
  %v2480 = vmax.f32 %v2435, 0.0
  %v2481 = vmax.f32 %v2438, 0.0
  %v2482 = vmax.f32 %v2440, 0.0
  %v2483 = vmax.f32 %v2443, 0.0
  %v2484 = vmax.f32 %v2445, 0.0
  %v2485 = vmax.f32 %v2448, 0.0
  %v2486 = vmax.f32 %v2450, 0.0
  %v2487 = vmax.f32 %v2453, 0.0
  %v2488 = vmax.f32 %v2455, 0.0
  %v2489 = vmax.f32 %v2457, %v2458
  %v2490 = vrot.slane %v2489, 4
  %v2491 = vmax.f32 %v2489, %v2490
  %v2492 = vrot.slane %v2491, 2
  %v2493 = vmax.f32 %v2491, %v2492
  %v2494 = vrot.slane %v2493, 1
  %v2495 = vmax.f32 %v2493, %v2494
  %v2496 = vmax.f32 %v2459, %v2460
  %v2497 = vrot.slane %v2496, 4
  %v2498 = vmax.f32 %v2496, %v2497
  %v2499 = vrot.slane %v2498, 2
  %v2500 = vmax.f32 %v2498, %v2499
  %v2501 = vrot.slane %v2500, 1
  %v2502 = vmax.f32 %v2500, %v2501
  %v2503 = vmax.f32 %v2461, %v2462
  %v2504 = vrot.slane %v2503, 4
  %v2505 = vmax.f32 %v2503, %v2504
  %v2506 = vrot.slane %v2505, 2
  %v2507 = vmax.f32 %v2505, %v2506
  %v2508 = vrot.slane %v2507, 1
  %v2509 = vmax.f32 %v2507, %v2508
  %v2510 = vmax.f32 %v2463, %v2464
  %v2511 = vrot.slane %v2510, 4
  %v2512 = vmax.f32 %v2510, %v2511
  %v2513 = vrot.slane %v2512, 2
  %v2514 = vmax.f32 %v2512, %v2513
  %v2515 = vrot.slane %v2514, 1
  %v2516 = vmax.f32 %v2514, %v2515
  %v2517 = vmax.f32 %v2465, %v2466
  %v2518 = vrot.slane %v2517, 4
  %v2519 = vmax.f32 %v2517, %v2518
  %v2520 = vrot.slane %v2519, 2
  %v2521 = vmax.f32 %v2519, %v2520
  %v2522 = vrot.slane %v2521, 1
  %v2523 = vmax.f32 %v2521, %v2522
  %v2524 = vmax.f32 %v2467, %v2468
  %v2525 = vrot.slane %v2524, 4
  %v2526 = vmax.f32 %v2524, %v2525
  %v2527 = vrot.slane %v2526, 2
  %v2528 = vmax.f32 %v2526, %v2527
  %v2529 = vrot.slane %v2528, 1
  %v2530 = vmax.f32 %v2528, %v2529
  %v2531 = vmax.f32 %v2469, %v2470
  %v2532 = vrot.slane %v2531, 4
  %v2533 = vmax.f32 %v2531, %v2532
  %v2534 = vrot.slane %v2533, 2
  %v2535 = vmax.f32 %v2533, %v2534
  %v2536 = vrot.slane %v2535, 1
  %v2537 = vmax.f32 %v2535, %v2536
  %v2538 = vmax.f32 %v2471, %v2472
  %v2539 = vrot.slane %v2538, 4
  %v2540 = vmax.f32 %v2538, %v2539
  %v2541 = vrot.slane %v2540, 2
  %v2542 = vmax.f32 %v2540, %v2541
  %v2543 = vrot.slane %v2542, 1
  %v2544 = vmax.f32 %v2542, %v2543
  %v2545 = vmax.f32 %v2473, %v2474
  %v2546 = vrot.slane %v2545, 4
  %v2547 = vmax.f32 %v2545, %v2546
  %v2548 = vrot.slane %v2547, 2
  %v2549 = vmax.f32 %v2547, %v2548
  %v2550 = vrot.slane %v2549, 1
  %v2551 = vmax.f32 %v2549, %v2550
  %v2552 = vmax.f32 %v2475, %v2476
  %v2553 = vrot.slane %v2552, 4
  %v2554 = vmax.f32 %v2552, %v2553
  %v2555 = vrot.slane %v2554, 2
  %v2556 = vmax.f32 %v2554, %v2555
  %v2557 = vrot.slane %v2556, 1
  %v2558 = vmax.f32 %v2556, %v2557
  %v2559 = vmax.f32 %v2477, %v2478
  %v2560 = vrot.slane %v2559, 4
  %v2561 = vmax.f32 %v2559, %v2560
  %v2562 = vrot.slane %v2561, 2
  %v2563 = vmax.f32 %v2561, %v2562
  %v2564 = vrot.slane %v2563, 1
  %v2565 = vmax.f32 %v2563, %v2564
  %v2566 = vmax.f32 %v2479, %v2480
  %v2567 = vrot.slane %v2566, 4
  %v2568 = vmax.f32 %v2566, %v2567
  %v2569 = vrot.slane %v2568, 2
  %v2570 = vmax.f32 %v2568, %v2569
  %v2571 = vrot.slane %v2570, 1
  %v2572 = vmax.f32 %v2570, %v2571
  %v2573 = vmax.f32 %v2481, %v2482
  %v2574 = vrot.slane %v2573, 4
  %v2575 = vmax.f32 %v2573, %v2574
  %v2576 = vrot.slane %v2575, 2
  %v2577 = vmax.f32 %v2575, %v2576
  %v2578 = vrot.slane %v2577, 1
  %v2579 = vmax.f32 %v2577, %v2578
  %v2580 = vmax.f32 %v2483, %v2484
  %v2581 = vrot.slane %v2580, 4
  %v2582 = vmax.f32 %v2580, %v2581
  %v2583 = vrot.slane %v2582, 2
  %v2584 = vmax.f32 %v2582, %v2583
  %v2585 = vrot.slane %v2584, 1
  %v2586 = vmax.f32 %v2584, %v2585
  %v2587 = vmax.f32 %v2485, %v2486
  %v2588 = vrot.slane %v2587, 4
  %v2589 = vmax.f32 %v2587, %v2588
  %v2590 = vrot.slane %v2589, 2
  %v2591 = vmax.f32 %v2589, %v2590
  %v2592 = vrot.slane %v2591, 1
  %v2593 = vmax.f32 %v2591, %v2592
  %v2594 = vmax.f32 %v2487, %v2488
  %v2595 = vrot.slane %v2594, 4
  %v2596 = vmax.f32 %v2594, %v2595
  %v2597 = vrot.slane %v2596, 2
  %v2598 = vmax.f32 %v2596, %v2597
  %v2599 = vrot.slane %v2598, 1
  %v2600 = vmax.f32 %v2598, %v2599
  %v2601 = vpack.c.bf16 %v2495, %v2495
  %v2602 = vpack.c.bf16 %v2502, %v2502
  %v2603 = vpack.c.bf16 %v2509, %v2509
  %v2604 = vpack.c.bf16 %v2516, %v2516
  %v2605 = vpack.c.bf16 %v2523, %v2523
  %v2606 = vpack.c.bf16 %v2530, %v2530
  %v2607 = vpack.c.bf16 %v2537, %v2537
  %v2608 = vpack.c.bf16 %v2544, %v2544
  %v2609 = vpack.c.bf16 %v2551, %v2551
  %v2610 = vpack.c.bf16 %v2558, %v2558
  %v2611 = vpack.c.bf16 %v2565, %v2565
  %v2612 = vpack.c.bf16 %v2572, %v2572
  %v2613 = vpack.c.bf16 %v2579, %v2579
  %v2614 = vpack.c.bf16 %v2586, %v2586
  %v2615 = vpack.c.bf16 %v2593, %v2593
  %v2616 = vpack.c.bf16 %v2600, %v2600
  %v2633 = vunpack.c.l.b16 %v2601
  %v2634 = vunpack.c.l.b16 %v2602
  %v2635 = vunpack.c.l.b16 %v2603
  %v2636 = vunpack.c.l.b16 %v2604
  %v2637 = vunpack.c.l.b16 %v2605
  %v2638 = vunpack.c.l.b16 %v2606
  %v2639 = vunpack.c.l.b16 %v2607
  %v2640 = vunpack.c.l.b16 %v2608
  %v2641 = vunpack.c.l.b16 %v2609
  %v2642 = vunpack.c.l.b16 %v2610
  %v2643 = vunpack.c.l.b16 %v2611
  %v2644 = vunpack.c.l.b16 %v2612
  %v2645 = vunpack.c.l.b16 %v2613
  %v2646 = vunpack.c.l.b16 %v2614
  %v2647 = vunpack.c.l.b16 %v2615
  %v2648 = vunpack.c.l.b16 %v2616
  %v2649 = vsel %vm884, %v2634, %v2633
  %v2650 = vsel %vm886, %v2635, %v2649
  %v2651 = vsel %vm888, %v2636, %v2650
  %v2652 = vsel %vm890, %v2637, %v2651
  %v2653 = vsel %vm892, %v2638, %v2652
  %v2654 = vsel %vm894, %v2639, %v2653
  %v2655 = vsel %vm896, %v2640, %v2654
  %v2656 = vsel %vm884, %v2642, %v2641
  %v2657 = vsel %vm886, %v2643, %v2656
  %v2658 = vsel %vm888, %v2644, %v2657
  %v2659 = vsel %vm890, %v2645, %v2658
  %v2660 = vsel %vm892, %v2646, %v2659
  %v2661 = vsel %vm894, %v2647, %v2660
  %v2662 = vsel %vm896, %v2648, %v2661
  %v2663 = vpack.c.b16 %v2655, %v2655
  %v2664 = vpack.c.b16 %v2662, %v2662
  %2667 = vst [vmem:[%s5 + $0x10] sm:$0xf] %v2663
  %2668 = vst [vmem:[%s5 + $0x14] sm:$0xf] %v2664
  %v2669 = vld [vmem:[%s0 + $0x180] sm:$0xf]
  %v2670 = vld [vmem:[%s0 + $0x184] sm:$0xf]
  %v2671 = vld [vmem:[%s0 + $0x188] sm:$0xf]
  %v2672 = vld [vmem:[%s0 + $0x18c] sm:$0xf]
  %v2673 = vld [vmem:[%s0 + $0x190] sm:$0xf]
  %v2674 = vld [vmem:[%s0 + $0x194] sm:$0xf]
  %v2675 = vld [vmem:[%s0 + $0x198] sm:$0xf]
  %v2676 = vld [vmem:[%s0 + $0x19c] sm:$0xf]
  %v2677 = vld [vmem:[%s0 + $0x1a0] sm:$0xf]
  %v2678 = vld [vmem:[%s0 + $0x1a4] sm:$0xf]
  %v2679 = vld [vmem:[%s0 + $0x1a8] sm:$0xf]
  %v2680 = vld [vmem:[%s0 + $0x1ac] sm:$0xf]
  %v2681 = vld [vmem:[%s0 + $0x1b0] sm:$0xf]
  %v2682 = vld [vmem:[%s0 + $0x1b4] sm:$0xf]
  %v2683 = vld [vmem:[%s0 + $0x1b8] sm:$0xf]
  %v2684 = vld [vmem:[%s0 + $0x1bc] sm:$0xf]
  %v2685 = vld [vmem:[%s0 + $0x1c0] sm:$0xf]
  %v2686 = vld [vmem:[%s0 + $0x1c4] sm:$0xf]
  %v2687 = vld [vmem:[%s0 + $0x1c8] sm:$0xf]
  %v2688 = vld [vmem:[%s0 + $0x1cc] sm:$0xf]
  %v2689 = vld [vmem:[%s0 + $0x1d0] sm:$0xf]
  %v2690 = vld [vmem:[%s0 + $0x1d4] sm:$0xf]
  %v2691 = vld [vmem:[%s0 + $0x1d8] sm:$0xf]
  %v2692 = vld [vmem:[%s0 + $0x1dc] sm:$0xf]
  %v2693 = vld [vmem:[%s0 + $0x1e0] sm:$0xf]
  %v2694 = vld [vmem:[%s0 + $0x1e4] sm:$0xf]
  %v2695 = vld [vmem:[%s0 + $0x1e8] sm:$0xf]
  %v2696 = vld [vmem:[%s0 + $0x1ec] sm:$0xf]
  %v2697 = vld [vmem:[%s0 + $0x1f0] sm:$0xf]
  %v2698 = vld [vmem:[%s0 + $0x1f4] sm:$0xf]
  %v2699 = vld [vmem:[%s0 + $0x1f8] sm:$0xf]
  %v2700 = vld [vmem:[%s0 + $0x1fc] sm:$0xf]
  %v2701 = vld [vmem:[%s1] sm:$0x7]
  %v2702 = vld [vmem:[%s2] sm:$0x1]
  %v2704 = vperm.slane %v2702, 0
  %v2738 = vunpack.c.l.b16 %v2669
  %v2739 = vunpack.c.l.b16 %v2670
  %v2740 = vunpack.c.l.b16 %v2671
  %v2741 = vunpack.c.l.b16 %v2672
  %v2742 = vunpack.c.l.b16 %v2673
  %v2743 = vunpack.c.l.b16 %v2674
  %v2744 = vunpack.c.l.b16 %v2675
  %v2745 = vunpack.c.l.b16 %v2676
  %v2746 = vunpack.c.l.b16 %v2677
  %v2747 = vunpack.c.l.b16 %v2678
  %v2748 = vunpack.c.l.b16 %v2679
  %v2749 = vunpack.c.l.b16 %v2680
  %v2750 = vunpack.c.l.b16 %v2681
  %v2751 = vunpack.c.l.b16 %v2682
  %v2752 = vunpack.c.l.b16 %v2683
  %v2753 = vunpack.c.l.b16 %v2684
  %v2754 = vunpack.c.l.b16 %v2685
  %v2755 = vunpack.c.l.b16 %v2686
  %v2756 = vunpack.c.l.b16 %v2687
  %v2757 = vunpack.c.l.b16 %v2688
  %v2758 = vunpack.c.l.b16 %v2689
  %v2759 = vunpack.c.l.b16 %v2690
  %v2760 = vunpack.c.l.b16 %v2691
  %v2761 = vunpack.c.l.b16 %v2692
  %v2762 = vunpack.c.l.b16 %v2693
  %v2763 = vunpack.c.l.b16 %v2694
  %v2764 = vunpack.c.l.b16 %v2695
  %v2765 = vunpack.c.l.b16 %v2696
  %v2766 = vunpack.c.l.b16 %v2697
  %v2767 = vunpack.c.l.b16 %v2698
  %v2768 = vunpack.c.l.b16 %v2699
  %v2769 = vunpack.c.l.b16 %v2700
  %v2770 = vpack.c.b16 %v2739, %v2738
  %v2771 = vpack.c.b16 %v2741, %v2740
  %v2772 = vpack.c.b16 %v2743, %v2742
  %v2773 = vpack.c.b16 %v2745, %v2744
  %v2774 = vpack.c.b16 %v2747, %v2746
  %v2775 = vpack.c.b16 %v2749, %v2748
  %v2776 = vpack.c.b16 %v2751, %v2750
  %v2777 = vpack.c.b16 %v2753, %v2752
  %v2778 = vpack.c.b16 %v2755, %v2754
  %v2779 = vpack.c.b16 %v2757, %v2756
  %v2780 = vpack.c.b16 %v2759, %v2758
  %v2781 = vpack.c.b16 %v2761, %v2760
  %v2782 = vpack.c.b16 %v2763, %v2762
  %v2783 = vpack.c.b16 %v2765, %v2764
  %v2784 = vpack.c.b16 %v2767, %v2766
  %v2785 = vpack.c.b16 %v2769, %v2768
  %v2787 = vsel %vm138, %v2770, 0
  %v2790 = vsel %vm138, %v2771, 0
  %v2793 = vsel %vm138, %v2772, 0
  %v2796 = vsel %vm138, %v2773, 0
  %v2799 = vsel %vm138, %v2774, 0
  %v2802 = vsel %vm138, %v2775, 0
  %v2805 = vsel %vm138, %v2776, 0
  %v2808 = vsel %vm138, %v2777, 0
  %v2811 = vsel %vm138, %v2778, 0
  %v2814 = vsel %vm138, %v2779, 0
  %v2817 = vsel %vm138, %v2780, 0
  %v2820 = vsel %vm138, %v2781, 0
  %v2823 = vsel %vm138, %v2782, 0
  %v2826 = vsel %vm138, %v2783, 0
  %v2829 = vsel %vm138, %v2784, 0
  %v2832 = vsel %vm138, %v2785, 0
  %v2835 = vsel %vm187, %v2701, 0
  %2837 = vmatpush.bf16.msra.mxu0 0
  %2838 = vmatpush.bf16.msra.mxu0 0
  %2839 = vmatpush.bf16.msra.mxu0 0
  %2840 = vmatpush.bf16.msra.mxu0 0
  %2841 = vmatpush.bf16.msra.mxu0 0
  %2842 = vmatpush.bf16.msra.mxu0 0
  %2843 = vmatpush.bf16.msra.mxu0 0
  %2844 = vmatpush.bf16.msra.mxu0 %v2835
  %2845 = vmatmul.bf16.gmra.mxu0 %v2787
  %v2846 = vpop.f32.mrf.mxu0
  %v2847 = vadd.f32 %v2704, %v2846
  %v2848 = vpop.f32.mrf.mxu0
  %v2849 = vadd.f32 %v2704, %v2848
  %2850 = vmatmul.bf16.gmra.mxu0 %v2790
  %v2851 = vpop.f32.mrf.mxu0
  %v2852 = vadd.f32 %v2704, %v2851
  %v2853 = vpop.f32.mrf.mxu0
  %v2854 = vadd.f32 %v2704, %v2853
  %2855 = vmatmul.bf16.gmra.mxu0 %v2793
  %v2856 = vpop.f32.mrf.mxu0
  %v2857 = vadd.f32 %v2704, %v2856
  %v2858 = vpop.f32.mrf.mxu0
  %v2859 = vadd.f32 %v2704, %v2858
  %2860 = vmatmul.bf16.gmra.mxu0 %v2796
  %v2861 = vpop.f32.mrf.mxu0
  %v2862 = vadd.f32 %v2704, %v2861
  %v2863 = vpop.f32.mrf.mxu0
  %v2864 = vadd.f32 %v2704, %v2863
  %2865 = vmatmul.bf16.gmra.mxu0 %v2799
  %v2866 = vpop.f32.mrf.mxu0
  %v2867 = vadd.f32 %v2704, %v2866
  %v2868 = vpop.f32.mrf.mxu0
  %v2869 = vadd.f32 %v2704, %v2868
  %2870 = vmatmul.bf16.gmra.mxu0 %v2802
  %v2871 = vpop.f32.mrf.mxu0
  %v2872 = vadd.f32 %v2704, %v2871
  %v2873 = vpop.f32.mrf.mxu0
  %v2874 = vadd.f32 %v2704, %v2873
  %2875 = vmatmul.bf16.gmra.mxu0 %v2805
  %v2876 = vpop.f32.mrf.mxu0
  %v2877 = vadd.f32 %v2704, %v2876
  %v2878 = vpop.f32.mrf.mxu0
  %v2879 = vadd.f32 %v2704, %v2878
  %2880 = vmatmul.bf16.gmra.mxu0 %v2808
  %v2881 = vpop.f32.mrf.mxu0
  %v2882 = vadd.f32 %v2704, %v2881
  %v2883 = vpop.f32.mrf.mxu0
  %v2884 = vadd.f32 %v2704, %v2883
  %2885 = vmatmul.bf16.gmra.mxu0 %v2811
  %v2886 = vpop.f32.mrf.mxu0
  %v2887 = vadd.f32 %v2704, %v2886
  %v2888 = vpop.f32.mrf.mxu0
  %v2889 = vadd.f32 %v2704, %v2888
  %2890 = vmatmul.bf16.gmra.mxu0 %v2814
  %v2891 = vpop.f32.mrf.mxu0
  %v2892 = vadd.f32 %v2704, %v2891
  %v2893 = vpop.f32.mrf.mxu0
  %v2894 = vadd.f32 %v2704, %v2893
  %2895 = vmatmul.bf16.gmra.mxu0 %v2817
  %v2896 = vpop.f32.mrf.mxu0
  %v2897 = vadd.f32 %v2704, %v2896
  %v2898 = vpop.f32.mrf.mxu0
  %v2899 = vadd.f32 %v2704, %v2898
  %2900 = vmatmul.bf16.gmra.mxu0 %v2820
  %v2901 = vpop.f32.mrf.mxu0
  %v2902 = vadd.f32 %v2704, %v2901
  %v2903 = vpop.f32.mrf.mxu0
  %v2904 = vadd.f32 %v2704, %v2903
  %2905 = vmatmul.bf16.gmra.mxu0 %v2823
  %v2906 = vpop.f32.mrf.mxu0
  %v2907 = vadd.f32 %v2704, %v2906
  %v2908 = vpop.f32.mrf.mxu0
  %v2909 = vadd.f32 %v2704, %v2908
  %2910 = vmatmul.bf16.gmra.mxu0 %v2826
  %v2911 = vpop.f32.mrf.mxu0
  %v2912 = vadd.f32 %v2704, %v2911
  %v2913 = vpop.f32.mrf.mxu0
  %v2914 = vadd.f32 %v2704, %v2913
  %2915 = vmatmul.bf16.gmra.mxu0 %v2829
  %v2916 = vpop.f32.mrf.mxu0
  %v2917 = vadd.f32 %v2704, %v2916
  %v2918 = vpop.f32.mrf.mxu0
  %v2919 = vadd.f32 %v2704, %v2918
  %2920 = vmatmul.bf16.gmra.mxu0 %v2832
  %v2921 = vpop.f32.mrf.mxu0
  %v2922 = vadd.f32 %v2704, %v2921
  %v2923 = vpop.f32.mrf.mxu0
  %v2924 = vadd.f32 %v2704, %v2923
  %2925 = vdwg.mxu0
  %v2926 = vmax.f32 %v2847, 0.0
  %v2927 = vmax.f32 %v2849, 0.0
  %v2928 = vmax.f32 %v2852, 0.0
  %v2929 = vmax.f32 %v2854, 0.0
  %v2930 = vmax.f32 %v2857, 0.0
  %v2931 = vmax.f32 %v2859, 0.0
  %v2932 = vmax.f32 %v2862, 0.0
  %v2933 = vmax.f32 %v2864, 0.0
  %v2934 = vmax.f32 %v2867, 0.0
  %v2935 = vmax.f32 %v2869, 0.0
  %v2936 = vmax.f32 %v2872, 0.0
  %v2937 = vmax.f32 %v2874, 0.0
  %v2938 = vmax.f32 %v2877, 0.0
  %v2939 = vmax.f32 %v2879, 0.0
  %v2940 = vmax.f32 %v2882, 0.0
  %v2941 = vmax.f32 %v2884, 0.0
  %v2942 = vmax.f32 %v2887, 0.0
  %v2943 = vmax.f32 %v2889, 0.0
  %v2944 = vmax.f32 %v2892, 0.0
  %v2945 = vmax.f32 %v2894, 0.0
  %v2946 = vmax.f32 %v2897, 0.0
  %v2947 = vmax.f32 %v2899, 0.0
  %v2948 = vmax.f32 %v2902, 0.0
  %v2949 = vmax.f32 %v2904, 0.0
  %v2950 = vmax.f32 %v2907, 0.0
  %v2951 = vmax.f32 %v2909, 0.0
  %v2952 = vmax.f32 %v2912, 0.0
  %v2953 = vmax.f32 %v2914, 0.0
  %v2954 = vmax.f32 %v2917, 0.0
  %v2955 = vmax.f32 %v2919, 0.0
  %v2956 = vmax.f32 %v2922, 0.0
  %v2957 = vmax.f32 %v2924, 0.0
  %v2958 = vpack.c.bf16 %v2927, %v2926
  %v2959 = vpack.c.bf16 %v2929, %v2928
  %v2960 = vpack.c.bf16 %v2931, %v2930
  %v2961 = vpack.c.bf16 %v2933, %v2932
  %v2962 = vpack.c.bf16 %v2935, %v2934
  %v2963 = vpack.c.bf16 %v2937, %v2936
  %v2964 = vpack.c.bf16 %v2939, %v2938
  %v2965 = vpack.c.bf16 %v2941, %v2940
  %v2966 = vpack.c.bf16 %v2943, %v2942
  %v2967 = vpack.c.bf16 %v2945, %v2944
  %v2968 = vpack.c.bf16 %v2947, %v2946
  %v2969 = vpack.c.bf16 %v2949, %v2948
  %v2970 = vpack.c.bf16 %v2951, %v2950
  %v2971 = vpack.c.bf16 %v2953, %v2952
  %v2972 = vpack.c.bf16 %v2955, %v2954
  %v2973 = vpack.c.bf16 %v2957, %v2956
  %v2974 = vld [vmem:[%s3] sm:$0xf]
  %v2975 = vld [vmem:[%s3 + $0x4] sm:$0xf]
  %v2976 = vld [vmem:[%s3 + $0x8] sm:$0xf]
  %v2977 = vld [vmem:[%s3 + $0xc] sm:$0xf]
  %v2978 = vld [vmem:[%s3 + $0x10] sm:$0xf]
  %v2979 = vld [vmem:[%s3 + $0x14] sm:$0xf]
  %v2980 = vld [vmem:[%s3 + $0x18] sm:$0xf]
  %v2981 = vld [vmem:[%s3 + $0x1c] sm:$0xf]
  %v2982 = vld [vmem:[%s3 + $0x20] sm:$0xf]
  %v2983 = vld [vmem:[%s3 + $0x24] sm:$0xf]
  %v2984 = vld [vmem:[%s3 + $0x28] sm:$0xf]
  %v2985 = vld [vmem:[%s3 + $0x2c] sm:$0xf]
  %v2986 = vld [vmem:[%s3 + $0x30] sm:$0xf]
  %v2987 = vld [vmem:[%s3 + $0x34] sm:$0xf]
  %v2988 = vld [vmem:[%s3 + $0x38] sm:$0xf]
  %v2989 = vld [vmem:[%s3 + $0x3c] sm:$0xf]
  %v2990 = vld [vmem:[%s4] sm:$0x1]
  %v2992 = vperm.slane %v2990, 0
  %v3010 = vunpack.c.l.b16 %v2974
  %v3011 = vunpack.c.l.b16 %v2975
  %v3012 = vunpack.c.l.b16 %v2976
  %v3013 = vunpack.c.l.b16 %v2977
  %v3014 = vunpack.c.l.b16 %v2978
  %v3015 = vunpack.c.l.b16 %v2979
  %v3016 = vunpack.c.l.b16 %v2980
  %v3017 = vunpack.c.l.b16 %v2981
  %v3018 = vunpack.c.l.b16 %v2982
  %v3019 = vunpack.c.l.b16 %v2983
  %v3020 = vunpack.c.l.b16 %v2984
  %v3021 = vunpack.c.l.b16 %v2985
  %v3022 = vunpack.c.l.b16 %v2986
  %v3023 = vunpack.c.l.b16 %v2987
  %v3024 = vunpack.c.l.b16 %v2988
  %v3025 = vunpack.c.l.b16 %v2989
  %v3026 = vpack.c.b16 %v3011, %v3010
  %v3027 = vpack.c.b16 %v3013, %v3012
  %v3028 = vpack.c.b16 %v3015, %v3014
  %v3029 = vpack.c.b16 %v3017, %v3016
  %v3030 = vpack.c.b16 %v3019, %v3018
  %v3031 = vpack.c.b16 %v3021, %v3020
  %v3032 = vpack.c.b16 %v3023, %v3022
  %v3033 = vpack.c.b16 %v3025, %v3024
  %3042 = vmatpush.bf16.msra.mxu0 %v3033
  %3043 = vmatpush.bf16.msra.mxu0 %v3032
  %3044 = vmatpush.bf16.msra.mxu0 %v3031
  %3045 = vmatpush.bf16.msra.mxu0 %v3030
  %3046 = vmatpush.bf16.msra.mxu0 %v3029
  %3047 = vmatpush.bf16.msra.mxu0 %v3028
  %3048 = vmatpush.bf16.msra.mxu0 %v3027
  %3049 = vmatpush.bf16.msra.mxu0 %v3026
  %3050 = vmatmul.bf16.gmra.mxu0 %v2958
  %v3051 = vpop.f32.mrf.mxu0
  %v3052 = vadd.f32 %v2992, %v3051
  %v3053 = vpop.f32.mrf.mxu0
  %v3054 = vadd.f32 %v2992, %v3053
  %3055 = vmatmul.bf16.gmra.mxu0 %v2959
  %v3056 = vpop.f32.mrf.mxu0
  %v3057 = vadd.f32 %v2992, %v3056
  %v3058 = vpop.f32.mrf.mxu0
  %v3059 = vadd.f32 %v2992, %v3058
  %3060 = vmatmul.bf16.gmra.mxu0 %v2960
  %v3061 = vpop.f32.mrf.mxu0
  %v3062 = vadd.f32 %v2992, %v3061
  %v3063 = vpop.f32.mrf.mxu0
  %v3064 = vadd.f32 %v2992, %v3063
  %3065 = vmatmul.bf16.gmra.mxu0 %v2961
  %v3066 = vpop.f32.mrf.mxu0
  %v3067 = vadd.f32 %v2992, %v3066
  %v3068 = vpop.f32.mrf.mxu0
  %v3069 = vadd.f32 %v2992, %v3068
  %3070 = vmatmul.bf16.gmra.mxu0 %v2962
  %v3071 = vpop.f32.mrf.mxu0
  %v3072 = vadd.f32 %v2992, %v3071
  %v3073 = vpop.f32.mrf.mxu0
  %v3074 = vadd.f32 %v2992, %v3073
  %3075 = vmatmul.bf16.gmra.mxu0 %v2963
  %v3076 = vpop.f32.mrf.mxu0
  %v3077 = vadd.f32 %v2992, %v3076
  %v3078 = vpop.f32.mrf.mxu0
  %v3079 = vadd.f32 %v2992, %v3078
  %3080 = vmatmul.bf16.gmra.mxu0 %v2964
  %v3081 = vpop.f32.mrf.mxu0
  %v3082 = vadd.f32 %v2992, %v3081
  %v3083 = vpop.f32.mrf.mxu0
  %v3084 = vadd.f32 %v2992, %v3083
  %3085 = vmatmul.bf16.gmra.mxu0 %v2965
  %v3086 = vpop.f32.mrf.mxu0
  %v3087 = vadd.f32 %v2992, %v3086
  %v3088 = vpop.f32.mrf.mxu0
  %v3089 = vadd.f32 %v2992, %v3088
  %3090 = vmatmul.bf16.gmra.mxu0 %v2966
  %v3091 = vpop.f32.mrf.mxu0
  %v3092 = vadd.f32 %v2992, %v3091
  %v3093 = vpop.f32.mrf.mxu0
  %v3094 = vadd.f32 %v2992, %v3093
  %3095 = vmatmul.bf16.gmra.mxu0 %v2967
  %v3096 = vpop.f32.mrf.mxu0
  %v3097 = vadd.f32 %v2992, %v3096
  %v3098 = vpop.f32.mrf.mxu0
  %v3099 = vadd.f32 %v2992, %v3098
  %3100 = vmatmul.bf16.gmra.mxu0 %v2968
  %v3101 = vpop.f32.mrf.mxu0
  %v3102 = vadd.f32 %v2992, %v3101
  %v3103 = vpop.f32.mrf.mxu0
  %v3104 = vadd.f32 %v2992, %v3103
  %3105 = vmatmul.bf16.gmra.mxu0 %v2969
  %v3106 = vpop.f32.mrf.mxu0
  %v3107 = vadd.f32 %v2992, %v3106
  %v3108 = vpop.f32.mrf.mxu0
  %v3109 = vadd.f32 %v2992, %v3108
  %3110 = vmatmul.bf16.gmra.mxu0 %v2970
  %v3111 = vpop.f32.mrf.mxu0
  %v3112 = vadd.f32 %v2992, %v3111
  %v3113 = vpop.f32.mrf.mxu0
  %v3114 = vadd.f32 %v2992, %v3113
  %3115 = vmatmul.bf16.gmra.mxu0 %v2971
  %v3116 = vpop.f32.mrf.mxu0
  %v3117 = vadd.f32 %v2992, %v3116
  %v3118 = vpop.f32.mrf.mxu0
  %v3119 = vadd.f32 %v2992, %v3118
  %3120 = vmatmul.bf16.gmra.mxu0 %v2972
  %v3121 = vpop.f32.mrf.mxu0
  %v3122 = vadd.f32 %v2992, %v3121
  %v3123 = vpop.f32.mrf.mxu0
  %v3124 = vadd.f32 %v2992, %v3123
  %3125 = vmatmul.bf16.gmra.mxu0 %v2973
  %v3126 = vpop.f32.mrf.mxu0
  %v3127 = vadd.f32 %v2992, %v3126
  %v3128 = vpop.f32.mrf.mxu0
  %v3129 = vadd.f32 %v2992, %v3128
  %3130 = vdwg.mxu0
  %v3131 = vmax.f32 %v3052, 0.0
  %v3132 = vmax.f32 %v3054, 0.0
  %v3133 = vmax.f32 %v3057, 0.0
  %v3134 = vmax.f32 %v3059, 0.0
  %v3135 = vmax.f32 %v3062, 0.0
  %v3136 = vmax.f32 %v3064, 0.0
  %v3137 = vmax.f32 %v3067, 0.0
  %v3138 = vmax.f32 %v3069, 0.0
  %v3139 = vmax.f32 %v3072, 0.0
  %v3140 = vmax.f32 %v3074, 0.0
  %v3141 = vmax.f32 %v3077, 0.0
  %v3142 = vmax.f32 %v3079, 0.0
  %v3143 = vmax.f32 %v3082, 0.0
  %v3144 = vmax.f32 %v3084, 0.0
  %v3145 = vmax.f32 %v3087, 0.0
  %v3146 = vmax.f32 %v3089, 0.0
  %v3147 = vmax.f32 %v3092, 0.0
  %v3148 = vmax.f32 %v3094, 0.0
  %v3149 = vmax.f32 %v3097, 0.0
  %v3150 = vmax.f32 %v3099, 0.0
  %v3151 = vmax.f32 %v3102, 0.0
  %v3152 = vmax.f32 %v3104, 0.0
  %v3153 = vmax.f32 %v3107, 0.0
  %v3154 = vmax.f32 %v3109, 0.0
  %v3155 = vmax.f32 %v3112, 0.0
  %v3156 = vmax.f32 %v3114, 0.0
  %v3157 = vmax.f32 %v3117, 0.0
  %v3158 = vmax.f32 %v3119, 0.0
  %v3159 = vmax.f32 %v3122, 0.0
  %v3160 = vmax.f32 %v3124, 0.0
  %v3161 = vmax.f32 %v3127, 0.0
  %v3162 = vmax.f32 %v3129, 0.0
  %v3163 = vpack.c.bf16 %v3132, %v3131
  %v3164 = vpack.c.bf16 %v3134, %v3133
  %v3165 = vpack.c.bf16 %v3136, %v3135
  %v3166 = vpack.c.bf16 %v3138, %v3137
  %v3167 = vpack.c.bf16 %v3140, %v3139
  %v3168 = vpack.c.bf16 %v3142, %v3141
  %v3169 = vpack.c.bf16 %v3144, %v3143
  %v3170 = vpack.c.bf16 %v3146, %v3145
  %v3171 = vpack.c.bf16 %v3148, %v3147
  %v3172 = vpack.c.bf16 %v3150, %v3149
  %v3173 = vpack.c.bf16 %v3152, %v3151
  %v3174 = vpack.c.bf16 %v3154, %v3153
  %v3175 = vpack.c.bf16 %v3156, %v3155
  %v3176 = vpack.c.bf16 %v3158, %v3157
  %v3177 = vpack.c.bf16 %v3160, %v3159
  %v3178 = vpack.c.bf16 %v3162, %v3161
  %v3179 = vld [vmem:[%s533] sm:$0xf]
  %v3180 = vld [vmem:[%s533 + $0x4] sm:$0xf]
  %v3181 = vld [vmem:[%s533 + $0x8] sm:$0xf]
  %v3182 = vld [vmem:[%s533 + $0xc] sm:$0xf]
  %v3183 = vld [vmem:[%s533 + $0x10] sm:$0xf]
  %v3184 = vld [vmem:[%s533 + $0x14] sm:$0xf]
  %v3185 = vld [vmem:[%s533 + $0x18] sm:$0xf]
  %v3186 = vld [vmem:[%s533 + $0x1c] sm:$0xf]
  %v3187 = vld [vmem:[%s533 + $0x20] sm:$0xf]
  %v3188 = vld [vmem:[%s533 + $0x24] sm:$0xf]
  %v3189 = vld [vmem:[%s533 + $0x28] sm:$0xf]
  %v3190 = vld [vmem:[%s533 + $0x2c] sm:$0xf]
  %v3191 = vld [vmem:[%s533 + $0x30] sm:$0xf]
  %v3192 = vld [vmem:[%s533 + $0x34] sm:$0xf]
  %v3193 = vld [vmem:[%s533 + $0x38] sm:$0xf]
  %v3194 = vld [vmem:[%s533 + $0x3c] sm:$0xf]
  %v3195 = vld [vmem:[%s550] sm:$0x1]
  %v3197 = vperm.slane %v3195, 0
  %v3215 = vunpack.c.l.b16 %v3179
  %v3216 = vunpack.c.l.b16 %v3180
  %v3217 = vunpack.c.l.b16 %v3181
  %v3218 = vunpack.c.l.b16 %v3182
  %v3219 = vunpack.c.l.b16 %v3183
  %v3220 = vunpack.c.l.b16 %v3184
  %v3221 = vunpack.c.l.b16 %v3185
  %v3222 = vunpack.c.l.b16 %v3186
  %v3223 = vunpack.c.l.b16 %v3187
  %v3224 = vunpack.c.l.b16 %v3188
  %v3225 = vunpack.c.l.b16 %v3189
  %v3226 = vunpack.c.l.b16 %v3190
  %v3227 = vunpack.c.l.b16 %v3191
  %v3228 = vunpack.c.l.b16 %v3192
  %v3229 = vunpack.c.l.b16 %v3193
  %v3230 = vunpack.c.l.b16 %v3194
  %v3231 = vpack.c.b16 %v3216, %v3215
  %v3232 = vpack.c.b16 %v3218, %v3217
  %v3233 = vpack.c.b16 %v3220, %v3219
  %v3234 = vpack.c.b16 %v3222, %v3221
  %v3235 = vpack.c.b16 %v3224, %v3223
  %v3236 = vpack.c.b16 %v3226, %v3225
  %v3237 = vpack.c.b16 %v3228, %v3227
  %v3238 = vpack.c.b16 %v3230, %v3229
  %3247 = vmatpush.bf16.msra.mxu0 %v3238
  %3248 = vmatpush.bf16.msra.mxu0 %v3237
  %3249 = vmatpush.bf16.msra.mxu0 %v3236
  %3250 = vmatpush.bf16.msra.mxu0 %v3235
  %3251 = vmatpush.bf16.msra.mxu0 %v3234
  %3252 = vmatpush.bf16.msra.mxu0 %v3233
  %3253 = vmatpush.bf16.msra.mxu0 %v3232
  %3254 = vmatpush.bf16.msra.mxu0 %v3231
  %3255 = vmatmul.bf16.gmra.mxu0 %v3163
  %v3256 = vpop.f32.mrf.mxu0
  %v3257 = vadd.f32 %v3197, %v3256
  %v3258 = vpop.f32.mrf.mxu0
  %v3259 = vadd.f32 %v3197, %v3258
  %3260 = vmatmul.bf16.gmra.mxu0 %v3164
  %v3261 = vpop.f32.mrf.mxu0
  %v3262 = vadd.f32 %v3197, %v3261
  %v3263 = vpop.f32.mrf.mxu0
  %v3264 = vadd.f32 %v3197, %v3263
  %3265 = vmatmul.bf16.gmra.mxu0 %v3165
  %v3266 = vpop.f32.mrf.mxu0
  %v3267 = vadd.f32 %v3197, %v3266
  %v3268 = vpop.f32.mrf.mxu0
  %v3269 = vadd.f32 %v3197, %v3268
  %3270 = vmatmul.bf16.gmra.mxu0 %v3166
  %v3271 = vpop.f32.mrf.mxu0
  %v3272 = vadd.f32 %v3197, %v3271
  %v3273 = vpop.f32.mrf.mxu0
  %v3274 = vadd.f32 %v3197, %v3273
  %3275 = vmatmul.bf16.gmra.mxu0 %v3167
  %v3276 = vpop.f32.mrf.mxu0
  %v3277 = vadd.f32 %v3197, %v3276
  %v3278 = vpop.f32.mrf.mxu0
  %v3279 = vadd.f32 %v3197, %v3278
  %3280 = vmatmul.bf16.gmra.mxu0 %v3168
  %v3281 = vpop.f32.mrf.mxu0
  %v3282 = vadd.f32 %v3197, %v3281
  %v3283 = vpop.f32.mrf.mxu0
  %v3284 = vadd.f32 %v3197, %v3283
  %3285 = vmatmul.bf16.gmra.mxu0 %v3169
  %v3286 = vpop.f32.mrf.mxu0
  %v3287 = vadd.f32 %v3197, %v3286
  %v3288 = vpop.f32.mrf.mxu0
  %v3289 = vadd.f32 %v3197, %v3288
  %3290 = vmatmul.bf16.gmra.mxu0 %v3170
  %v3291 = vpop.f32.mrf.mxu0
  %v3292 = vadd.f32 %v3197, %v3291
  %v3293 = vpop.f32.mrf.mxu0
  %v3294 = vadd.f32 %v3197, %v3293
  %3295 = vmatmul.bf16.gmra.mxu0 %v3171
  %v3296 = vpop.f32.mrf.mxu0
  %v3297 = vadd.f32 %v3197, %v3296
  %v3298 = vpop.f32.mrf.mxu0
  %v3299 = vadd.f32 %v3197, %v3298
  %3300 = vmatmul.bf16.gmra.mxu0 %v3172
  %v3301 = vpop.f32.mrf.mxu0
  %v3302 = vadd.f32 %v3197, %v3301
  %v3303 = vpop.f32.mrf.mxu0
  %v3304 = vadd.f32 %v3197, %v3303
  %3305 = vmatmul.bf16.gmra.mxu0 %v3173
  %v3306 = vpop.f32.mrf.mxu0
  %v3307 = vadd.f32 %v3197, %v3306
  %v3308 = vpop.f32.mrf.mxu0
  %v3309 = vadd.f32 %v3197, %v3308
  %3310 = vmatmul.bf16.gmra.mxu0 %v3174
  %v3311 = vpop.f32.mrf.mxu0
  %v3312 = vadd.f32 %v3197, %v3311
  %v3313 = vpop.f32.mrf.mxu0
  %v3314 = vadd.f32 %v3197, %v3313
  %3315 = vmatmul.bf16.gmra.mxu0 %v3175
  %v3316 = vpop.f32.mrf.mxu0
  %v3317 = vadd.f32 %v3197, %v3316
  %v3318 = vpop.f32.mrf.mxu0
  %v3319 = vadd.f32 %v3197, %v3318
  %3320 = vmatmul.bf16.gmra.mxu0 %v3176
  %v3321 = vpop.f32.mrf.mxu0
  %v3322 = vadd.f32 %v3197, %v3321
  %v3323 = vpop.f32.mrf.mxu0
  %v3324 = vadd.f32 %v3197, %v3323
  %3325 = vmatmul.bf16.gmra.mxu0 %v3177
  %v3326 = vpop.f32.mrf.mxu0
  %v3327 = vadd.f32 %v3197, %v3326
  %v3328 = vpop.f32.mrf.mxu0
  %v3329 = vadd.f32 %v3197, %v3328
  %3330 = vmatmul.bf16.gmra.mxu0 %v3178
  %v3331 = vpop.f32.mrf.mxu0
  %v3332 = vadd.f32 %v3197, %v3331
  %v3333 = vpop.f32.mrf.mxu0
  %v3334 = vadd.f32 %v3197, %v3333
  %3335 = vdwg.mxu0
  %v3336 = vmax.f32 %v3257, 0.0
  %v3337 = vmax.f32 %v3259, 0.0
  %v3338 = vmax.f32 %v3262, 0.0
  %v3339 = vmax.f32 %v3264, 0.0
  %v3340 = vmax.f32 %v3267, 0.0
  %v3341 = vmax.f32 %v3269, 0.0
  %v3342 = vmax.f32 %v3272, 0.0
  %v3343 = vmax.f32 %v3274, 0.0
  %v3344 = vmax.f32 %v3277, 0.0
  %v3345 = vmax.f32 %v3279, 0.0
  %v3346 = vmax.f32 %v3282, 0.0
  %v3347 = vmax.f32 %v3284, 0.0
  %v3348 = vmax.f32 %v3287, 0.0
  %v3349 = vmax.f32 %v3289, 0.0
  %v3350 = vmax.f32 %v3292, 0.0
  %v3351 = vmax.f32 %v3294, 0.0
  %v3352 = vmax.f32 %v3297, 0.0
  %v3353 = vmax.f32 %v3299, 0.0
  %v3354 = vmax.f32 %v3302, 0.0
  %v3355 = vmax.f32 %v3304, 0.0
  %v3356 = vmax.f32 %v3307, 0.0
  %v3357 = vmax.f32 %v3309, 0.0
  %v3358 = vmax.f32 %v3312, 0.0
  %v3359 = vmax.f32 %v3314, 0.0
  %v3360 = vmax.f32 %v3317, 0.0
  %v3361 = vmax.f32 %v3319, 0.0
  %v3362 = vmax.f32 %v3322, 0.0
  %v3363 = vmax.f32 %v3324, 0.0
  %v3364 = vmax.f32 %v3327, 0.0
  %v3365 = vmax.f32 %v3329, 0.0
  %v3366 = vmax.f32 %v3332, 0.0
  %v3367 = vmax.f32 %v3334, 0.0
  %v3368 = vmax.f32 %v3336, %v3337
  %v3369 = vrot.slane %v3368, 4
  %v3370 = vmax.f32 %v3368, %v3369
  %v3371 = vrot.slane %v3370, 2
  %v3372 = vmax.f32 %v3370, %v3371
  %v3373 = vrot.slane %v3372, 1
  %v3374 = vmax.f32 %v3372, %v3373
  %v3375 = vmax.f32 %v3338, %v3339
  %v3376 = vrot.slane %v3375, 4
  %v3377 = vmax.f32 %v3375, %v3376
  %v3378 = vrot.slane %v3377, 2
  %v3379 = vmax.f32 %v3377, %v3378
  %v3380 = vrot.slane %v3379, 1
  %v3381 = vmax.f32 %v3379, %v3380
  %v3382 = vmax.f32 %v3340, %v3341
  %v3383 = vrot.slane %v3382, 4
  %v3384 = vmax.f32 %v3382, %v3383
  %v3385 = vrot.slane %v3384, 2
  %v3386 = vmax.f32 %v3384, %v3385
  %v3387 = vrot.slane %v3386, 1
  %v3388 = vmax.f32 %v3386, %v3387
  %v3389 = vmax.f32 %v3342, %v3343
  %v3390 = vrot.slane %v3389, 4
  %v3391 = vmax.f32 %v3389, %v3390
  %v3392 = vrot.slane %v3391, 2
  %v3393 = vmax.f32 %v3391, %v3392
  %v3394 = vrot.slane %v3393, 1
  %v3395 = vmax.f32 %v3393, %v3394
  %v3396 = vmax.f32 %v3344, %v3345
  %v3397 = vrot.slane %v3396, 4
  %v3398 = vmax.f32 %v3396, %v3397
  %v3399 = vrot.slane %v3398, 2
  %v3400 = vmax.f32 %v3398, %v3399
  %v3401 = vrot.slane %v3400, 1
  %v3402 = vmax.f32 %v3400, %v3401
  %v3403 = vmax.f32 %v3346, %v3347
  %v3404 = vrot.slane %v3403, 4
  %v3405 = vmax.f32 %v3403, %v3404
  %v3406 = vrot.slane %v3405, 2
  %v3407 = vmax.f32 %v3405, %v3406
  %v3408 = vrot.slane %v3407, 1
  %v3409 = vmax.f32 %v3407, %v3408
  %v3410 = vmax.f32 %v3348, %v3349
  %v3411 = vrot.slane %v3410, 4
  %v3412 = vmax.f32 %v3410, %v3411
  %v3413 = vrot.slane %v3412, 2
  %v3414 = vmax.f32 %v3412, %v3413
  %v3415 = vrot.slane %v3414, 1
  %v3416 = vmax.f32 %v3414, %v3415
  %v3417 = vmax.f32 %v3350, %v3351
  %v3418 = vrot.slane %v3417, 4
  %v3419 = vmax.f32 %v3417, %v3418
  %v3420 = vrot.slane %v3419, 2
  %v3421 = vmax.f32 %v3419, %v3420
  %v3422 = vrot.slane %v3421, 1
  %v3423 = vmax.f32 %v3421, %v3422
  %v3424 = vmax.f32 %v3352, %v3353
  %v3425 = vrot.slane %v3424, 4
  %v3426 = vmax.f32 %v3424, %v3425
  %v3427 = vrot.slane %v3426, 2
  %v3428 = vmax.f32 %v3426, %v3427
  %v3429 = vrot.slane %v3428, 1
  %v3430 = vmax.f32 %v3428, %v3429
  %v3431 = vmax.f32 %v3354, %v3355
  %v3432 = vrot.slane %v3431, 4
  %v3433 = vmax.f32 %v3431, %v3432
  %v3434 = vrot.slane %v3433, 2
  %v3435 = vmax.f32 %v3433, %v3434
  %v3436 = vrot.slane %v3435, 1
  %v3437 = vmax.f32 %v3435, %v3436
  %v3438 = vmax.f32 %v3356, %v3357
  %v3439 = vrot.slane %v3438, 4
  %v3440 = vmax.f32 %v3438, %v3439
  %v3441 = vrot.slane %v3440, 2
  %v3442 = vmax.f32 %v3440, %v3441
  %v3443 = vrot.slane %v3442, 1
  %v3444 = vmax.f32 %v3442, %v3443
  %v3445 = vmax.f32 %v3358, %v3359
  %v3446 = vrot.slane %v3445, 4
  %v3447 = vmax.f32 %v3445, %v3446
  %v3448 = vrot.slane %v3447, 2
  %v3449 = vmax.f32 %v3447, %v3448
  %v3450 = vrot.slane %v3449, 1
  %v3451 = vmax.f32 %v3449, %v3450
  %v3452 = vmax.f32 %v3360, %v3361
  %v3453 = vrot.slane %v3452, 4
  %v3454 = vmax.f32 %v3452, %v3453
  %v3455 = vrot.slane %v3454, 2
  %v3456 = vmax.f32 %v3454, %v3455
  %v3457 = vrot.slane %v3456, 1
  %v3458 = vmax.f32 %v3456, %v3457
  %v3459 = vmax.f32 %v3362, %v3363
  %v3460 = vrot.slane %v3459, 4
  %v3461 = vmax.f32 %v3459, %v3460
  %v3462 = vrot.slane %v3461, 2
  %v3463 = vmax.f32 %v3461, %v3462
  %v3464 = vrot.slane %v3463, 1
  %v3465 = vmax.f32 %v3463, %v3464
  %v3466 = vmax.f32 %v3364, %v3365
  %v3467 = vrot.slane %v3466, 4
  %v3468 = vmax.f32 %v3466, %v3467
  %v3469 = vrot.slane %v3468, 2
  %v3470 = vmax.f32 %v3468, %v3469
  %v3471 = vrot.slane %v3470, 1
  %v3472 = vmax.f32 %v3470, %v3471
  %v3473 = vmax.f32 %v3366, %v3367
  %v3474 = vrot.slane %v3473, 4
  %v3475 = vmax.f32 %v3473, %v3474
  %v3476 = vrot.slane %v3475, 2
  %v3477 = vmax.f32 %v3475, %v3476
  %v3478 = vrot.slane %v3477, 1
  %v3479 = vmax.f32 %v3477, %v3478
  %v3480 = vpack.c.bf16 %v3374, %v3374
  %v3481 = vpack.c.bf16 %v3381, %v3381
  %v3482 = vpack.c.bf16 %v3388, %v3388
  %v3483 = vpack.c.bf16 %v3395, %v3395
  %v3484 = vpack.c.bf16 %v3402, %v3402
  %v3485 = vpack.c.bf16 %v3409, %v3409
  %v3486 = vpack.c.bf16 %v3416, %v3416
  %v3487 = vpack.c.bf16 %v3423, %v3423
  %v3488 = vpack.c.bf16 %v3430, %v3430
  %v3489 = vpack.c.bf16 %v3437, %v3437
  %v3490 = vpack.c.bf16 %v3444, %v3444
  %v3491 = vpack.c.bf16 %v3451, %v3451
  %v3492 = vpack.c.bf16 %v3458, %v3458
  %v3493 = vpack.c.bf16 %v3465, %v3465
  %v3494 = vpack.c.bf16 %v3472, %v3472
  %v3495 = vpack.c.bf16 %v3479, %v3479
  %v3512 = vunpack.c.l.b16 %v3480
  %v3513 = vunpack.c.l.b16 %v3481
  %v3514 = vunpack.c.l.b16 %v3482
  %v3515 = vunpack.c.l.b16 %v3483
  %v3516 = vunpack.c.l.b16 %v3484
  %v3517 = vunpack.c.l.b16 %v3485
  %v3518 = vunpack.c.l.b16 %v3486
  %v3519 = vunpack.c.l.b16 %v3487
  %v3520 = vunpack.c.l.b16 %v3488
  %v3521 = vunpack.c.l.b16 %v3489
  %v3522 = vunpack.c.l.b16 %v3490
  %v3523 = vunpack.c.l.b16 %v3491
  %v3524 = vunpack.c.l.b16 %v3492
  %v3525 = vunpack.c.l.b16 %v3493
  %v3526 = vunpack.c.l.b16 %v3494
  %v3527 = vunpack.c.l.b16 %v3495
  %v3528 = vsel %vm884, %v3513, %v3512
  %v3529 = vsel %vm886, %v3514, %v3528
  %v3530 = vsel %vm888, %v3515, %v3529
  %v3531 = vsel %vm890, %v3516, %v3530
  %v3532 = vsel %vm892, %v3517, %v3531
  %v3533 = vsel %vm894, %v3518, %v3532
  %v3534 = vsel %vm896, %v3519, %v3533
  %v3535 = vsel %vm884, %v3521, %v3520
  %v3536 = vsel %vm886, %v3522, %v3535
  %v3537 = vsel %vm888, %v3523, %v3536
  %v3538 = vsel %vm890, %v3524, %v3537
  %v3539 = vsel %vm892, %v3525, %v3538
  %v3540 = vsel %vm894, %v3526, %v3539
  %v3541 = vsel %vm896, %v3527, %v3540
  %v3542 = vpack.c.b16 %v3534, %v3534
  %v3543 = vpack.c.b16 %v3541, %v3541
  %3546 = vst [vmem:[%s5 + $0x18] sm:$0xf] %v3542
  %3547 = vst [vmem:[%s5 + $0x1c] sm:$0xf] %v3543
  // Predicated region
  $region22: #{a_call__.6} parent=0 // pred_check
    _
  $region23: #{a_call__.6} parent=0 // pred_check_branch
    %3549 = sbr.rel (0) target = $region25
  $region24: #{a_call__.6} parent=0 // pred_region
    _
  $region25: #{a_call__.6} parent=0 // pred_fallthru
    _
  // Predicated region
  $region26: #{a_call__.6} parent=0 // pred_check
    _
  $region27: #{a_call__.6} parent=0 // pred_check_branch
    %3551 = sbr.rel (0) target = $region29
  $region28: #{a_call__.6} parent=0 // pred_region
    _
  $region29: #{a_call__.6} parent=0 // pred_fallthru
    _

// kernel: custom-call.50
$region0: #{custom-call.50}
  %s0 = inlined_call_operand.vmem [shape: f32[2,16], index: 0, kind: output, shape index: {}]

// kernel: a_call__.7
$region0: #{a_call__.7}
  #allocation0 [shape = 'u32[]', space=smem, size = 0x4, offset = 0x4, fixed_abs, tag = 'smem constant byte address 0x4 - core index']
  #allocation1 [shape = 'u32[72,128]{1,0:T(1,128)}', space=vmem, size = 0x9000, scoped, tag = 'internal scratch']
  %s0 = inlined_call_operand.vmem [shape: bf16[256,35], index: 0, kind: input, shape index: {}]
  %s1 = inlined_call_operand.vmem [shape: bf16[35,128], index: 1, kind: input, shape index: {}]
  %s2 = inlined_call_operand.vmem [shape: f32[1,128], index: 2, kind: input, shape index: {}]
  %s3 = inlined_call_operand.vmem [shape: bf16[2,128,128], index: 3, kind: input, shape index: {}]
  %s4 = inlined_call_operand.vmem [shape: f32[2,1,128], index: 4, kind: input, shape index: {}]
  %s5 = inlined_call_operand.vmem [shape: bf16[32,128], index: 5, kind: output, shape index: {}]
  %s6 = sld [smem:[#allocation0]]
  $region30: #{a_call__.7} parent=0
    _
  %s8 = ssub.s32 1, %s6
  %s9 = scalar_select 0, %s8, %s6
  // Predicated region
  $region2: #{a_call__.7} parent=0 // pred_check
    _
  $region3: #{a_call__.7} parent=0 // pred_check_branch
    %11 = sbr.rel (0) target = $region5
  $region4: #{a_call__.7} parent=0 // pred_region
    _
  $region5: #{a_call__.7} parent=0 // pred_fallthru
    _
  // Predicated region
  $region6: #{a_call__.7} parent=0 // pred_check
    _
  $region7: #{a_call__.7} parent=0 // pred_check_branch
    %13 = sbr.rel (0) target = $region9
  $region8: #{a_call__.7} parent=0 // pred_region
    _
  $region9: #{a_call__.7} parent=0 // pred_fallthru
    _
  // Predicated region
  $region10: #{a_call__.7} parent=0 // pred_check
    _
  $region11: #{a_call__.7} parent=0 // pred_check_branch
    %15 = sbr.rel (0) target = $region13
  $region12: #{a_call__.7} parent=0 // pred_region
    _
  $region13: #{a_call__.7} parent=0 // pred_fallthru
    _
  // Predicated region
  $region14: #{a_call__.7} parent=0 // pred_check
    _
  $region15: #{a_call__.7} parent=0 // pred_check_branch
    %17 = sbr.rel (0) target = $region17
  $region16: #{a_call__.7} parent=0 // pred_region
    _
  $region17: #{a_call__.7} parent=0 // pred_fallthru
    _
  // Predicated region
  $region18: #{a_call__.7} parent=0 // pred_check
    _
  $region19: #{a_call__.7} parent=0 // pred_check_branch
    %19 = sbr.rel (0) target = $region21
  $region20: #{a_call__.7} parent=0 // pred_region
    _
  $region21: #{a_call__.7} parent=0 // pred_fallthru
    _
  %v21 = vld [vmem:[%s0] sm:$0xf]
  %v22 = vld [vmem:[%s0 + $0x4] sm:$0xf]
  %v23 = vld [vmem:[%s0 + $0x8] sm:$0xf]
  %v24 = vld [vmem:[%s0 + $0xc] sm:$0xf]
  %v25 = vld [vmem:[%s0 + $0x10] sm:$0xf]
  %v26 = vld [vmem:[%s0 + $0x14] sm:$0xf]
  %v27 = vld [vmem:[%s0 + $0x18] sm:$0xf]
  %v28 = vld [vmem:[%s0 + $0x1c] sm:$0xf]
  %v29 = vld [vmem:[%s0 + $0x20] sm:$0xf]
  %v30 = vld [vmem:[%s0 + $0x24] sm:$0xf]
  %v31 = vld [vmem:[%s0 + $0x28] sm:$0xf]
  %v32 = vld [vmem:[%s0 + $0x2c] sm:$0xf]
  %v33 = vld [vmem:[%s0 + $0x30] sm:$0xf]
  %v34 = vld [vmem:[%s0 + $0x34] sm:$0xf]
  %v35 = vld [vmem:[%s0 + $0x38] sm:$0xf]
  %v36 = vld [vmem:[%s0 + $0x3c] sm:$0xf]
  %v37 = vld [vmem:[%s0 + $0x40] sm:$0xf]
  %v38 = vld [vmem:[%s0 + $0x44] sm:$0xf]
  %v39 = vld [vmem:[%s0 + $0x48] sm:$0xf]
  %v40 = vld [vmem:[%s0 + $0x4c] sm:$0xf]
  %v41 = vld [vmem:[%s0 + $0x50] sm:$0xf]
  %v42 = vld [vmem:[%s0 + $0x54] sm:$0xf]
  %v43 = vld [vmem:[%s0 + $0x58] sm:$0xf]
  %v44 = vld [vmem:[%s0 + $0x5c] sm:$0xf]
  %v45 = vld [vmem:[%s0 + $0x60] sm:$0xf]
  %v46 = vld [vmem:[%s0 + $0x64] sm:$0xf]
  %v47 = vld [vmem:[%s0 + $0x68] sm:$0xf]
  %v48 = vld [vmem:[%s0 + $0x6c] sm:$0xf]
  %v49 = vld [vmem:[%s0 + $0x70] sm:$0xf]
  %v50 = vld [vmem:[%s0 + $0x74] sm:$0xf]
  %v51 = vld [vmem:[%s0 + $0x78] sm:$0xf]
  %v52 = vld [vmem:[%s0 + $0x7c] sm:$0xf]
  %v53 = vld [vmem:[%s1] sm:$0xf]
  %v54 = vld [vmem:[%s1 + $0x4] sm:$0xf]
  %v55 = vld [vmem:[%s1 + $0x8] sm:$0xf]
  %v56 = vld [vmem:[%s1 + $0xc] sm:$0xf]
  %v57 = vld [vmem:[%s1 + $0x10] sm:$0x3]
  %v58 = vld [vmem:[%s2] sm:$0x1]
  %v60 = vperm.slane %v58, 0
  %v94 = vunpack.c.l.b16 %v21
  %v95 = vunpack.c.l.b16 %v22
  %v96 = vunpack.c.l.b16 %v23
  %v97 = vunpack.c.l.b16 %v24
  %v98 = vunpack.c.l.b16 %v25
  %v99 = vunpack.c.l.b16 %v26
  %v100 = vunpack.c.l.b16 %v27
  %v101 = vunpack.c.l.b16 %v28
  %v102 = vunpack.c.l.b16 %v29
  %v103 = vunpack.c.l.b16 %v30
  %v104 = vunpack.c.l.b16 %v31
  %v105 = vunpack.c.l.b16 %v32
  %v106 = vunpack.c.l.b16 %v33
  %v107 = vunpack.c.l.b16 %v34
  %v108 = vunpack.c.l.b16 %v35
  %v109 = vunpack.c.l.b16 %v36
  %v110 = vunpack.c.l.b16 %v37
  %v111 = vunpack.c.l.b16 %v38
  %v112 = vunpack.c.l.b16 %v39
  %v113 = vunpack.c.l.b16 %v40
  %v114 = vunpack.c.l.b16 %v41
  %v115 = vunpack.c.l.b16 %v42
  %v116 = vunpack.c.l.b16 %v43
  %v117 = vunpack.c.l.b16 %v44
  %v118 = vunpack.c.l.b16 %v45
  %v119 = vunpack.c.l.b16 %v46
  %v120 = vunpack.c.l.b16 %v47
  %v121 = vunpack.c.l.b16 %v48
  %v122 = vunpack.c.l.b16 %v49
  %v123 = vunpack.c.l.b16 %v50
  %v124 = vunpack.c.l.b16 %v51
  %v125 = vunpack.c.l.b16 %v52
  %v126 = vpack.c.b16 %v95, %v94
  %v127 = vpack.c.b16 %v97, %v96
  %v128 = vpack.c.b16 %v99, %v98
  %v129 = vpack.c.b16 %v101, %v100
  %v130 = vpack.c.b16 %v103, %v102
  %v131 = vpack.c.b16 %v105, %v104
  %v132 = vpack.c.b16 %v107, %v106
  %v133 = vpack.c.b16 %v109, %v108
  %v134 = vpack.c.b16 %v111, %v110
  %v135 = vpack.c.b16 %v113, %v112
  %v136 = vpack.c.b16 %v115, %v114
  %v137 = vpack.c.b16 %v117, %v116
  %v138 = vpack.c.b16 %v119, %v118
  %v139 = vpack.c.b16 %v121, %v120
  %v140 = vpack.c.b16 %v123, %v122
  %v141 = vpack.c.b16 %v125, %v124
  %v147 = vunpack.c.l.b16 %v53
  %v148 = vunpack.c.l.b16 %v54
  %v149 = vunpack.c.l.b16 %v55
  %v150 = vunpack.c.l.b16 %v56
  %v151 = vunpack.c.l.b16 %v57
  %v152 = vpack.c.b16 %v148, %v147
  %v153 = vpack.c.b16 %v150, %v149
  %v154 = vpack.c.b16 %v151, %v151
  %vm157 = vcmask 285696
  %v159 = vsel %vm157, %v126, 0
  %v162 = vsel %vm157, %v127, 0
  %v165 = vsel %vm157, %v128, 0
  %v168 = vsel %vm157, %v129, 0
  %v171 = vsel %vm157, %v130, 0
  %v174 = vsel %vm157, %v131, 0
  %v177 = vsel %vm157, %v132, 0
  %v180 = vsel %vm157, %v133, 0
  %v183 = vsel %vm157, %v134, 0
  %v186 = vsel %vm157, %v135, 0
  %v189 = vsel %vm157, %v136, 0
  %v192 = vsel %vm157, %v137, 0
  %v195 = vsel %vm157, %v138, 0
  %v198 = vsel %vm157, %v139, 0
  %v201 = vsel %vm157, %v140, 0
  %v204 = vsel %vm157, %v141, 0
  %vm206 = vcmask 1040384
  %vm207 = vcmask 1041408
  %v208 = vsel %vm206, 4294967295, 65535
  %v209 = vsel %vm207, %v208, 0
  %v211 = vand.u32 %v154, %v209
  %213 = vmatpush.bf16.msra.mxu0 0
  %214 = vmatpush.bf16.msra.mxu0 0
  %215 = vmatpush.bf16.msra.mxu0 0
  %216 = vmatpush.bf16.msra.mxu0 0
  %217 = vmatpush.bf16.msra.mxu0 0
  %218 = vmatpush.bf16.msra.mxu0 %v211
  %219 = vmatpush.bf16.msra.mxu0 %v153
  %220 = vmatpush.bf16.msra.mxu0 %v152
  %221 = vmatmul.bf16.gmra.mxu0 %v159
  %v222 = vpop.f32.mrf.mxu0
  %v223 = vadd.f32 %v60, %v222
  %v224 = vpop.f32.mrf.mxu0
  %v225 = vadd.f32 %v60, %v224
  %226 = vmatmul.bf16.gmra.mxu0 %v162
  %v227 = vpop.f32.mrf.mxu0
  %v228 = vadd.f32 %v60, %v227
  %v229 = vpop.f32.mrf.mxu0
  %v230 = vadd.f32 %v60, %v229
  %231 = vmatmul.bf16.gmra.mxu0 %v165
  %v232 = vpop.f32.mrf.mxu0
  %v233 = vadd.f32 %v60, %v232
  %v234 = vpop.f32.mrf.mxu0
  %v235 = vadd.f32 %v60, %v234
  %236 = vmatmul.bf16.gmra.mxu0 %v168
  %v237 = vpop.f32.mrf.mxu0
  %v238 = vadd.f32 %v60, %v237
  %v239 = vpop.f32.mrf.mxu0
  %v240 = vadd.f32 %v60, %v239
  %241 = vmatmul.bf16.gmra.mxu0 %v171
  %v242 = vpop.f32.mrf.mxu0
  %v243 = vadd.f32 %v60, %v242
  %v244 = vpop.f32.mrf.mxu0
  %v245 = vadd.f32 %v60, %v244
  %246 = vmatmul.bf16.gmra.mxu0 %v174
  %v247 = vpop.f32.mrf.mxu0
  %v248 = vadd.f32 %v60, %v247
  %v249 = vpop.f32.mrf.mxu0
  %v250 = vadd.f32 %v60, %v249
  %251 = vmatmul.bf16.gmra.mxu0 %v177
  %v252 = vpop.f32.mrf.mxu0
  %v253 = vadd.f32 %v60, %v252
  %v254 = vpop.f32.mrf.mxu0
  %v255 = vadd.f32 %v60, %v254
  %256 = vmatmul.bf16.gmra.mxu0 %v180
  %v257 = vpop.f32.mrf.mxu0
  %v258 = vadd.f32 %v60, %v257
  %v259 = vpop.f32.mrf.mxu0
  %v260 = vadd.f32 %v60, %v259
  %261 = vmatmul.bf16.gmra.mxu0 %v183
  %v262 = vpop.f32.mrf.mxu0
  %v263 = vadd.f32 %v60, %v262
  %v264 = vpop.f32.mrf.mxu0
  %v265 = vadd.f32 %v60, %v264
  %266 = vmatmul.bf16.gmra.mxu0 %v186
  %v267 = vpop.f32.mrf.mxu0
  %v268 = vadd.f32 %v60, %v267
  %v269 = vpop.f32.mrf.mxu0
  %v270 = vadd.f32 %v60, %v269
  %271 = vmatmul.bf16.gmra.mxu0 %v189
  %v272 = vpop.f32.mrf.mxu0
  %v273 = vadd.f32 %v60, %v272
  %v274 = vpop.f32.mrf.mxu0
  %v275 = vadd.f32 %v60, %v274
  %276 = vmatmul.bf16.gmra.mxu0 %v192
  %v277 = vpop.f32.mrf.mxu0
  %v278 = vadd.f32 %v60, %v277
  %v279 = vpop.f32.mrf.mxu0
  %v280 = vadd.f32 %v60, %v279
  %281 = vmatmul.bf16.gmra.mxu0 %v195
  %v282 = vpop.f32.mrf.mxu0
  %v283 = vadd.f32 %v60, %v282
  %v284 = vpop.f32.mrf.mxu0
  %v285 = vadd.f32 %v60, %v284
  %286 = vmatmul.bf16.gmra.mxu0 %v198
  %v287 = vpop.f32.mrf.mxu0
  %v288 = vadd.f32 %v60, %v287
  %v289 = vpop.f32.mrf.mxu0
  %v290 = vadd.f32 %v60, %v289
  %291 = vmatmul.bf16.gmra.mxu0 %v201
  %v292 = vpop.f32.mrf.mxu0
  %v293 = vadd.f32 %v60, %v292
  %v294 = vpop.f32.mrf.mxu0
  %v295 = vadd.f32 %v60, %v294
  %296 = vmatmul.bf16.gmra.mxu0 %v204
  %v297 = vpop.f32.mrf.mxu0
  %v298 = vadd.f32 %v60, %v297
  %v299 = vpop.f32.mrf.mxu0
  %v300 = vadd.f32 %v60, %v299
  %301 = vdwg.mxu0
  %v302 = vmax.f32 %v223, 0.0
  %v303 = vmax.f32 %v225, 0.0
  %v304 = vmax.f32 %v228, 0.0
  %v305 = vmax.f32 %v230, 0.0
  %v306 = vmax.f32 %v233, 0.0
  %v307 = vmax.f32 %v235, 0.0
  %v308 = vmax.f32 %v238, 0.0
  %v309 = vmax.f32 %v240, 0.0
  %v310 = vmax.f32 %v243, 0.0
  %v311 = vmax.f32 %v245, 0.0
  %v312 = vmax.f32 %v248, 0.0
  %v313 = vmax.f32 %v250, 0.0
  %v314 = vmax.f32 %v253, 0.0
  %v315 = vmax.f32 %v255, 0.0
  %v316 = vmax.f32 %v258, 0.0
  %v317 = vmax.f32 %v260, 0.0
  %v318 = vmax.f32 %v263, 0.0
  %v319 = vmax.f32 %v265, 0.0
  %v320 = vmax.f32 %v268, 0.0
  %v321 = vmax.f32 %v270, 0.0
  %v322 = vmax.f32 %v273, 0.0
  %v323 = vmax.f32 %v275, 0.0
  %v324 = vmax.f32 %v278, 0.0
  %v325 = vmax.f32 %v280, 0.0
  %v326 = vmax.f32 %v283, 0.0
  %v327 = vmax.f32 %v285, 0.0
  %v328 = vmax.f32 %v288, 0.0
  %v329 = vmax.f32 %v290, 0.0
  %v330 = vmax.f32 %v293, 0.0
  %v331 = vmax.f32 %v295, 0.0
  %v332 = vmax.f32 %v298, 0.0
  %v333 = vmax.f32 %v300, 0.0
  %v334 = vpack.c.bf16 %v303, %v302
  %v335 = vpack.c.bf16 %v305, %v304
  %v336 = vpack.c.bf16 %v307, %v306
  %v337 = vpack.c.bf16 %v309, %v308
  %v338 = vpack.c.bf16 %v311, %v310
  %v339 = vpack.c.bf16 %v313, %v312
  %v340 = vpack.c.bf16 %v315, %v314
  %v341 = vpack.c.bf16 %v317, %v316
  %v342 = vpack.c.bf16 %v319, %v318
  %v343 = vpack.c.bf16 %v321, %v320
  %v344 = vpack.c.bf16 %v323, %v322
  %v345 = vpack.c.bf16 %v325, %v324
  %v346 = vpack.c.bf16 %v327, %v326
  %v347 = vpack.c.bf16 %v329, %v328
  %v348 = vpack.c.bf16 %v331, %v330
  %v349 = vpack.c.bf16 %v333, %v332
  %v350 = vld [vmem:[%s3] sm:$0xf]
  %v351 = vld [vmem:[%s3 + $0x4] sm:$0xf]
  %v352 = vld [vmem:[%s3 + $0x8] sm:$0xf]
  %v353 = vld [vmem:[%s3 + $0xc] sm:$0xf]
  %v354 = vld [vmem:[%s3 + $0x10] sm:$0xf]
  %v355 = vld [vmem:[%s3 + $0x14] sm:$0xf]
  %v356 = vld [vmem:[%s3 + $0x18] sm:$0xf]
  %v357 = vld [vmem:[%s3 + $0x1c] sm:$0xf]
  %v358 = vld [vmem:[%s3 + $0x20] sm:$0xf]
  %v359 = vld [vmem:[%s3 + $0x24] sm:$0xf]
  %v360 = vld [vmem:[%s3 + $0x28] sm:$0xf]
  %v361 = vld [vmem:[%s3 + $0x2c] sm:$0xf]
  %v362 = vld [vmem:[%s3 + $0x30] sm:$0xf]
  %v363 = vld [vmem:[%s3 + $0x34] sm:$0xf]
  %v364 = vld [vmem:[%s3 + $0x38] sm:$0xf]
  %v365 = vld [vmem:[%s3 + $0x3c] sm:$0xf]
  %v366 = vld [vmem:[%s4] sm:$0x1]
  %v368 = vperm.slane %v366, 0
  %v386 = vunpack.c.l.b16 %v350
  %v387 = vunpack.c.l.b16 %v351
  %v388 = vunpack.c.l.b16 %v352
  %v389 = vunpack.c.l.b16 %v353
  %v390 = vunpack.c.l.b16 %v354
  %v391 = vunpack.c.l.b16 %v355
  %v392 = vunpack.c.l.b16 %v356
  %v393 = vunpack.c.l.b16 %v357
  %v394 = vunpack.c.l.b16 %v358
  %v395 = vunpack.c.l.b16 %v359
  %v396 = vunpack.c.l.b16 %v360
  %v397 = vunpack.c.l.b16 %v361
  %v398 = vunpack.c.l.b16 %v362
  %v399 = vunpack.c.l.b16 %v363
  %v400 = vunpack.c.l.b16 %v364
  %v401 = vunpack.c.l.b16 %v365
  %v402 = vpack.c.b16 %v387, %v386
  %v403 = vpack.c.b16 %v389, %v388
  %v404 = vpack.c.b16 %v391, %v390
  %v405 = vpack.c.b16 %v393, %v392
  %v406 = vpack.c.b16 %v395, %v394
  %v407 = vpack.c.b16 %v397, %v396
  %v408 = vpack.c.b16 %v399, %v398
  %v409 = vpack.c.b16 %v401, %v400
  %418 = vmatpush.bf16.msra.mxu0 %v409
  %419 = vmatpush.bf16.msra.mxu0 %v408
  %420 = vmatpush.bf16.msra.mxu0 %v407
  %421 = vmatpush.bf16.msra.mxu0 %v406
  %422 = vmatpush.bf16.msra.mxu0 %v405
  %423 = vmatpush.bf16.msra.mxu0 %v404
  %424 = vmatpush.bf16.msra.mxu0 %v403
  %425 = vmatpush.bf16.msra.mxu0 %v402
  %426 = vmatmul.bf16.gmra.mxu0 %v334
  %v427 = vpop.f32.mrf.mxu0
  %v428 = vadd.f32 %v368, %v427
  %v429 = vpop.f32.mrf.mxu0
  %v430 = vadd.f32 %v368, %v429
  %431 = vmatmul.bf16.gmra.mxu0 %v335
  %v432 = vpop.f32.mrf.mxu0
  %v433 = vadd.f32 %v368, %v432
  %v434 = vpop.f32.mrf.mxu0
  %v435 = vadd.f32 %v368, %v434
  %436 = vmatmul.bf16.gmra.mxu0 %v336
  %v437 = vpop.f32.mrf.mxu0
  %v438 = vadd.f32 %v368, %v437
  %v439 = vpop.f32.mrf.mxu0
  %v440 = vadd.f32 %v368, %v439
  %441 = vmatmul.bf16.gmra.mxu0 %v337
  %v442 = vpop.f32.mrf.mxu0
  %v443 = vadd.f32 %v368, %v442
  %v444 = vpop.f32.mrf.mxu0
  %v445 = vadd.f32 %v368, %v444
  %446 = vmatmul.bf16.gmra.mxu0 %v338
  %v447 = vpop.f32.mrf.mxu0
  %v448 = vadd.f32 %v368, %v447
  %v449 = vpop.f32.mrf.mxu0
  %v450 = vadd.f32 %v368, %v449
  %451 = vmatmul.bf16.gmra.mxu0 %v339
  %v452 = vpop.f32.mrf.mxu0
  %v453 = vadd.f32 %v368, %v452
  %v454 = vpop.f32.mrf.mxu0
  %v455 = vadd.f32 %v368, %v454
  %456 = vmatmul.bf16.gmra.mxu0 %v340
  %v457 = vpop.f32.mrf.mxu0
  %v458 = vadd.f32 %v368, %v457
  %v459 = vpop.f32.mrf.mxu0
  %v460 = vadd.f32 %v368, %v459
  %461 = vmatmul.bf16.gmra.mxu0 %v341
  %v462 = vpop.f32.mrf.mxu0
  %v463 = vadd.f32 %v368, %v462
  %v464 = vpop.f32.mrf.mxu0
  %v465 = vadd.f32 %v368, %v464
  %466 = vmatmul.bf16.gmra.mxu0 %v342
  %v467 = vpop.f32.mrf.mxu0
  %v468 = vadd.f32 %v368, %v467
  %v469 = vpop.f32.mrf.mxu0
  %v470 = vadd.f32 %v368, %v469
  %471 = vmatmul.bf16.gmra.mxu0 %v343
  %v472 = vpop.f32.mrf.mxu0
  %v473 = vadd.f32 %v368, %v472
  %v474 = vpop.f32.mrf.mxu0
  %v475 = vadd.f32 %v368, %v474
  %476 = vmatmul.bf16.gmra.mxu0 %v344
  %v477 = vpop.f32.mrf.mxu0
  %v478 = vadd.f32 %v368, %v477
  %v479 = vpop.f32.mrf.mxu0
  %v480 = vadd.f32 %v368, %v479
  %481 = vmatmul.bf16.gmra.mxu0 %v345
  %v482 = vpop.f32.mrf.mxu0
  %v483 = vadd.f32 %v368, %v482
  %v484 = vpop.f32.mrf.mxu0
  %v485 = vadd.f32 %v368, %v484
  %486 = vmatmul.bf16.gmra.mxu0 %v346
  %v487 = vpop.f32.mrf.mxu0
  %v488 = vadd.f32 %v368, %v487
  %v489 = vpop.f32.mrf.mxu0
  %v490 = vadd.f32 %v368, %v489
  %491 = vmatmul.bf16.gmra.mxu0 %v347
  %v492 = vpop.f32.mrf.mxu0
  %v493 = vadd.f32 %v368, %v492
  %v494 = vpop.f32.mrf.mxu0
  %v495 = vadd.f32 %v368, %v494
  %496 = vmatmul.bf16.gmra.mxu0 %v348
  %v497 = vpop.f32.mrf.mxu0
  %v498 = vadd.f32 %v368, %v497
  %v499 = vpop.f32.mrf.mxu0
  %v500 = vadd.f32 %v368, %v499
  %501 = vmatmul.bf16.gmra.mxu0 %v349
  %v502 = vpop.f32.mrf.mxu0
  %v503 = vadd.f32 %v368, %v502
  %v504 = vpop.f32.mrf.mxu0
  %v505 = vadd.f32 %v368, %v504
  %506 = vdwg.mxu0
  %v507 = vmax.f32 %v428, 0.0
  %v508 = vmax.f32 %v430, 0.0
  %v509 = vmax.f32 %v433, 0.0
  %v510 = vmax.f32 %v435, 0.0
  %v511 = vmax.f32 %v438, 0.0
  %v512 = vmax.f32 %v440, 0.0
  %v513 = vmax.f32 %v443, 0.0
  %v514 = vmax.f32 %v445, 0.0
  %v515 = vmax.f32 %v448, 0.0
  %v516 = vmax.f32 %v450, 0.0
  %v517 = vmax.f32 %v453, 0.0
  %v518 = vmax.f32 %v455, 0.0
  %v519 = vmax.f32 %v458, 0.0
  %v520 = vmax.f32 %v460, 0.0
  %v521 = vmax.f32 %v463, 0.0
  %v522 = vmax.f32 %v465, 0.0
  %v523 = vmax.f32 %v468, 0.0
  %v524 = vmax.f32 %v470, 0.0
  %v525 = vmax.f32 %v473, 0.0
  %v526 = vmax.f32 %v475, 0.0
  %v527 = vmax.f32 %v478, 0.0
  %v528 = vmax.f32 %v480, 0.0
  %v529 = vmax.f32 %v483, 0.0
  %v530 = vmax.f32 %v485, 0.0
  %v531 = vmax.f32 %v488, 0.0
  %v532 = vmax.f32 %v490, 0.0
  %v533 = vmax.f32 %v493, 0.0
  %v534 = vmax.f32 %v495, 0.0
  %v535 = vmax.f32 %v498, 0.0
  %v536 = vmax.f32 %v500, 0.0
  %v537 = vmax.f32 %v503, 0.0
  %v538 = vmax.f32 %v505, 0.0
  %v539 = vpack.c.bf16 %v508, %v507
  %v540 = vpack.c.bf16 %v510, %v509
  %v541 = vpack.c.bf16 %v512, %v511
  %v542 = vpack.c.bf16 %v514, %v513
  %v543 = vpack.c.bf16 %v516, %v515
  %v544 = vpack.c.bf16 %v518, %v517
  %v545 = vpack.c.bf16 %v520, %v519
  %v546 = vpack.c.bf16 %v522, %v521
  %v547 = vpack.c.bf16 %v524, %v523
  %v548 = vpack.c.bf16 %v526, %v525
  %v549 = vpack.c.bf16 %v528, %v527
  %v550 = vpack.c.bf16 %v530, %v529
  %v551 = vpack.c.bf16 %v532, %v531
  %v552 = vpack.c.bf16 %v534, %v533
  %v553 = vpack.c.bf16 %v536, %v535
  %v554 = vpack.c.bf16 %v538, %v537
  %s555 = scalar_lea.vmem %s3, 64
  %v556 = vld [vmem:[%s555] sm:$0xf]
  %v557 = vld [vmem:[%s555 + $0x4] sm:$0xf]
  %v558 = vld [vmem:[%s555 + $0x8] sm:$0xf]
  %v559 = vld [vmem:[%s555 + $0xc] sm:$0xf]
  %v560 = vld [vmem:[%s555 + $0x10] sm:$0xf]
  %v561 = vld [vmem:[%s555 + $0x14] sm:$0xf]
  %v562 = vld [vmem:[%s555 + $0x18] sm:$0xf]
  %v563 = vld [vmem:[%s555 + $0x1c] sm:$0xf]
  %v564 = vld [vmem:[%s555 + $0x20] sm:$0xf]
  %v565 = vld [vmem:[%s555 + $0x24] sm:$0xf]
  %v566 = vld [vmem:[%s555 + $0x28] sm:$0xf]
  %v567 = vld [vmem:[%s555 + $0x2c] sm:$0xf]
  %v568 = vld [vmem:[%s555 + $0x30] sm:$0xf]
  %v569 = vld [vmem:[%s555 + $0x34] sm:$0xf]
  %v570 = vld [vmem:[%s555 + $0x38] sm:$0xf]
  %v571 = vld [vmem:[%s555 + $0x3c] sm:$0xf]
  %s572 = scalar_lea.vmem %s4, 1
  %v573 = vld [vmem:[%s572] sm:$0x1]
  %v575 = vperm.slane %v573, 0
  %v593 = vunpack.c.l.b16 %v556
  %v594 = vunpack.c.l.b16 %v557
  %v595 = vunpack.c.l.b16 %v558
  %v596 = vunpack.c.l.b16 %v559
  %v597 = vunpack.c.l.b16 %v560
  %v598 = vunpack.c.l.b16 %v561
  %v599 = vunpack.c.l.b16 %v562
  %v600 = vunpack.c.l.b16 %v563
  %v601 = vunpack.c.l.b16 %v564
  %v602 = vunpack.c.l.b16 %v565
  %v603 = vunpack.c.l.b16 %v566
  %v604 = vunpack.c.l.b16 %v567
  %v605 = vunpack.c.l.b16 %v568
  %v606 = vunpack.c.l.b16 %v569
  %v607 = vunpack.c.l.b16 %v570
  %v608 = vunpack.c.l.b16 %v571
  %v609 = vpack.c.b16 %v594, %v593
  %v610 = vpack.c.b16 %v596, %v595
  %v611 = vpack.c.b16 %v598, %v597
  %v612 = vpack.c.b16 %v600, %v599
  %v613 = vpack.c.b16 %v602, %v601
  %v614 = vpack.c.b16 %v604, %v603
  %v615 = vpack.c.b16 %v606, %v605
  %v616 = vpack.c.b16 %v608, %v607
  %625 = vmatpush.bf16.msra.mxu0 %v616
  %626 = vmatpush.bf16.msra.mxu0 %v615
  %627 = vmatpush.bf16.msra.mxu0 %v614
  %628 = vmatpush.bf16.msra.mxu0 %v613
  %629 = vmatpush.bf16.msra.mxu0 %v612
  %630 = vmatpush.bf16.msra.mxu0 %v611
  %631 = vmatpush.bf16.msra.mxu0 %v610
  %632 = vmatpush.bf16.msra.mxu0 %v609
  %633 = vmatmul.bf16.gmra.mxu0 %v539
  %v634 = vpop.f32.mrf.mxu0
  %v635 = vadd.f32 %v575, %v634
  %v636 = vpop.f32.mrf.mxu0
  %v637 = vadd.f32 %v575, %v636
  %638 = vmatmul.bf16.gmra.mxu0 %v540
  %v639 = vpop.f32.mrf.mxu0
  %v640 = vadd.f32 %v575, %v639
  %v641 = vpop.f32.mrf.mxu0
  %v642 = vadd.f32 %v575, %v641
  %643 = vmatmul.bf16.gmra.mxu0 %v541
  %v644 = vpop.f32.mrf.mxu0
  %v645 = vadd.f32 %v575, %v644
  %v646 = vpop.f32.mrf.mxu0
  %v647 = vadd.f32 %v575, %v646
  %648 = vmatmul.bf16.gmra.mxu0 %v542
  %v649 = vpop.f32.mrf.mxu0
  %v650 = vadd.f32 %v575, %v649
  %v651 = vpop.f32.mrf.mxu0
  %v652 = vadd.f32 %v575, %v651
  %653 = vmatmul.bf16.gmra.mxu0 %v543
  %v654 = vpop.f32.mrf.mxu0
  %v655 = vadd.f32 %v575, %v654
  %v656 = vpop.f32.mrf.mxu0
  %v657 = vadd.f32 %v575, %v656
  %658 = vmatmul.bf16.gmra.mxu0 %v544
  %v659 = vpop.f32.mrf.mxu0
  %v660 = vadd.f32 %v575, %v659
  %v661 = vpop.f32.mrf.mxu0
  %v662 = vadd.f32 %v575, %v661
  %663 = vmatmul.bf16.gmra.mxu0 %v545
  %v664 = vpop.f32.mrf.mxu0
  %v665 = vadd.f32 %v575, %v664
  %v666 = vpop.f32.mrf.mxu0
  %v667 = vadd.f32 %v575, %v666
  %668 = vmatmul.bf16.gmra.mxu0 %v546
  %v669 = vpop.f32.mrf.mxu0
  %v670 = vadd.f32 %v575, %v669
  %v671 = vpop.f32.mrf.mxu0
  %v672 = vadd.f32 %v575, %v671
  %673 = vmatmul.bf16.gmra.mxu0 %v547
  %v674 = vpop.f32.mrf.mxu0
  %v675 = vadd.f32 %v575, %v674
  %v676 = vpop.f32.mrf.mxu0
  %v677 = vadd.f32 %v575, %v676
  %678 = vmatmul.bf16.gmra.mxu0 %v548
  %v679 = vpop.f32.mrf.mxu0
  %v680 = vadd.f32 %v575, %v679
  %v681 = vpop.f32.mrf.mxu0
  %v682 = vadd.f32 %v575, %v681
  %683 = vmatmul.bf16.gmra.mxu0 %v549
  %v684 = vpop.f32.mrf.mxu0
  %v685 = vadd.f32 %v575, %v684
  %v686 = vpop.f32.mrf.mxu0
  %v687 = vadd.f32 %v575, %v686
  %688 = vmatmul.bf16.gmra.mxu0 %v550
  %v689 = vpop.f32.mrf.mxu0
  %v690 = vadd.f32 %v575, %v689
  %v691 = vpop.f32.mrf.mxu0
  %v692 = vadd.f32 %v575, %v691
  %693 = vmatmul.bf16.gmra.mxu0 %v551
  %v694 = vpop.f32.mrf.mxu0
  %v695 = vadd.f32 %v575, %v694
  %v696 = vpop.f32.mrf.mxu0
  %v697 = vadd.f32 %v575, %v696
  %698 = vmatmul.bf16.gmra.mxu0 %v552
  %v699 = vpop.f32.mrf.mxu0
  %v700 = vadd.f32 %v575, %v699
  %v701 = vpop.f32.mrf.mxu0
  %v702 = vadd.f32 %v575, %v701
  %703 = vmatmul.bf16.gmra.mxu0 %v553
  %v704 = vpop.f32.mrf.mxu0
  %v705 = vadd.f32 %v575, %v704
  %v706 = vpop.f32.mrf.mxu0
  %v707 = vadd.f32 %v575, %v706
  %708 = vmatmul.bf16.gmra.mxu0 %v554
  %v709 = vpop.f32.mrf.mxu0
  %v710 = vadd.f32 %v575, %v709
  %v711 = vpop.f32.mrf.mxu0
  %v712 = vadd.f32 %v575, %v711
  %713 = vdwg.mxu0
  %v714 = vmax.f32 %v635, 0.0
  %v715 = vmax.f32 %v637, 0.0
  %v716 = vmax.f32 %v640, 0.0
  %v717 = vmax.f32 %v642, 0.0
  %v718 = vmax.f32 %v645, 0.0
  %v719 = vmax.f32 %v647, 0.0
  %v720 = vmax.f32 %v650, 0.0
  %v721 = vmax.f32 %v652, 0.0
  %v722 = vmax.f32 %v655, 0.0
  %v723 = vmax.f32 %v657, 0.0
  %v724 = vmax.f32 %v660, 0.0
  %v725 = vmax.f32 %v662, 0.0
  %v726 = vmax.f32 %v665, 0.0
  %v727 = vmax.f32 %v667, 0.0
  %v728 = vmax.f32 %v670, 0.0
  %v729 = vmax.f32 %v672, 0.0
  %v730 = vmax.f32 %v675, 0.0
  %v731 = vmax.f32 %v677, 0.0
  %v732 = vmax.f32 %v680, 0.0
  %v733 = vmax.f32 %v682, 0.0
  %v734 = vmax.f32 %v685, 0.0
  %v735 = vmax.f32 %v687, 0.0
  %v736 = vmax.f32 %v690, 0.0
  %v737 = vmax.f32 %v692, 0.0
  %v738 = vmax.f32 %v695, 0.0
  %v739 = vmax.f32 %v697, 0.0
  %v740 = vmax.f32 %v700, 0.0
  %v741 = vmax.f32 %v702, 0.0
  %v742 = vmax.f32 %v705, 0.0
  %v743 = vmax.f32 %v707, 0.0
  %v744 = vmax.f32 %v710, 0.0
  %v745 = vmax.f32 %v712, 0.0
  %v746 = vrot.slane %v714, 4
  %v747 = vmax.f32 %v714, %v746
  %v748 = vrot.slane %v747, 2
  %v749 = vmax.f32 %v747, %v748
  %v750 = vrot.slane %v749, 1
  %v751 = vmax.f32 %v749, %v750
  %v752 = vrot.slane %v715, 4
  %v753 = vmax.f32 %v715, %v752
  %v754 = vrot.slane %v753, 2
  %v755 = vmax.f32 %v753, %v754
  %v756 = vrot.slane %v755, 1
  %v757 = vmax.f32 %v755, %v756
  %v758 = vrot.slane %v716, 4
  %v759 = vmax.f32 %v716, %v758
  %v760 = vrot.slane %v759, 2
  %v761 = vmax.f32 %v759, %v760
  %v762 = vrot.slane %v761, 1
  %v763 = vmax.f32 %v761, %v762
  %v764 = vrot.slane %v717, 4
  %v765 = vmax.f32 %v717, %v764
  %v766 = vrot.slane %v765, 2
  %v767 = vmax.f32 %v765, %v766
  %v768 = vrot.slane %v767, 1
  %v769 = vmax.f32 %v767, %v768
  %v770 = vrot.slane %v718, 4
  %v771 = vmax.f32 %v718, %v770
  %v772 = vrot.slane %v771, 2
  %v773 = vmax.f32 %v771, %v772
  %v774 = vrot.slane %v773, 1
  %v775 = vmax.f32 %v773, %v774
  %v776 = vrot.slane %v719, 4
  %v777 = vmax.f32 %v719, %v776
  %v778 = vrot.slane %v777, 2
  %v779 = vmax.f32 %v777, %v778
  %v780 = vrot.slane %v779, 1
  %v781 = vmax.f32 %v779, %v780
  %v782 = vrot.slane %v720, 4
  %v783 = vmax.f32 %v720, %v782
  %v784 = vrot.slane %v783, 2
  %v785 = vmax.f32 %v783, %v784
  %v786 = vrot.slane %v785, 1
  %v787 = vmax.f32 %v785, %v786
  %v788 = vrot.slane %v721, 4
  %v789 = vmax.f32 %v721, %v788
  %v790 = vrot.slane %v789, 2
  %v791 = vmax.f32 %v789, %v790
  %v792 = vrot.slane %v791, 1
  %v793 = vmax.f32 %v791, %v792
  %v794 = vrot.slane %v722, 4
  %v795 = vmax.f32 %v722, %v794
  %v796 = vrot.slane %v795, 2
  %v797 = vmax.f32 %v795, %v796
  %v798 = vrot.slane %v797, 1
  %v799 = vmax.f32 %v797, %v798
  %v800 = vrot.slane %v723, 4
  %v801 = vmax.f32 %v723, %v800
  %v802 = vrot.slane %v801, 2
  %v803 = vmax.f32 %v801, %v802
  %v804 = vrot.slane %v803, 1
  %v805 = vmax.f32 %v803, %v804
  %v806 = vrot.slane %v724, 4
  %v807 = vmax.f32 %v724, %v806
  %v808 = vrot.slane %v807, 2
  %v809 = vmax.f32 %v807, %v808
  %v810 = vrot.slane %v809, 1
  %v811 = vmax.f32 %v809, %v810
  %v812 = vrot.slane %v725, 4
  %v813 = vmax.f32 %v725, %v812
  %v814 = vrot.slane %v813, 2
  %v815 = vmax.f32 %v813, %v814
  %v816 = vrot.slane %v815, 1
  %v817 = vmax.f32 %v815, %v816
  %v818 = vrot.slane %v726, 4
  %v819 = vmax.f32 %v726, %v818
  %v820 = vrot.slane %v819, 2
  %v821 = vmax.f32 %v819, %v820
  %v822 = vrot.slane %v821, 1
  %v823 = vmax.f32 %v821, %v822
  %v824 = vrot.slane %v727, 4
  %v825 = vmax.f32 %v727, %v824
  %v826 = vrot.slane %v825, 2
  %v827 = vmax.f32 %v825, %v826
  %v828 = vrot.slane %v827, 1
  %v829 = vmax.f32 %v827, %v828
  %v830 = vrot.slane %v728, 4
  %v831 = vmax.f32 %v728, %v830
  %v832 = vrot.slane %v831, 2
  %v833 = vmax.f32 %v831, %v832
  %v834 = vrot.slane %v833, 1
  %v835 = vmax.f32 %v833, %v834
  %v836 = vrot.slane %v729, 4
  %v837 = vmax.f32 %v729, %v836
  %v838 = vrot.slane %v837, 2
  %v839 = vmax.f32 %v837, %v838
  %v840 = vrot.slane %v839, 1
  %v841 = vmax.f32 %v839, %v840
  %v842 = vrot.slane %v730, 4
  %v843 = vmax.f32 %v730, %v842
  %v844 = vrot.slane %v843, 2
  %v845 = vmax.f32 %v843, %v844
  %v846 = vrot.slane %v845, 1
  %v847 = vmax.f32 %v845, %v846
  %v848 = vrot.slane %v731, 4
  %v849 = vmax.f32 %v731, %v848
  %v850 = vrot.slane %v849, 2
  %v851 = vmax.f32 %v849, %v850
  %v852 = vrot.slane %v851, 1
  %v853 = vmax.f32 %v851, %v852
  %v854 = vrot.slane %v732, 4
  %v855 = vmax.f32 %v732, %v854
  %v856 = vrot.slane %v855, 2
  %v857 = vmax.f32 %v855, %v856
  %v858 = vrot.slane %v857, 1
  %v859 = vmax.f32 %v857, %v858
  %v860 = vrot.slane %v733, 4
  %v861 = vmax.f32 %v733, %v860
  %v862 = vrot.slane %v861, 2
  %v863 = vmax.f32 %v861, %v862
  %v864 = vrot.slane %v863, 1
  %v865 = vmax.f32 %v863, %v864
  %v866 = vrot.slane %v734, 4
  %v867 = vmax.f32 %v734, %v866
  %v868 = vrot.slane %v867, 2
  %v869 = vmax.f32 %v867, %v868
  %v870 = vrot.slane %v869, 1
  %v871 = vmax.f32 %v869, %v870
  %v872 = vrot.slane %v735, 4
  %v873 = vmax.f32 %v735, %v872
  %v874 = vrot.slane %v873, 2
  %v875 = vmax.f32 %v873, %v874
  %v876 = vrot.slane %v875, 1
  %v877 = vmax.f32 %v875, %v876
  %v878 = vrot.slane %v736, 4
  %v879 = vmax.f32 %v736, %v878
  %v880 = vrot.slane %v879, 2
  %v881 = vmax.f32 %v879, %v880
  %v882 = vrot.slane %v881, 1
  %v883 = vmax.f32 %v881, %v882
  %v884 = vrot.slane %v737, 4
  %v885 = vmax.f32 %v737, %v884
  %v886 = vrot.slane %v885, 2
  %v887 = vmax.f32 %v885, %v886
  %v888 = vrot.slane %v887, 1
  %v889 = vmax.f32 %v887, %v888
  %v890 = vrot.slane %v738, 4
  %v891 = vmax.f32 %v738, %v890
  %v892 = vrot.slane %v891, 2
  %v893 = vmax.f32 %v891, %v892
  %v894 = vrot.slane %v893, 1
  %v895 = vmax.f32 %v893, %v894
  %v896 = vrot.slane %v739, 4
  %v897 = vmax.f32 %v739, %v896
  %v898 = vrot.slane %v897, 2
  %v899 = vmax.f32 %v897, %v898
  %v900 = vrot.slane %v899, 1
  %v901 = vmax.f32 %v899, %v900
  %v902 = vrot.slane %v740, 4
  %v903 = vmax.f32 %v740, %v902
  %v904 = vrot.slane %v903, 2
  %v905 = vmax.f32 %v903, %v904
  %v906 = vrot.slane %v905, 1
  %v907 = vmax.f32 %v905, %v906
  %v908 = vrot.slane %v741, 4
  %v909 = vmax.f32 %v741, %v908
  %v910 = vrot.slane %v909, 2
  %v911 = vmax.f32 %v909, %v910
  %v912 = vrot.slane %v911, 1
  %v913 = vmax.f32 %v911, %v912
  %v914 = vrot.slane %v742, 4
  %v915 = vmax.f32 %v742, %v914
  %v916 = vrot.slane %v915, 2
  %v917 = vmax.f32 %v915, %v916
  %v918 = vrot.slane %v917, 1
  %v919 = vmax.f32 %v917, %v918
  %v920 = vrot.slane %v743, 4
  %v921 = vmax.f32 %v743, %v920
  %v922 = vrot.slane %v921, 2
  %v923 = vmax.f32 %v921, %v922
  %v924 = vrot.slane %v923, 1
  %v925 = vmax.f32 %v923, %v924
  %v926 = vrot.slane %v744, 4
  %v927 = vmax.f32 %v744, %v926
  %v928 = vrot.slane %v927, 2
  %v929 = vmax.f32 %v927, %v928
  %v930 = vrot.slane %v929, 1
  %v931 = vmax.f32 %v929, %v930
  %v932 = vrot.slane %v745, 4
  %v933 = vmax.f32 %v745, %v932
  %v934 = vrot.slane %v933, 2
  %v935 = vmax.f32 %v933, %v934
  %v936 = vrot.slane %v935, 1
  %v937 = vmax.f32 %v935, %v936
  %v938 = vpack.c.bf16 %v751, %v751
  %v939 = vpack.c.bf16 %v757, %v757
  %v940 = vpack.c.bf16 %v763, %v763
  %v941 = vpack.c.bf16 %v769, %v769
  %v942 = vpack.c.bf16 %v775, %v775
  %v943 = vpack.c.bf16 %v781, %v781
  %v944 = vpack.c.bf16 %v787, %v787
  %v945 = vpack.c.bf16 %v793, %v793
  %v946 = vpack.c.bf16 %v799, %v799
  %v947 = vpack.c.bf16 %v805, %v805
  %v948 = vpack.c.bf16 %v811, %v811
  %v949 = vpack.c.bf16 %v817, %v817
  %v950 = vpack.c.bf16 %v823, %v823
  %v951 = vpack.c.bf16 %v829, %v829
  %v952 = vpack.c.bf16 %v835, %v835
  %v953 = vpack.c.bf16 %v841, %v841
  %v954 = vpack.c.bf16 %v847, %v847
  %v955 = vpack.c.bf16 %v853, %v853
  %v956 = vpack.c.bf16 %v859, %v859
  %v957 = vpack.c.bf16 %v865, %v865
  %v958 = vpack.c.bf16 %v871, %v871
  %v959 = vpack.c.bf16 %v877, %v877
  %v960 = vpack.c.bf16 %v883, %v883
  %v961 = vpack.c.bf16 %v889, %v889
  %v962 = vpack.c.bf16 %v895, %v895
  %v963 = vpack.c.bf16 %v901, %v901
  %v964 = vpack.c.bf16 %v907, %v907
  %v965 = vpack.c.bf16 %v913, %v913
  %v966 = vpack.c.bf16 %v919, %v919
  %v967 = vpack.c.bf16 %v925, %v925
  %v968 = vpack.c.bf16 %v931, %v931
  %v969 = vpack.c.bf16 %v937, %v937
  %v1002 = vunpack.c.l.b16 %v938
  %v1003 = vunpack.c.l.b16 %v939
  %v1004 = vunpack.c.l.b16 %v940
  %v1005 = vunpack.c.l.b16 %v941
  %v1006 = vunpack.c.l.b16 %v942
  %v1007 = vunpack.c.l.b16 %v943
  %v1008 = vunpack.c.l.b16 %v944
  %v1009 = vunpack.c.l.b16 %v945
  %v1010 = vunpack.c.l.b16 %v946
  %v1011 = vunpack.c.l.b16 %v947
  %v1012 = vunpack.c.l.b16 %v948
  %v1013 = vunpack.c.l.b16 %v949
  %v1014 = vunpack.c.l.b16 %v950
  %v1015 = vunpack.c.l.b16 %v951
  %v1016 = vunpack.c.l.b16 %v952
  %v1017 = vunpack.c.l.b16 %v953
  %v1018 = vunpack.c.l.b16 %v954
  %v1019 = vunpack.c.l.b16 %v955
  %v1020 = vunpack.c.l.b16 %v956
  %v1021 = vunpack.c.l.b16 %v957
  %v1022 = vunpack.c.l.b16 %v958
  %v1023 = vunpack.c.l.b16 %v959
  %v1024 = vunpack.c.l.b16 %v960
  %v1025 = vunpack.c.l.b16 %v961
  %v1026 = vunpack.c.l.b16 %v962
  %v1027 = vunpack.c.l.b16 %v963
  %v1028 = vunpack.c.l.b16 %v964
  %v1029 = vunpack.c.l.b16 %v965
  %v1030 = vunpack.c.l.b16 %v966
  %v1031 = vunpack.c.l.b16 %v967
  %v1032 = vunpack.c.l.b16 %v968
  %v1033 = vunpack.c.l.b16 %v969
  %vm1034 = vcmask 1041409
  %v1035 = vsel %vm1034, %v1003, %v1002
  %vm1036 = vcmask 1042434
  %v1037 = vsel %vm1036, %v1004, %v1035
  %vm1038 = vcmask 1043459
  %v1039 = vsel %vm1038, %v1005, %v1037
  %vm1040 = vcmask 1044484
  %v1041 = vsel %vm1040, %v1006, %v1039
  %vm1042 = vcmask 1045509
  %v1043 = vsel %vm1042, %v1007, %v1041
  %vm1044 = vcmask 1046534
  %v1045 = vsel %vm1044, %v1008, %v1043
  %vm1046 = vcmask 1047559
  %v1047 = vsel %vm1046, %v1009, %v1045
  %v1048 = vsel %vm1034, %v1011, %v1010
  %v1049 = vsel %vm1036, %v1012, %v1048
  %v1050 = vsel %vm1038, %v1013, %v1049
  %v1051 = vsel %vm1040, %v1014, %v1050
  %v1052 = vsel %vm1042, %v1015, %v1051
  %v1053 = vsel %vm1044, %v1016, %v1052
  %v1054 = vsel %vm1046, %v1017, %v1053
  %v1055 = vsel %vm1034, %v1019, %v1018
  %v1056 = vsel %vm1036, %v1020, %v1055
  %v1057 = vsel %vm1038, %v1021, %v1056
  %v1058 = vsel %vm1040, %v1022, %v1057
  %v1059 = vsel %vm1042, %v1023, %v1058
  %v1060 = vsel %vm1044, %v1024, %v1059
  %v1061 = vsel %vm1046, %v1025, %v1060
  %v1062 = vsel %vm1034, %v1027, %v1026
  %v1063 = vsel %vm1036, %v1028, %v1062
  %v1064 = vsel %vm1038, %v1029, %v1063
  %v1065 = vsel %vm1040, %v1030, %v1064
  %v1066 = vsel %vm1042, %v1031, %v1065
  %v1067 = vsel %vm1044, %v1032, %v1066
  %v1068 = vsel %vm1046, %v1033, %v1067
  %v1069 = vpack.c.b16 %v1047, %v1047
  %v1070 = vpack.c.b16 %v1054, %v1054
  %v1071 = vpack.c.b16 %v1061, %v1061
  %v1072 = vpack.c.b16 %v1068, %v1068
  %1077 = vst [vmem:[%s5] sm:$0xf] %v1069
  %1078 = vst [vmem:[%s5 + $0x4] sm:$0xf] %v1070
  %1079 = vst [vmem:[%s5 + $0x8] sm:$0xf] %v1071
  %1080 = vst [vmem:[%s5 + $0xc] sm:$0xf] %v1072
  // Predicated region
  $region22: #{a_call__.7} parent=0 // pred_check
    _
  $region23: #{a_call__.7} parent=0 // pred_check_branch
    %1082 = sbr.rel (0) target = $region25
  $region24: #{a_call__.7} parent=0 // pred_region
    _
  $region25: #{a_call__.7} parent=0 // pred_fallthru
    _
  // Predicated region
  $region26: #{a_call__.7} parent=0 // pred_check
    _
  $region27: #{a_call__.7} parent=0 // pred_check_branch
    %1084 = sbr.rel (0) target = $region29
  $region28: #{a_call__.7} parent=0 // pred_region
    _
  $region29: #{a_call__.7} parent=0 // pred_fallthru
    _

// kernel: a_call__.8
$region0: #{a_call__.8}
  #allocation0 [shape = 'u32[]', space=smem, size = 0x4, offset = 0x4, fixed_abs, tag = 'smem constant byte address 0x4 - core index']
  #allocation1 [shape = 'u32[72,128]{1,0:T(1,128)}', space=vmem, size = 0x9000, scoped, tag = 'internal scratch']
  %s0 = inlined_call_operand.vmem [shape: bf16[128,67], index: 0, kind: input, shape index: {}]
  %s1 = inlined_call_operand.vmem [shape: bf16[67,128], index: 1, kind: input, shape index: {}]
  %s2 = inlined_call_operand.vmem [shape: f32[1,128], index: 2, kind: input, shape index: {}]
  %s3 = inlined_call_operand.vmem [shape: bf16[2,128,128], index: 3, kind: input, shape index: {}]
  %s4 = inlined_call_operand.vmem [shape: f32[2,1,128], index: 4, kind: input, shape index: {}]
  %s5 = inlined_call_operand.vmem [shape: bf16[16,128], index: 5, kind: output, shape index: {}]
  %s6 = sld [smem:[#allocation0]]
  $region30: #{a_call__.8} parent=0
    _
  %s8 = ssub.s32 1, %s6
  %s9 = scalar_select 0, %s8, %s6
  // Predicated region
  $region2: #{a_call__.8} parent=0 // pred_check
    _
  $region3: #{a_call__.8} parent=0 // pred_check_branch
    %11 = sbr.rel (0) target = $region5
  $region4: #{a_call__.8} parent=0 // pred_region
    _
  $region5: #{a_call__.8} parent=0 // pred_fallthru
    _
  // Predicated region
  $region6: #{a_call__.8} parent=0 // pred_check
    _
  $region7: #{a_call__.8} parent=0 // pred_check_branch
    %13 = sbr.rel (0) target = $region9
  $region8: #{a_call__.8} parent=0 // pred_region
    _
  $region9: #{a_call__.8} parent=0 // pred_fallthru
    _
  // Predicated region
  $region10: #{a_call__.8} parent=0 // pred_check
    _
  $region11: #{a_call__.8} parent=0 // pred_check_branch
    %15 = sbr.rel (0) target = $region13
  $region12: #{a_call__.8} parent=0 // pred_region
    _
  $region13: #{a_call__.8} parent=0 // pred_fallthru
    _
  // Predicated region
  $region14: #{a_call__.8} parent=0 // pred_check
    _
  $region15: #{a_call__.8} parent=0 // pred_check_branch
    %17 = sbr.rel (0) target = $region17
  $region16: #{a_call__.8} parent=0 // pred_region
    _
  $region17: #{a_call__.8} parent=0 // pred_fallthru
    _
  // Predicated region
  $region18: #{a_call__.8} parent=0 // pred_check
    _
  $region19: #{a_call__.8} parent=0 // pred_check_branch
    %19 = sbr.rel (0) target = $region21
  $region20: #{a_call__.8} parent=0 // pred_region
    _
  $region21: #{a_call__.8} parent=0 // pred_fallthru
    _
  %v21 = vld [vmem:[%s0] sm:$0xf]
  %v22 = vld [vmem:[%s0 + $0x4] sm:$0xf]
  %v23 = vld [vmem:[%s0 + $0x8] sm:$0xf]
  %v24 = vld [vmem:[%s0 + $0xc] sm:$0xf]
  %v25 = vld [vmem:[%s0 + $0x10] sm:$0xf]
  %v26 = vld [vmem:[%s0 + $0x14] sm:$0xf]
  %v27 = vld [vmem:[%s0 + $0x18] sm:$0xf]
  %v28 = vld [vmem:[%s0 + $0x1c] sm:$0xf]
  %v29 = vld [vmem:[%s0 + $0x20] sm:$0xf]
  %v30 = vld [vmem:[%s0 + $0x24] sm:$0xf]
  %v31 = vld [vmem:[%s0 + $0x28] sm:$0xf]
  %v32 = vld [vmem:[%s0 + $0x2c] sm:$0xf]
  %v33 = vld [vmem:[%s0 + $0x30] sm:$0xf]
  %v34 = vld [vmem:[%s0 + $0x34] sm:$0xf]
  %v35 = vld [vmem:[%s0 + $0x38] sm:$0xf]
  %v36 = vld [vmem:[%s0 + $0x3c] sm:$0xf]
  %v37 = vld [vmem:[%s1] sm:$0xf]
  %v38 = vld [vmem:[%s1 + $0x4] sm:$0xf]
  %v39 = vld [vmem:[%s1 + $0x8] sm:$0xf]
  %v40 = vld [vmem:[%s1 + $0xc] sm:$0xf]
  %v41 = vld [vmem:[%s1 + $0x10] sm:$0xf]
  %v42 = vld [vmem:[%s1 + $0x14] sm:$0xf]
  %v43 = vld [vmem:[%s1 + $0x18] sm:$0xf]
  %v44 = vld [vmem:[%s1 + $0x1c] sm:$0xf]
  %v45 = vld [vmem:[%s1 + $0x20] sm:$0x3]
  %v46 = vld [vmem:[%s2] sm:$0x1]
  %v48 = vperm.slane %v46, 0
  %v66 = vunpack.c.l.b16 %v21
  %v67 = vunpack.c.l.b16 %v22
  %v68 = vunpack.c.l.b16 %v23
  %v69 = vunpack.c.l.b16 %v24
  %v70 = vunpack.c.l.b16 %v25
  %v71 = vunpack.c.l.b16 %v26
  %v72 = vunpack.c.l.b16 %v27
  %v73 = vunpack.c.l.b16 %v28
  %v74 = vunpack.c.l.b16 %v29
  %v75 = vunpack.c.l.b16 %v30
  %v76 = vunpack.c.l.b16 %v31
  %v77 = vunpack.c.l.b16 %v32
  %v78 = vunpack.c.l.b16 %v33
  %v79 = vunpack.c.l.b16 %v34
  %v80 = vunpack.c.l.b16 %v35
  %v81 = vunpack.c.l.b16 %v36
  %v82 = vpack.c.b16 %v67, %v66
  %v83 = vpack.c.b16 %v69, %v68
  %v84 = vpack.c.b16 %v71, %v70
  %v85 = vpack.c.b16 %v73, %v72
  %v86 = vpack.c.b16 %v75, %v74
  %v87 = vpack.c.b16 %v77, %v76
  %v88 = vpack.c.b16 %v79, %v78
  %v89 = vpack.c.b16 %v81, %v80
  %v99 = vunpack.c.l.b16 %v37
  %v100 = vunpack.c.l.b16 %v38
  %v101 = vunpack.c.l.b16 %v39
  %v102 = vunpack.c.l.b16 %v40
  %v103 = vunpack.c.l.b16 %v41
  %v104 = vunpack.c.l.b16 %v42
  %v105 = vunpack.c.l.b16 %v43
  %v106 = vunpack.c.l.b16 %v44
  %v107 = vunpack.c.l.b16 %v45
  %v108 = vpack.c.b16 %v100, %v99
  %v109 = vpack.c.b16 %v102, %v101
  %v110 = vpack.c.b16 %v104, %v103
  %v111 = vpack.c.b16 %v106, %v105
  %v112 = vpack.c.b16 %v107, %v107
  %vm117 = vcmask 547840
  %v119 = vsel %vm117, %v82, 0
  %v122 = vsel %vm117, %v83, 0
  %v125 = vsel %vm117, %v84, 0
  %v128 = vsel %vm117, %v85, 0
  %v131 = vsel %vm117, %v86, 0
  %v134 = vsel %vm117, %v87, 0
  %v137 = vsel %vm117, %v88, 0
  %v140 = vsel %vm117, %v89, 0
  %vm142 = vcmask 1040384
  %vm143 = vcmask 1041408
  %v144 = vsel %vm142, 4294967295, 65535
  %v145 = vsel %vm143, %v144, 0
  %v147 = vand.u32 %v112, %v145
  %149 = vmatpush.bf16.msra.mxu0 0
  %150 = vmatpush.bf16.msra.mxu0 0
  %151 = vmatpush.bf16.msra.mxu0 0
  %152 = vmatpush.bf16.msra.mxu0 %v147
  %153 = vmatpush.bf16.msra.mxu0 %v111
  %154 = vmatpush.bf16.msra.mxu0 %v110
  %155 = vmatpush.bf16.msra.mxu0 %v109
  %156 = vmatpush.bf16.msra.mxu0 %v108
  %157 = vmatmul.bf16.gmra.mxu0 %v119
  %v158 = vpop.f32.mrf.mxu0
  %v159 = vadd.f32 %v48, %v158
  %v160 = vpop.f32.mrf.mxu0
  %v161 = vadd.f32 %v48, %v160
  %162 = vmatmul.bf16.gmra.mxu0 %v122
  %v163 = vpop.f32.mrf.mxu0
  %v164 = vadd.f32 %v48, %v163
  %v165 = vpop.f32.mrf.mxu0
  %v166 = vadd.f32 %v48, %v165
  %167 = vmatmul.bf16.gmra.mxu0 %v125
  %v168 = vpop.f32.mrf.mxu0
  %v169 = vadd.f32 %v48, %v168
  %v170 = vpop.f32.mrf.mxu0
  %v171 = vadd.f32 %v48, %v170
  %172 = vmatmul.bf16.gmra.mxu0 %v128
  %v173 = vpop.f32.mrf.mxu0
  %v174 = vadd.f32 %v48, %v173
  %v175 = vpop.f32.mrf.mxu0
  %v176 = vadd.f32 %v48, %v175
  %177 = vmatmul.bf16.gmra.mxu0 %v131
  %v178 = vpop.f32.mrf.mxu0
  %v179 = vadd.f32 %v48, %v178
  %v180 = vpop.f32.mrf.mxu0
  %v181 = vadd.f32 %v48, %v180
  %182 = vmatmul.bf16.gmra.mxu0 %v134
  %v183 = vpop.f32.mrf.mxu0
  %v184 = vadd.f32 %v48, %v183
  %v185 = vpop.f32.mrf.mxu0
  %v186 = vadd.f32 %v48, %v185
  %187 = vmatmul.bf16.gmra.mxu0 %v137
  %v188 = vpop.f32.mrf.mxu0
  %v189 = vadd.f32 %v48, %v188
  %v190 = vpop.f32.mrf.mxu0
  %v191 = vadd.f32 %v48, %v190
  %192 = vmatmul.bf16.gmra.mxu0 %v140
  %v193 = vpop.f32.mrf.mxu0
  %v194 = vadd.f32 %v48, %v193
  %v195 = vpop.f32.mrf.mxu0
  %v196 = vadd.f32 %v48, %v195
  %197 = vdwg.mxu0
  %v198 = vmax.f32 %v159, 0.0
  %v199 = vmax.f32 %v161, 0.0
  %v200 = vmax.f32 %v164, 0.0
  %v201 = vmax.f32 %v166, 0.0
  %v202 = vmax.f32 %v169, 0.0
  %v203 = vmax.f32 %v171, 0.0
  %v204 = vmax.f32 %v174, 0.0
  %v205 = vmax.f32 %v176, 0.0
  %v206 = vmax.f32 %v179, 0.0
  %v207 = vmax.f32 %v181, 0.0
  %v208 = vmax.f32 %v184, 0.0
  %v209 = vmax.f32 %v186, 0.0
  %v210 = vmax.f32 %v189, 0.0
  %v211 = vmax.f32 %v191, 0.0
  %v212 = vmax.f32 %v194, 0.0
  %v213 = vmax.f32 %v196, 0.0
  %v214 = vpack.c.bf16 %v199, %v198
  %v215 = vpack.c.bf16 %v201, %v200
  %v216 = vpack.c.bf16 %v203, %v202
  %v217 = vpack.c.bf16 %v205, %v204
  %v218 = vpack.c.bf16 %v207, %v206
  %v219 = vpack.c.bf16 %v209, %v208
  %v220 = vpack.c.bf16 %v211, %v210
  %v221 = vpack.c.bf16 %v213, %v212
  %v222 = vld [vmem:[%s3] sm:$0xf]
  %v223 = vld [vmem:[%s3 + $0x4] sm:$0xf]
  %v224 = vld [vmem:[%s3 + $0x8] sm:$0xf]
  %v225 = vld [vmem:[%s3 + $0xc] sm:$0xf]
  %v226 = vld [vmem:[%s3 + $0x10] sm:$0xf]
  %v227 = vld [vmem:[%s3 + $0x14] sm:$0xf]
  %v228 = vld [vmem:[%s3 + $0x18] sm:$0xf]
  %v229 = vld [vmem:[%s3 + $0x1c] sm:$0xf]
  %v230 = vld [vmem:[%s3 + $0x20] sm:$0xf]
  %v231 = vld [vmem:[%s3 + $0x24] sm:$0xf]
  %v232 = vld [vmem:[%s3 + $0x28] sm:$0xf]
  %v233 = vld [vmem:[%s3 + $0x2c] sm:$0xf]
  %v234 = vld [vmem:[%s3 + $0x30] sm:$0xf]
  %v235 = vld [vmem:[%s3 + $0x34] sm:$0xf]
  %v236 = vld [vmem:[%s3 + $0x38] sm:$0xf]
  %v237 = vld [vmem:[%s3 + $0x3c] sm:$0xf]
  %v238 = vld [vmem:[%s4] sm:$0x1]
  %v240 = vperm.slane %v238, 0
  %v258 = vunpack.c.l.b16 %v222
  %v259 = vunpack.c.l.b16 %v223
  %v260 = vunpack.c.l.b16 %v224
  %v261 = vunpack.c.l.b16 %v225
  %v262 = vunpack.c.l.b16 %v226
  %v263 = vunpack.c.l.b16 %v227
  %v264 = vunpack.c.l.b16 %v228
  %v265 = vunpack.c.l.b16 %v229
  %v266 = vunpack.c.l.b16 %v230
  %v267 = vunpack.c.l.b16 %v231
  %v268 = vunpack.c.l.b16 %v232
  %v269 = vunpack.c.l.b16 %v233
  %v270 = vunpack.c.l.b16 %v234
  %v271 = vunpack.c.l.b16 %v235
  %v272 = vunpack.c.l.b16 %v236
  %v273 = vunpack.c.l.b16 %v237
  %v274 = vpack.c.b16 %v259, %v258
  %v275 = vpack.c.b16 %v261, %v260
  %v276 = vpack.c.b16 %v263, %v262
  %v277 = vpack.c.b16 %v265, %v264
  %v278 = vpack.c.b16 %v267, %v266
  %v279 = vpack.c.b16 %v269, %v268
  %v280 = vpack.c.b16 %v271, %v270
  %v281 = vpack.c.b16 %v273, %v272
  %290 = vmatpush.bf16.msra.mxu0 %v281
  %291 = vmatpush.bf16.msra.mxu0 %v280
  %292 = vmatpush.bf16.msra.mxu0 %v279
  %293 = vmatpush.bf16.msra.mxu0 %v278
  %294 = vmatpush.bf16.msra.mxu0 %v277
  %295 = vmatpush.bf16.msra.mxu0 %v276
  %296 = vmatpush.bf16.msra.mxu0 %v275
  %297 = vmatpush.bf16.msra.mxu0 %v274
  %298 = vmatmul.bf16.gmra.mxu0 %v214
  %v299 = vpop.f32.mrf.mxu0
  %v300 = vadd.f32 %v240, %v299
  %v301 = vpop.f32.mrf.mxu0
  %v302 = vadd.f32 %v240, %v301
  %303 = vmatmul.bf16.gmra.mxu0 %v215
  %v304 = vpop.f32.mrf.mxu0
  %v305 = vadd.f32 %v240, %v304
  %v306 = vpop.f32.mrf.mxu0
  %v307 = vadd.f32 %v240, %v306
  %308 = vmatmul.bf16.gmra.mxu0 %v216
  %v309 = vpop.f32.mrf.mxu0
  %v310 = vadd.f32 %v240, %v309
  %v311 = vpop.f32.mrf.mxu0
  %v312 = vadd.f32 %v240, %v311
  %313 = vmatmul.bf16.gmra.mxu0 %v217
  %v314 = vpop.f32.mrf.mxu0
  %v315 = vadd.f32 %v240, %v314
  %v316 = vpop.f32.mrf.mxu0
  %v317 = vadd.f32 %v240, %v316
  %318 = vmatmul.bf16.gmra.mxu0 %v218
  %v319 = vpop.f32.mrf.mxu0
  %v320 = vadd.f32 %v240, %v319
  %v321 = vpop.f32.mrf.mxu0
  %v322 = vadd.f32 %v240, %v321
  %323 = vmatmul.bf16.gmra.mxu0 %v219
  %v324 = vpop.f32.mrf.mxu0
  %v325 = vadd.f32 %v240, %v324
  %v326 = vpop.f32.mrf.mxu0
  %v327 = vadd.f32 %v240, %v326
  %328 = vmatmul.bf16.gmra.mxu0 %v220
  %v329 = vpop.f32.mrf.mxu0
  %v330 = vadd.f32 %v240, %v329
  %v331 = vpop.f32.mrf.mxu0
  %v332 = vadd.f32 %v240, %v331
  %333 = vmatmul.bf16.gmra.mxu0 %v221
  %v334 = vpop.f32.mrf.mxu0
  %v335 = vadd.f32 %v240, %v334
  %v336 = vpop.f32.mrf.mxu0
  %v337 = vadd.f32 %v240, %v336
  %338 = vdwg.mxu0
  %v339 = vmax.f32 %v300, 0.0
  %v340 = vmax.f32 %v302, 0.0
  %v341 = vmax.f32 %v305, 0.0
  %v342 = vmax.f32 %v307, 0.0
  %v343 = vmax.f32 %v310, 0.0
  %v344 = vmax.f32 %v312, 0.0
  %v345 = vmax.f32 %v315, 0.0
  %v346 = vmax.f32 %v317, 0.0
  %v347 = vmax.f32 %v320, 0.0
  %v348 = vmax.f32 %v322, 0.0
  %v349 = vmax.f32 %v325, 0.0
  %v350 = vmax.f32 %v327, 0.0
  %v351 = vmax.f32 %v330, 0.0
  %v352 = vmax.f32 %v332, 0.0
  %v353 = vmax.f32 %v335, 0.0
  %v354 = vmax.f32 %v337, 0.0
  %v355 = vpack.c.bf16 %v340, %v339
  %v356 = vpack.c.bf16 %v342, %v341
  %v357 = vpack.c.bf16 %v344, %v343
  %v358 = vpack.c.bf16 %v346, %v345
  %v359 = vpack.c.bf16 %v348, %v347
  %v360 = vpack.c.bf16 %v350, %v349
  %v361 = vpack.c.bf16 %v352, %v351
  %v362 = vpack.c.bf16 %v354, %v353
  %s363 = scalar_lea.vmem %s3, 64
  %v364 = vld [vmem:[%s363] sm:$0xf]
  %v365 = vld [vmem:[%s363 + $0x4] sm:$0xf]
  %v366 = vld [vmem:[%s363 + $0x8] sm:$0xf]
  %v367 = vld [vmem:[%s363 + $0xc] sm:$0xf]
  %v368 = vld [vmem:[%s363 + $0x10] sm:$0xf]
  %v369 = vld [vmem:[%s363 + $0x14] sm:$0xf]
  %v370 = vld [vmem:[%s363 + $0x18] sm:$0xf]
  %v371 = vld [vmem:[%s363 + $0x1c] sm:$0xf]
  %v372 = vld [vmem:[%s363 + $0x20] sm:$0xf]
  %v373 = vld [vmem:[%s363 + $0x24] sm:$0xf]
  %v374 = vld [vmem:[%s363 + $0x28] sm:$0xf]
  %v375 = vld [vmem:[%s363 + $0x2c] sm:$0xf]
  %v376 = vld [vmem:[%s363 + $0x30] sm:$0xf]
  %v377 = vld [vmem:[%s363 + $0x34] sm:$0xf]
  %v378 = vld [vmem:[%s363 + $0x38] sm:$0xf]
  %v379 = vld [vmem:[%s363 + $0x3c] sm:$0xf]
  %s380 = scalar_lea.vmem %s4, 1
  %v381 = vld [vmem:[%s380] sm:$0x1]
  %v383 = vperm.slane %v381, 0
  %v401 = vunpack.c.l.b16 %v364
  %v402 = vunpack.c.l.b16 %v365
  %v403 = vunpack.c.l.b16 %v366
  %v404 = vunpack.c.l.b16 %v367
  %v405 = vunpack.c.l.b16 %v368
  %v406 = vunpack.c.l.b16 %v369
  %v407 = vunpack.c.l.b16 %v370
  %v408 = vunpack.c.l.b16 %v371
  %v409 = vunpack.c.l.b16 %v372
  %v410 = vunpack.c.l.b16 %v373
  %v411 = vunpack.c.l.b16 %v374
  %v412 = vunpack.c.l.b16 %v375
  %v413 = vunpack.c.l.b16 %v376
  %v414 = vunpack.c.l.b16 %v377
  %v415 = vunpack.c.l.b16 %v378
  %v416 = vunpack.c.l.b16 %v379
  %v417 = vpack.c.b16 %v402, %v401
  %v418 = vpack.c.b16 %v404, %v403
  %v419 = vpack.c.b16 %v406, %v405
  %v420 = vpack.c.b16 %v408, %v407
  %v421 = vpack.c.b16 %v410, %v409
  %v422 = vpack.c.b16 %v412, %v411
  %v423 = vpack.c.b16 %v414, %v413
  %v424 = vpack.c.b16 %v416, %v415
  %433 = vmatpush.bf16.msra.mxu0 %v424
  %434 = vmatpush.bf16.msra.mxu0 %v423
  %435 = vmatpush.bf16.msra.mxu0 %v422
  %436 = vmatpush.bf16.msra.mxu0 %v421
  %437 = vmatpush.bf16.msra.mxu0 %v420
  %438 = vmatpush.bf16.msra.mxu0 %v419
  %439 = vmatpush.bf16.msra.mxu0 %v418
  %440 = vmatpush.bf16.msra.mxu0 %v417
  %441 = vmatmul.bf16.gmra.mxu0 %v355
  %v442 = vpop.f32.mrf.mxu0
  %v443 = vadd.f32 %v383, %v442
  %v444 = vpop.f32.mrf.mxu0
  %v445 = vadd.f32 %v383, %v444
  %446 = vmatmul.bf16.gmra.mxu0 %v356
  %v447 = vpop.f32.mrf.mxu0
  %v448 = vadd.f32 %v383, %v447
  %v449 = vpop.f32.mrf.mxu0
  %v450 = vadd.f32 %v383, %v449
  %451 = vmatmul.bf16.gmra.mxu0 %v357
  %v452 = vpop.f32.mrf.mxu0
  %v453 = vadd.f32 %v383, %v452
  %v454 = vpop.f32.mrf.mxu0
  %v455 = vadd.f32 %v383, %v454
  %456 = vmatmul.bf16.gmra.mxu0 %v358
  %v457 = vpop.f32.mrf.mxu0
  %v458 = vadd.f32 %v383, %v457
  %v459 = vpop.f32.mrf.mxu0
  %v460 = vadd.f32 %v383, %v459
  %461 = vmatmul.bf16.gmra.mxu0 %v359
  %v462 = vpop.f32.mrf.mxu0
  %v463 = vadd.f32 %v383, %v462
  %v464 = vpop.f32.mrf.mxu0
  %v465 = vadd.f32 %v383, %v464
  %466 = vmatmul.bf16.gmra.mxu0 %v360
  %v467 = vpop.f32.mrf.mxu0
  %v468 = vadd.f32 %v383, %v467
  %v469 = vpop.f32.mrf.mxu0
  %v470 = vadd.f32 %v383, %v469
  %471 = vmatmul.bf16.gmra.mxu0 %v361
  %v472 = vpop.f32.mrf.mxu0
  %v473 = vadd.f32 %v383, %v472
  %v474 = vpop.f32.mrf.mxu0
  %v475 = vadd.f32 %v383, %v474
  %476 = vmatmul.bf16.gmra.mxu0 %v362
  %v477 = vpop.f32.mrf.mxu0
  %v478 = vadd.f32 %v383, %v477
  %v479 = vpop.f32.mrf.mxu0
  %v480 = vadd.f32 %v383, %v479
  %481 = vdwg.mxu0
  %v482 = vmax.f32 %v443, 0.0
  %v483 = vmax.f32 %v445, 0.0
  %v484 = vmax.f32 %v448, 0.0
  %v485 = vmax.f32 %v450, 0.0
  %v486 = vmax.f32 %v453, 0.0
  %v487 = vmax.f32 %v455, 0.0
  %v488 = vmax.f32 %v458, 0.0
  %v489 = vmax.f32 %v460, 0.0
  %v490 = vmax.f32 %v463, 0.0
  %v491 = vmax.f32 %v465, 0.0
  %v492 = vmax.f32 %v468, 0.0
  %v493 = vmax.f32 %v470, 0.0
  %v494 = vmax.f32 %v473, 0.0
  %v495 = vmax.f32 %v475, 0.0
  %v496 = vmax.f32 %v478, 0.0
  %v497 = vmax.f32 %v480, 0.0
  %v498 = vrot.slane %v482, 4
  %v499 = vmax.f32 %v482, %v498
  %v500 = vrot.slane %v499, 2
  %v501 = vmax.f32 %v499, %v500
  %v502 = vrot.slane %v501, 1
  %v503 = vmax.f32 %v501, %v502
  %v504 = vrot.slane %v483, 4
  %v505 = vmax.f32 %v483, %v504
  %v506 = vrot.slane %v505, 2
  %v507 = vmax.f32 %v505, %v506
  %v508 = vrot.slane %v507, 1
  %v509 = vmax.f32 %v507, %v508
  %v510 = vrot.slane %v484, 4
  %v511 = vmax.f32 %v484, %v510
  %v512 = vrot.slane %v511, 2
  %v513 = vmax.f32 %v511, %v512
  %v514 = vrot.slane %v513, 1
  %v515 = vmax.f32 %v513, %v514
  %v516 = vrot.slane %v485, 4
  %v517 = vmax.f32 %v485, %v516
  %v518 = vrot.slane %v517, 2
  %v519 = vmax.f32 %v517, %v518
  %v520 = vrot.slane %v519, 1
  %v521 = vmax.f32 %v519, %v520
  %v522 = vrot.slane %v486, 4
  %v523 = vmax.f32 %v486, %v522
  %v524 = vrot.slane %v523, 2
  %v525 = vmax.f32 %v523, %v524
  %v526 = vrot.slane %v525, 1
  %v527 = vmax.f32 %v525, %v526
  %v528 = vrot.slane %v487, 4
  %v529 = vmax.f32 %v487, %v528
  %v530 = vrot.slane %v529, 2
  %v531 = vmax.f32 %v529, %v530
  %v532 = vrot.slane %v531, 1
  %v533 = vmax.f32 %v531, %v532
  %v534 = vrot.slane %v488, 4
  %v535 = vmax.f32 %v488, %v534
  %v536 = vrot.slane %v535, 2
  %v537 = vmax.f32 %v535, %v536
  %v538 = vrot.slane %v537, 1
  %v539 = vmax.f32 %v537, %v538
  %v540 = vrot.slane %v489, 4
  %v541 = vmax.f32 %v489, %v540
  %v542 = vrot.slane %v541, 2
  %v543 = vmax.f32 %v541, %v542
  %v544 = vrot.slane %v543, 1
  %v545 = vmax.f32 %v543, %v544
  %v546 = vrot.slane %v490, 4
  %v547 = vmax.f32 %v490, %v546
  %v548 = vrot.slane %v547, 2
  %v549 = vmax.f32 %v547, %v548
  %v550 = vrot.slane %v549, 1
  %v551 = vmax.f32 %v549, %v550
  %v552 = vrot.slane %v491, 4
  %v553 = vmax.f32 %v491, %v552
  %v554 = vrot.slane %v553, 2
  %v555 = vmax.f32 %v553, %v554
  %v556 = vrot.slane %v555, 1
  %v557 = vmax.f32 %v555, %v556
  %v558 = vrot.slane %v492, 4
  %v559 = vmax.f32 %v492, %v558
  %v560 = vrot.slane %v559, 2
  %v561 = vmax.f32 %v559, %v560
  %v562 = vrot.slane %v561, 1
  %v563 = vmax.f32 %v561, %v562
  %v564 = vrot.slane %v493, 4
  %v565 = vmax.f32 %v493, %v564
  %v566 = vrot.slane %v565, 2
  %v567 = vmax.f32 %v565, %v566
  %v568 = vrot.slane %v567, 1
  %v569 = vmax.f32 %v567, %v568
  %v570 = vrot.slane %v494, 4
  %v571 = vmax.f32 %v494, %v570
  %v572 = vrot.slane %v571, 2
  %v573 = vmax.f32 %v571, %v572
  %v574 = vrot.slane %v573, 1
  %v575 = vmax.f32 %v573, %v574
  %v576 = vrot.slane %v495, 4
  %v577 = vmax.f32 %v495, %v576
  %v578 = vrot.slane %v577, 2
  %v579 = vmax.f32 %v577, %v578
  %v580 = vrot.slane %v579, 1
  %v581 = vmax.f32 %v579, %v580
  %v582 = vrot.slane %v496, 4
  %v583 = vmax.f32 %v496, %v582
  %v584 = vrot.slane %v583, 2
  %v585 = vmax.f32 %v583, %v584
  %v586 = vrot.slane %v585, 1
  %v587 = vmax.f32 %v585, %v586
  %v588 = vrot.slane %v497, 4
  %v589 = vmax.f32 %v497, %v588
  %v590 = vrot.slane %v589, 2
  %v591 = vmax.f32 %v589, %v590
  %v592 = vrot.slane %v591, 1
  %v593 = vmax.f32 %v591, %v592
  %v594 = vpack.c.bf16 %v503, %v503
  %v595 = vpack.c.bf16 %v509, %v509
  %v596 = vpack.c.bf16 %v515, %v515
  %v597 = vpack.c.bf16 %v521, %v521
  %v598 = vpack.c.bf16 %v527, %v527
  %v599 = vpack.c.bf16 %v533, %v533
  %v600 = vpack.c.bf16 %v539, %v539
  %v601 = vpack.c.bf16 %v545, %v545
  %v602 = vpack.c.bf16 %v551, %v551
  %v603 = vpack.c.bf16 %v557, %v557
  %v604 = vpack.c.bf16 %v563, %v563
  %v605 = vpack.c.bf16 %v569, %v569
  %v606 = vpack.c.bf16 %v575, %v575
  %v607 = vpack.c.bf16 %v581, %v581
  %v608 = vpack.c.bf16 %v587, %v587
  %v609 = vpack.c.bf16 %v593, %v593
  %v626 = vunpack.c.l.b16 %v594
  %v627 = vunpack.c.l.b16 %v595
  %v628 = vunpack.c.l.b16 %v596
  %v629 = vunpack.c.l.b16 %v597
  %v630 = vunpack.c.l.b16 %v598
  %v631 = vunpack.c.l.b16 %v599
  %v632 = vunpack.c.l.b16 %v600
  %v633 = vunpack.c.l.b16 %v601
  %v634 = vunpack.c.l.b16 %v602
  %v635 = vunpack.c.l.b16 %v603
  %v636 = vunpack.c.l.b16 %v604
  %v637 = vunpack.c.l.b16 %v605
  %v638 = vunpack.c.l.b16 %v606
  %v639 = vunpack.c.l.b16 %v607
  %v640 = vunpack.c.l.b16 %v608
  %v641 = vunpack.c.l.b16 %v609
  %vm642 = vcmask 1041409
  %v643 = vsel %vm642, %v627, %v626
  %vm644 = vcmask 1042434
  %v645 = vsel %vm644, %v628, %v643
  %vm646 = vcmask 1043459
  %v647 = vsel %vm646, %v629, %v645
  %vm648 = vcmask 1044484
  %v649 = vsel %vm648, %v630, %v647
  %vm650 = vcmask 1045509
  %v651 = vsel %vm650, %v631, %v649
  %vm652 = vcmask 1046534
  %v653 = vsel %vm652, %v632, %v651
  %vm654 = vcmask 1047559
  %v655 = vsel %vm654, %v633, %v653
  %v656 = vsel %vm642, %v635, %v634
  %v657 = vsel %vm644, %v636, %v656
  %v658 = vsel %vm646, %v637, %v657
  %v659 = vsel %vm648, %v638, %v658
  %v660 = vsel %vm650, %v639, %v659
  %v661 = vsel %vm652, %v640, %v660
  %v662 = vsel %vm654, %v641, %v661
  %v663 = vpack.c.b16 %v655, %v655
  %v664 = vpack.c.b16 %v662, %v662
  %667 = vst [vmem:[%s5] sm:$0xf] %v663
  %668 = vst [vmem:[%s5 + $0x4] sm:$0xf] %v664
  // Predicated region
  $region22: #{a_call__.8} parent=0 // pred_check
    _
  $region23: #{a_call__.8} parent=0 // pred_check_branch
    %670 = sbr.rel (0) target = $region25
  $region24: #{a_call__.8} parent=0 // pred_region
    _
  $region25: #{a_call__.8} parent=0 // pred_fallthru
    _
  // Predicated region
  $region26: #{a_call__.8} parent=0 // pred_check
    _
  $region27: #{a_call__.8} parent=0 // pred_check_branch
    %672 = sbr.rel (0) target = $region29
  $region28: #{a_call__.8} parent=0 // pred_region
    _
  $region29: #{a_call__.8} parent=0 // pred_fallthru
    _

// kernel: custom-call.51
$region0: #{custom-call.51}
  %s0 = inlined_call_operand.vmem [shape: f32[2,8], index: 0, kind: output, shape index: {}]

// kernel: neg.4
$region0: #{neg.4}
  #allocation0 [shape = 's32[1]{0}', space=sflag, size = 0x4, scoped, tag = 'scoped memory for neg.4']
  %s0 = inlined_call_operand.vmem [shape: f32[2,8,4], index: 0, kind: input, shape index: {}]
  %s1 = inlined_call_operand.vmem [shape: f32[2,8,4], index: 1, kind: output, shape index: {}]
  %v2 = vld [vmem:[%s0] sm:$0xf]
  %3 = xla_tuple %v2
  %4 = xla_tuple %3
  %v5 = vxor.u32 %v2, 2147483648
  %6 = xla_tuple %v5
  %7 = vst [vmem:[%s1] sm:$0xf] %v5
  %s8 = scalar_lea.vmem %s0, 4
  %v9 = vld [vmem:[%s8] sm:$0xf]
  %10 = xla_tuple %v9
  %11 = xla_tuple %10
  %v12 = vxor.u32 %v9, 2147483648
  %13 = xla_tuple %v12
  %s14 = scalar_lea.vmem %s1, 4
  %15 = vst [vmem:[%s14] sm:$0xf] %v12

// kernel: neg.6
$region0: #{neg.6}
  #allocation0 [shape = 's32[1]{0}', space=sflag, size = 0x4, scoped, tag = 'scoped memory for neg.6']
  %s0 = inlined_call_operand.vmem [shape: f32[2,16,8], index: 0, kind: input, shape index: {}]
  %s1 = inlined_call_operand.vmem [shape: f32[2,16,8], index: 1, kind: output, shape index: {}]
  %v2 = vld [vmem:[%s0] sm:$0xff]
  %3 = xla_tuple %v2
  %4 = xla_tuple %3
  %v5 = vxor.u32 %v2, 2147483648
  %6 = xla_tuple %v5
  %7 = vst [vmem:[%s1] sm:$0xff] %v5
  %s8 = scalar_lea.vmem %s0, 8
  %v9 = vld [vmem:[%s8] sm:$0xff]
  %10 = xla_tuple %v9
  %11 = xla_tuple %10
  %v12 = vxor.u32 %v9, 2147483648
  %13 = xla_tuple %v12
  %s14 = scalar_lea.vmem %s1, 8
  %15 = vst [vmem:[%s14] sm:$0xff] %v12

// kernel: a_call__.10
$region0: #{a_call__.10}
  #allocation0 [shape = 'u32[]', space=smem, size = 0x4, offset = 0x4, fixed_abs, tag = 'smem constant byte address 0x4 - core index']
  #allocation1 [shape = 'u32[72,128]{1,0:T(1,128)}', space=vmem, size = 0x9000, scoped, tag = 'internal scratch']
  %s0 = inlined_call_operand.vmem [shape: bf16[16,128], index: 0, kind: input, shape index: {}]
  %s1 = inlined_call_operand.vmem [shape: bf16[128,128], index: 1, kind: input, shape index: {}]
  %s2 = inlined_call_operand.vmem [shape: f32[1,128], index: 2, kind: input, shape index: {}]
  %s3 = inlined_call_operand.vmem [shape: bf16[1,128,128], index: 3, kind: input, shape index: {}]
  %s4 = inlined_call_operand.vmem [shape: f32[1,1,128], index: 4, kind: input, shape index: {}]
  %s5 = inlined_call_operand.vmem [shape: bf16[16,128], index: 5, kind: output, shape index: {}]
  %s6 = sld [smem:[#allocation0]]
  $region30: #{a_call__.10} parent=0
    _
  %s8 = ssub.s32 1, %s6
  %s9 = scalar_select 0, %s8, %s6
  // Predicated region
  $region2: #{a_call__.10} parent=0 // pred_check
    _
  $region3: #{a_call__.10} parent=0 // pred_check_branch
    %11 = sbr.rel (0) target = $region5
  $region4: #{a_call__.10} parent=0 // pred_region
    _
  $region5: #{a_call__.10} parent=0 // pred_fallthru
    _
  // Predicated region
  $region6: #{a_call__.10} parent=0 // pred_check
    _
  $region7: #{a_call__.10} parent=0 // pred_check_branch
    %13 = sbr.rel (0) target = $region9
  $region8: #{a_call__.10} parent=0 // pred_region
    _
  $region9: #{a_call__.10} parent=0 // pred_fallthru
    _
  // Predicated region
  $region10: #{a_call__.10} parent=0 // pred_check
    _
  $region11: #{a_call__.10} parent=0 // pred_check_branch
    %15 = sbr.rel (0) target = $region13
  $region12: #{a_call__.10} parent=0 // pred_region
    _
  $region13: #{a_call__.10} parent=0 // pred_fallthru
    _
  // Predicated region
  $region14: #{a_call__.10} parent=0 // pred_check
    _
  $region15: #{a_call__.10} parent=0 // pred_check_branch
    %17 = sbr.rel (0) target = $region17
  $region16: #{a_call__.10} parent=0 // pred_region
    _
  $region17: #{a_call__.10} parent=0 // pred_fallthru
    _
  // Predicated region
  $region18: #{a_call__.10} parent=0 // pred_check
    _
  $region19: #{a_call__.10} parent=0 // pred_check_branch
    %19 = sbr.rel (0) target = $region21
  $region20: #{a_call__.10} parent=0 // pred_region
    _
  $region21: #{a_call__.10} parent=0 // pred_fallthru
    _
  %v20 = vld [vmem:[%s0] sm:$0xf]
  %v21 = vld [vmem:[%s0 + $0x4] sm:$0xf]
  %v22 = vld [vmem:[%s1] sm:$0xf]
  %v23 = vld [vmem:[%s1 + $0x4] sm:$0xf]
  %v24 = vld [vmem:[%s1 + $0x8] sm:$0xf]
  %v25 = vld [vmem:[%s1 + $0xc] sm:$0xf]
  %v26 = vld [vmem:[%s1 + $0x10] sm:$0xf]
  %v27 = vld [vmem:[%s1 + $0x14] sm:$0xf]
  %v28 = vld [vmem:[%s1 + $0x18] sm:$0xf]
  %v29 = vld [vmem:[%s1 + $0x1c] sm:$0xf]
  %v30 = vld [vmem:[%s1 + $0x20] sm:$0xf]
  %v31 = vld [vmem:[%s1 + $0x24] sm:$0xf]
  %v32 = vld [vmem:[%s1 + $0x28] sm:$0xf]
  %v33 = vld [vmem:[%s1 + $0x2c] sm:$0xf]
  %v34 = vld [vmem:[%s1 + $0x30] sm:$0xf]
  %v35 = vld [vmem:[%s1 + $0x34] sm:$0xf]
  %v36 = vld [vmem:[%s1 + $0x38] sm:$0xf]
  %v37 = vld [vmem:[%s1 + $0x3c] sm:$0xf]
  %v38 = vld [vmem:[%s2] sm:$0x1]
  %v40 = vperm.slane %v38, 0
  %v44 = vunpack.c.l.b16 %v20
  %v45 = vunpack.c.l.b16 %v21
  %v46 = vpack.c.b16 %v45, %v44
  %v64 = vunpack.c.l.b16 %v22
  %v65 = vunpack.c.l.b16 %v23
  %v66 = vunpack.c.l.b16 %v24
  %v67 = vunpack.c.l.b16 %v25
  %v68 = vunpack.c.l.b16 %v26
  %v69 = vunpack.c.l.b16 %v27
  %v70 = vunpack.c.l.b16 %v28
  %v71 = vunpack.c.l.b16 %v29
  %v72 = vunpack.c.l.b16 %v30
  %v73 = vunpack.c.l.b16 %v31
  %v74 = vunpack.c.l.b16 %v32
  %v75 = vunpack.c.l.b16 %v33
  %v76 = vunpack.c.l.b16 %v34
  %v77 = vunpack.c.l.b16 %v35
  %v78 = vunpack.c.l.b16 %v36
  %v79 = vunpack.c.l.b16 %v37
  %v80 = vpack.c.b16 %v65, %v64
  %v81 = vpack.c.b16 %v67, %v66
  %v82 = vpack.c.b16 %v69, %v68
  %v83 = vpack.c.b16 %v71, %v70
  %v84 = vpack.c.b16 %v73, %v72
  %v85 = vpack.c.b16 %v75, %v74
  %v86 = vpack.c.b16 %v77, %v76
  %v87 = vpack.c.b16 %v79, %v78
  %96 = vmatpush.bf16.msra.mxu0 %v87
  %97 = vmatpush.bf16.msra.mxu0 %v86
  %98 = vmatpush.bf16.msra.mxu0 %v85
  %99 = vmatpush.bf16.msra.mxu0 %v84
  %100 = vmatpush.bf16.msra.mxu0 %v83
  %101 = vmatpush.bf16.msra.mxu0 %v82
  %102 = vmatpush.bf16.msra.mxu0 %v81
  %103 = vmatpush.bf16.msra.mxu0 %v80
  %104 = vmatmul.bf16.gmra.mxu0 %v46
  %v105 = vpop.f32.mrf.mxu0
  %v106 = vadd.f32 %v40, %v105
  %v107 = vpop.f32.mrf.mxu0
  %v108 = vadd.f32 %v40, %v107
  %109 = vdwg.mxu0
  %v110 = vmax.f32 %v106, 0.0
  %v111 = vmax.f32 %v108, 0.0
  %v112 = vpack.c.bf16 %v111, %v110
  %v113 = vld [vmem:[%s3] sm:$0xf]
  %v114 = vld [vmem:[%s3 + $0x4] sm:$0xf]
  %v115 = vld [vmem:[%s3 + $0x8] sm:$0xf]
  %v116 = vld [vmem:[%s3 + $0xc] sm:$0xf]
  %v117 = vld [vmem:[%s3 + $0x10] sm:$0xf]
  %v118 = vld [vmem:[%s3 + $0x14] sm:$0xf]
  %v119 = vld [vmem:[%s3 + $0x18] sm:$0xf]
  %v120 = vld [vmem:[%s3 + $0x1c] sm:$0xf]
  %v121 = vld [vmem:[%s3 + $0x20] sm:$0xf]
  %v122 = vld [vmem:[%s3 + $0x24] sm:$0xf]
  %v123 = vld [vmem:[%s3 + $0x28] sm:$0xf]
  %v124 = vld [vmem:[%s3 + $0x2c] sm:$0xf]
  %v125 = vld [vmem:[%s3 + $0x30] sm:$0xf]
  %v126 = vld [vmem:[%s3 + $0x34] sm:$0xf]
  %v127 = vld [vmem:[%s3 + $0x38] sm:$0xf]
  %v128 = vld [vmem:[%s3 + $0x3c] sm:$0xf]
  %v129 = vld [vmem:[%s4] sm:$0x1]
  %v131 = vperm.slane %v129, 0
  %v149 = vunpack.c.l.b16 %v113
  %v150 = vunpack.c.l.b16 %v114
  %v151 = vunpack.c.l.b16 %v115
  %v152 = vunpack.c.l.b16 %v116
  %v153 = vunpack.c.l.b16 %v117
  %v154 = vunpack.c.l.b16 %v118
  %v155 = vunpack.c.l.b16 %v119
  %v156 = vunpack.c.l.b16 %v120
  %v157 = vunpack.c.l.b16 %v121
  %v158 = vunpack.c.l.b16 %v122
  %v159 = vunpack.c.l.b16 %v123
  %v160 = vunpack.c.l.b16 %v124
  %v161 = vunpack.c.l.b16 %v125
  %v162 = vunpack.c.l.b16 %v126
  %v163 = vunpack.c.l.b16 %v127
  %v164 = vunpack.c.l.b16 %v128
  %v165 = vpack.c.b16 %v150, %v149
  %v166 = vpack.c.b16 %v152, %v151
  %v167 = vpack.c.b16 %v154, %v153
  %v168 = vpack.c.b16 %v156, %v155
  %v169 = vpack.c.b16 %v158, %v157
  %v170 = vpack.c.b16 %v160, %v159
  %v171 = vpack.c.b16 %v162, %v161
  %v172 = vpack.c.b16 %v164, %v163
  %181 = vmatpush.bf16.msra.mxu0 %v172
  %182 = vmatpush.bf16.msra.mxu0 %v171
  %183 = vmatpush.bf16.msra.mxu0 %v170
  %184 = vmatpush.bf16.msra.mxu0 %v169
  %185 = vmatpush.bf16.msra.mxu0 %v168
  %186 = vmatpush.bf16.msra.mxu0 %v167
  %187 = vmatpush.bf16.msra.mxu0 %v166
  %188 = vmatpush.bf16.msra.mxu0 %v165
  %189 = vmatmul.bf16.gmra.mxu0 %v112
  %v190 = vpop.f32.mrf.mxu0
  %v191 = vadd.f32 %v131, %v190
  %v192 = vpop.f32.mrf.mxu0
  %v193 = vadd.f32 %v131, %v192
  %194 = vdwg.mxu0
  %v195 = vmax.f32 %v191, 0.0
  %v196 = vmax.f32 %v193, 0.0
  %v197 = vpack.c.bf16 %v195, %v195
  %v198 = vpack.c.bf16 %v196, %v196
  %199 = vst [vmem:[%s5] sm:$0xf] %v197
  %200 = vst [vmem:[%s5 + $0x4] sm:$0xf] %v198
  // Predicated region
  $region22: #{a_call__.10} parent=0 // pred_check
    _
  $region23: #{a_call__.10} parent=0 // pred_check_branch
    %202 = sbr.rel (0) target = $region25
  $region24: #{a_call__.10} parent=0 // pred_region
    _
  $region25: #{a_call__.10} parent=0 // pred_fallthru
    _
  // Predicated region
  $region26: #{a_call__.10} parent=0 // pred_check
    _
  $region27: #{a_call__.10} parent=0 // pred_check_branch
    %204 = sbr.rel (0) target = $region29
  $region28: #{a_call__.10} parent=0 // pred_region
    _
  $region29: #{a_call__.10} parent=0 // pred_fallthru
    _

// kernel: a_call__.11
$region0: #{a_call__.11}
  #allocation0 [shape = 'u32[]', space=smem, size = 0x4, offset = 0x4, fixed_abs, tag = 'smem constant byte address 0x4 - core index']
  #allocation1 [shape = 'u32[72,128]{1,0:T(1,128)}', space=vmem, size = 0x9000, scoped, tag = 'internal scratch']
  %s0 = inlined_call_operand.vmem [shape: bf16[32,128], index: 0, kind: input, shape index: {}]
  %s1 = inlined_call_operand.vmem [shape: bf16[128,128], index: 1, kind: input, shape index: {}]
  %s2 = inlined_call_operand.vmem [shape: f32[1,128], index: 2, kind: input, shape index: {}]
  %s3 = inlined_call_operand.vmem [shape: bf16[1,128,128], index: 3, kind: input, shape index: {}]
  %s4 = inlined_call_operand.vmem [shape: f32[1,1,128], index: 4, kind: input, shape index: {}]
  %s5 = inlined_call_operand.vmem [shape: bf16[32,128], index: 5, kind: output, shape index: {}]
  %s6 = sld [smem:[#allocation0]]
  $region30: #{a_call__.11} parent=0
    _
  %s8 = ssub.s32 1, %s6
  %s9 = scalar_select 0, %s8, %s6
  // Predicated region
  $region2: #{a_call__.11} parent=0 // pred_check
    _
  $region3: #{a_call__.11} parent=0 // pred_check_branch
    %11 = sbr.rel (0) target = $region5
  $region4: #{a_call__.11} parent=0 // pred_region
    _
  $region5: #{a_call__.11} parent=0 // pred_fallthru
    _
  // Predicated region
  $region6: #{a_call__.11} parent=0 // pred_check
    _
  $region7: #{a_call__.11} parent=0 // pred_check_branch
    %13 = sbr.rel (0) target = $region9
  $region8: #{a_call__.11} parent=0 // pred_region
    _
  $region9: #{a_call__.11} parent=0 // pred_fallthru
    _
  // Predicated region
  $region10: #{a_call__.11} parent=0 // pred_check
    _
  $region11: #{a_call__.11} parent=0 // pred_check_branch
    %15 = sbr.rel (0) target = $region13
  $region12: #{a_call__.11} parent=0 // pred_region
    _
  $region13: #{a_call__.11} parent=0 // pred_fallthru
    _
  // Predicated region
  $region14: #{a_call__.11} parent=0 // pred_check
    _
  $region15: #{a_call__.11} parent=0 // pred_check_branch
    %17 = sbr.rel (0) target = $region17
  $region16: #{a_call__.11} parent=0 // pred_region
    _
  $region17: #{a_call__.11} parent=0 // pred_fallthru
    _
  // Predicated region
  $region18: #{a_call__.11} parent=0 // pred_check
    _
  $region19: #{a_call__.11} parent=0 // pred_check_branch
    %19 = sbr.rel (0) target = $region21
  $region20: #{a_call__.11} parent=0 // pred_region
    _
  $region21: #{a_call__.11} parent=0 // pred_fallthru
    _
  %v20 = vld [vmem:[%s0] sm:$0xf]
  %v21 = vld [vmem:[%s0 + $0x4] sm:$0xf]
  %v22 = vld [vmem:[%s0 + $0x8] sm:$0xf]
  %v23 = vld [vmem:[%s0 + $0xc] sm:$0xf]
  %v24 = vld [vmem:[%s1] sm:$0xf]
  %v25 = vld [vmem:[%s1 + $0x4] sm:$0xf]
  %v26 = vld [vmem:[%s1 + $0x8] sm:$0xf]
  %v27 = vld [vmem:[%s1 + $0xc] sm:$0xf]
  %v28 = vld [vmem:[%s1 + $0x10] sm:$0xf]
  %v29 = vld [vmem:[%s1 + $0x14] sm:$0xf]
  %v30 = vld [vmem:[%s1 + $0x18] sm:$0xf]
  %v31 = vld [vmem:[%s1 + $0x1c] sm:$0xf]
  %v32 = vld [vmem:[%s1 + $0x20] sm:$0xf]
  %v33 = vld [vmem:[%s1 + $0x24] sm:$0xf]
  %v34 = vld [vmem:[%s1 + $0x28] sm:$0xf]
  %v35 = vld [vmem:[%s1 + $0x2c] sm:$0xf]
  %v36 = vld [vmem:[%s1 + $0x30] sm:$0xf]
  %v37 = vld [vmem:[%s1 + $0x34] sm:$0xf]
  %v38 = vld [vmem:[%s1 + $0x38] sm:$0xf]
  %v39 = vld [vmem:[%s1 + $0x3c] sm:$0xf]
  %v40 = vld [vmem:[%s2] sm:$0x1]
  %v42 = vperm.slane %v40, 0
  %v48 = vunpack.c.l.b16 %v20
  %v49 = vunpack.c.l.b16 %v21
  %v50 = vunpack.c.l.b16 %v22
  %v51 = vunpack.c.l.b16 %v23
  %v52 = vpack.c.b16 %v49, %v48
  %v53 = vpack.c.b16 %v51, %v50
  %v72 = vunpack.c.l.b16 %v24
  %v73 = vunpack.c.l.b16 %v25
  %v74 = vunpack.c.l.b16 %v26
  %v75 = vunpack.c.l.b16 %v27
  %v76 = vunpack.c.l.b16 %v28
  %v77 = vunpack.c.l.b16 %v29
  %v78 = vunpack.c.l.b16 %v30
  %v79 = vunpack.c.l.b16 %v31
  %v80 = vunpack.c.l.b16 %v32
  %v81 = vunpack.c.l.b16 %v33
  %v82 = vunpack.c.l.b16 %v34
  %v83 = vunpack.c.l.b16 %v35
  %v84 = vunpack.c.l.b16 %v36
  %v85 = vunpack.c.l.b16 %v37
  %v86 = vunpack.c.l.b16 %v38
  %v87 = vunpack.c.l.b16 %v39
  %v88 = vpack.c.b16 %v73, %v72
  %v89 = vpack.c.b16 %v75, %v74
  %v90 = vpack.c.b16 %v77, %v76
  %v91 = vpack.c.b16 %v79, %v78
  %v92 = vpack.c.b16 %v81, %v80
  %v93 = vpack.c.b16 %v83, %v82
  %v94 = vpack.c.b16 %v85, %v84
  %v95 = vpack.c.b16 %v87, %v86
  %104 = vmatpush.bf16.msra.mxu0 %v95
  %105 = vmatpush.bf16.msra.mxu0 %v94
  %106 = vmatpush.bf16.msra.mxu0 %v93
  %107 = vmatpush.bf16.msra.mxu0 %v92
  %108 = vmatpush.bf16.msra.mxu0 %v91
  %109 = vmatpush.bf16.msra.mxu0 %v90
  %110 = vmatpush.bf16.msra.mxu0 %v89
  %111 = vmatpush.bf16.msra.mxu0 %v88
  %112 = vmatmul.bf16.gmra.mxu0 %v52
  %v113 = vpop.f32.mrf.mxu0
  %v114 = vadd.f32 %v42, %v113
  %v115 = vpop.f32.mrf.mxu0
  %v116 = vadd.f32 %v42, %v115
  %117 = vmatmul.bf16.gmra.mxu0 %v53
  %v118 = vpop.f32.mrf.mxu0
  %v119 = vadd.f32 %v42, %v118
  %v120 = vpop.f32.mrf.mxu0
  %v121 = vadd.f32 %v42, %v120
  %122 = vdwg.mxu0
  %v123 = vmax.f32 %v114, 0.0
  %v124 = vmax.f32 %v116, 0.0
  %v125 = vmax.f32 %v119, 0.0
  %v126 = vmax.f32 %v121, 0.0
  %v127 = vpack.c.bf16 %v124, %v123
  %v128 = vpack.c.bf16 %v126, %v125
  %v129 = vld [vmem:[%s3] sm:$0xf]
  %v130 = vld [vmem:[%s3 + $0x4] sm:$0xf]
  %v131 = vld [vmem:[%s3 + $0x8] sm:$0xf]
  %v132 = vld [vmem:[%s3 + $0xc] sm:$0xf]
  %v133 = vld [vmem:[%s3 + $0x10] sm:$0xf]
  %v134 = vld [vmem:[%s3 + $0x14] sm:$0xf]
  %v135 = vld [vmem:[%s3 + $0x18] sm:$0xf]
  %v136 = vld [vmem:[%s3 + $0x1c] sm:$0xf]
  %v137 = vld [vmem:[%s3 + $0x20] sm:$0xf]
  %v138 = vld [vmem:[%s3 + $0x24] sm:$0xf]
  %v139 = vld [vmem:[%s3 + $0x28] sm:$0xf]
  %v140 = vld [vmem:[%s3 + $0x2c] sm:$0xf]
  %v141 = vld [vmem:[%s3 + $0x30] sm:$0xf]
  %v142 = vld [vmem:[%s3 + $0x34] sm:$0xf]
  %v143 = vld [vmem:[%s3 + $0x38] sm:$0xf]
  %v144 = vld [vmem:[%s3 + $0x3c] sm:$0xf]
  %v145 = vld [vmem:[%s4] sm:$0x1]
  %v147 = vperm.slane %v145, 0
  %v165 = vunpack.c.l.b16 %v129
  %v166 = vunpack.c.l.b16 %v130
  %v167 = vunpack.c.l.b16 %v131
  %v168 = vunpack.c.l.b16 %v132
  %v169 = vunpack.c.l.b16 %v133
  %v170 = vunpack.c.l.b16 %v134
  %v171 = vunpack.c.l.b16 %v135
  %v172 = vunpack.c.l.b16 %v136
  %v173 = vunpack.c.l.b16 %v137
  %v174 = vunpack.c.l.b16 %v138
  %v175 = vunpack.c.l.b16 %v139
  %v176 = vunpack.c.l.b16 %v140
  %v177 = vunpack.c.l.b16 %v141
  %v178 = vunpack.c.l.b16 %v142
  %v179 = vunpack.c.l.b16 %v143
  %v180 = vunpack.c.l.b16 %v144
  %v181 = vpack.c.b16 %v166, %v165
  %v182 = vpack.c.b16 %v168, %v167
  %v183 = vpack.c.b16 %v170, %v169
  %v184 = vpack.c.b16 %v172, %v171
  %v185 = vpack.c.b16 %v174, %v173
  %v186 = vpack.c.b16 %v176, %v175
  %v187 = vpack.c.b16 %v178, %v177
  %v188 = vpack.c.b16 %v180, %v179
  %197 = vmatpush.bf16.msra.mxu0 %v188
  %198 = vmatpush.bf16.msra.mxu0 %v187
  %199 = vmatpush.bf16.msra.mxu0 %v186
  %200 = vmatpush.bf16.msra.mxu0 %v185
  %201 = vmatpush.bf16.msra.mxu0 %v184
  %202 = vmatpush.bf16.msra.mxu0 %v183
  %203 = vmatpush.bf16.msra.mxu0 %v182
  %204 = vmatpush.bf16.msra.mxu0 %v181
  %205 = vmatmul.bf16.gmra.mxu0 %v127
  %v206 = vpop.f32.mrf.mxu0
  %v207 = vadd.f32 %v147, %v206
  %v208 = vpop.f32.mrf.mxu0
  %v209 = vadd.f32 %v147, %v208
  %210 = vmatmul.bf16.gmra.mxu0 %v128
  %v211 = vpop.f32.mrf.mxu0
  %v212 = vadd.f32 %v147, %v211
  %v213 = vpop.f32.mrf.mxu0
  %v214 = vadd.f32 %v147, %v213
  %215 = vdwg.mxu0
  %v216 = vmax.f32 %v207, 0.0
  %v217 = vmax.f32 %v209, 0.0
  %v218 = vmax.f32 %v212, 0.0
  %v219 = vmax.f32 %v214, 0.0
  %v220 = vpack.c.bf16 %v216, %v216
  %v221 = vpack.c.bf16 %v217, %v217
  %v222 = vpack.c.bf16 %v218, %v218
  %v223 = vpack.c.bf16 %v219, %v219
  %224 = vst [vmem:[%s5] sm:$0xf] %v220
  %225 = vst [vmem:[%s5 + $0x4] sm:$0xf] %v221
  %226 = vst [vmem:[%s5 + $0x8] sm:$0xf] %v222
  %227 = vst [vmem:[%s5 + $0xc] sm:$0xf] %v223
  // Predicated region
  $region22: #{a_call__.11} parent=0 // pred_check
    _
  $region23: #{a_call__.11} parent=0 // pred_check_branch
    %229 = sbr.rel (0) target = $region25
  $region24: #{a_call__.11} parent=0 // pred_region
    _
  $region25: #{a_call__.11} parent=0 // pred_fallthru
    _
  // Predicated region
  $region26: #{a_call__.11} parent=0 // pred_check
    _
  $region27: #{a_call__.11} parent=0 // pred_check_branch
    %231 = sbr.rel (0) target = $region29
  $region28: #{a_call__.11} parent=0 // pred_region
    _
  $region29: #{a_call__.11} parent=0 // pred_fallthru
    _

</llo_original>
